<compile_context>
chip_gen: v6e
topology: v6e:2x2x1
jax: 0.10.0
libtpu: 0.0.40
codegen_flags: <defaults>
</compile_context>

<pallas_src>
import functools

import jax
import jax.numpy as jnp
import numpy as np
from jax.experimental import pallas as pl
from jax.experimental.pallas import tpu as pltpu


def enhance_kernel(layers, C, H, W, Wp,
                   x_ref, w_in_ref, b_in_ref,
                   w_mid_ref, s_mid_ref, t_mid_ref,
                   w_out_ref, b_out_ref,
                   out_ref):
    x = x_ref[...]                                              # (H, Wp), lane-dense

    # ---- border masks, computed once (image-local columns: packing-aware) -----
    row  = jax.lax.broadcasted_iota(jnp.int32, (H, Wp), 0)
    lcol = jax.lax.broadcasted_iota(jnp.int32, (H, Wp), 1) % W  # column within image
    row_ok = {-1: row >= 1, 1: row <= H - 2}                    # y+oy in [0, H)
    col_ok = {-1: lcol >= 1, 1: lcol <= W - 2}                  # x+ox in [0, W) per image

    def shift_rows(p, oy):
        if oy == 0:
            return p
        r = pltpu.roll(p, shift=(-oy) % H, axis=0)              # sublane roll (XLU)
        return jnp.where(row_ok[oy], r, 0.0)

    def shift_cols(p, ox):
        if ox == 0:
            return p
        r = pltpu.roll(p, shift=(-ox) % Wp, axis=1)             # lane roll (XLU)
        # (col % W) mask zeroes every image-boundary column, including the
        # full-width wraparound column, so packed images never leak into each other.
        return jnp.where(col_ok[ox], r, 0.0)

    def taps(plane):
        """taps[t][y,x] = plane[y+oy, x+ox] zero-padded, t = (oy+1)*3 + (ox+1)."""
        out = []
        for oy in (-1, 0, 1):
            r = shift_rows(plane, oy)
            for ox in (-1, 0, 1):
                out.append(shift_cols(r, ox))
        return out

    # ---- hoist every SMEM scalar read ahead of the vector FMA loops -----------
    w_in  = [[w_in_ref[t * C + co] for co in range(C)] for t in range(9)]
    b_in  = [b_in_ref[co] for co in range(C)]
    w_mid = [[[w_mid_ref[(t * C + ci) * C + co] for co in range(C)]
              for ci in range(C)] for t in range(9)]
    s_mid = [s_mid_ref[c] for c in range(C)]
    t_mid = [t_mid_ref[c] for c in range(C)]
    w_out = [[w_out_ref[t * C + ci] for ci in range(C)] for t in range(9)]
    b_out = b_out_ref[0]

    # ---- in_conv: Conv2d(1 -> C, 3x3, SAME) + ReLU -----------------------------
    x_taps = taps(x)
    fea = []
    for co in range(C):
        acc = w_in[0][co] * x_taps[0]                           # init with first tap
        for t in range(1, 9):
            acc = acc + w_in[t][co] * x_taps[t]                 # scalar * vector FMA
        fea.append(jnp.maximum(acc + b_in[co], 0.0))

    # ---- residual blocks: fea = fea + ReLU(BN(Conv(fea))), shared weights ------
    # Unrolled on purpose (layer count is small); switch to lax.fori_loop over a
    # stacked (C, H, Wp) carry if the layer count grows past ~4.
    for _ in range(layers):
        accs = [None] * C
        for ci in range(C):
            tci = taps(fea[ci])                                 # 8 rolls, reused over t/co
            for t in range(9):
                for co in range(C):
                    prod = w_mid[t][ci][co] * tci[t]
                    accs[co] = prod if accs[co] is None else accs[co] + prod
        fea = [fea[co] + jnp.maximum(accs[co] * s_mid[co] + t_mid[co], 0.0)
               for co in range(C)]                              # conv bias + BN folded

    # ---- out_conv: Conv2d(C -> 1, 3x3, SAME) + Sigmoid --------------------------
    acc = None
    for ci in range(C):
        tci = taps(fea[ci])
        for t in range(9):
            prod = w_out[t][ci] * tci[t]
            acc = prod if acc is None else acc + prod
    o = jax.nn.sigmoid(acc + b_out)

    out_ref[...] = jnp.clip(o + x, 0.0001, 1.0)


def enhance_forward(x_nchw, params, layers):
    """x_nchw: (N, 1, H, W) float32; params hold HWIO conv weights + folded BN."""
    N, cin, H, W = x_nchw.shape
    assert cin == 1
    C = params["w_mid"].shape[-1]

    # Pack P images along the lane axis so every working plane is lane-dense.
    # (For W >= 128 production images, tile W into 128-lane strips with a
    #  1-column halo instead; keep the grid >= 2 "parallel" steps for v7x.)
    P = max(1, 128 // W) if W <= 128 else 1
    n_pad = -(-N // P) * P
    G = n_pad // P
    Wp = P * W

    x = jnp.asarray(x_nchw, jnp.float32).reshape(N, H, W)
    if n_pad != N:
        x = jnp.concatenate([x, jnp.zeros((n_pad - N, H, W), jnp.float32)], axis=0)
    x_packed = x.reshape(G, P, H, W).transpose(0, 2, 1, 3).reshape(G, H, Wp)

    kernel = functools.partial(enhance_kernel, layers, C, H, W, Wp)
    flat = lambda a: jnp.asarray(a, jnp.float32).reshape(-1)
    smem = pl.BlockSpec(memory_space=pltpu.MemorySpace.SMEM)

    out_packed = pl.pallas_call(
        kernel,
        out_shape=jax.ShapeDtypeStruct((G, H, Wp), jnp.float32),
        grid=(G,),
        in_specs=[
            pl.BlockSpec((None, H, Wp), lambda g: (g, 0, 0)),   # packed images
            smem,   # w_in   (3*3*1*C,)  flattened HWIO
            smem,   # b_in   (C,)
            smem,   # w_mid  (3*3*C*C,)  flattened HWIO
            smem,   # s_mid  (C,)  BN scale
            smem,   # t_mid  (C,)  BN shift incl. conv bias
            smem,   # w_out  (3*3*C*1,)  flattened HWIO
            smem,   # b_out  (1,)
        ],
        out_specs=pl.BlockSpec((None, H, Wp), lambda g: (g, 0, 0)),
        compiler_params=pltpu.CompilerParams(dimension_semantics=("parallel",)),
    )(
        x_packed,
        flat(params["w_in"]), flat(params["b_in"]),
        flat(params["w_mid"]), flat(params["s_mid"]), flat(params["t_mid"]),
        flat(params["w_out"]), flat(params["b_out"]),
    )

    out = out_packed.reshape(G, H, P, W).transpose(0, 2, 1, 3).reshape(n_pad, 1, H, W)
    return out[:N]


def ref_forward(x_nchw, p, layers, eps=1e-5):
    """Pure-JAX reference (NCHW, lax.conv) mirroring the PyTorch module in eval mode."""
    def conv(x, w_hwio, b):
        w = jnp.transpose(w_hwio, (3, 2, 0, 1))               # HWIO -> OIHW
        y = jax.lax.conv_general_dilated(
            x, w, (1, 1), "SAME",
            dimension_numbers=("NCHW", "OIHW", "NCHW"))
        return y + b[None, :, None, None]

    fea = jax.nn.relu(conv(x_nchw, p["w_in"], p["b_in"]))
    inv = p["gamma"] / jnp.sqrt(p["var"] + eps)
    for _ in range(layers):
        y = conv(fea, p["w_mid"], p["b_mid"])
        y = (y - p["mean"][None, :, None, None]) * inv[None, :, None, None] \
            + p["beta"][None, :, None, None]
        fea = fea + jax.nn.relu(y)
    o = jax.nn.sigmoid(conv(fea, p["w_out"], p["b_out"]))
    return jnp.clip(o + x_nchw, 0.0001, 1.0)


if __name__ == "__main__":
    # 16 images of 16x16 pack 8-per-128-lane plane -> grid of 2 "parallel" steps.
    N, C, H, W, LAYERS = 16, 4, 16, 16, 2
    key = jax.random.PRNGKey(0)
    ks = jax.random.split(key, 11)

    x_nchw = jax.random.uniform(ks[0], (N, 1, H, W), jnp.float32)        # image in [0, 1)

    w_in  = 0.2 * jax.random.normal(ks[1], (3, 3, 1, C), jnp.float32)    # HWIO
    b_in  = 0.1 * jax.random.normal(ks[2], (C,), jnp.float32)
    w_mid = 0.2 * jax.random.normal(ks[3], (3, 3, C, C), jnp.float32)
    b_mid = 0.1 * jax.random.normal(ks[4], (C,), jnp.float32)
    gamma = 1.0 + 0.1 * jax.random.normal(ks[5], (C,), jnp.float32)
    beta  = 0.1 * jax.random.normal(ks[6], (C,), jnp.float32)
    mean  = 0.1 * jax.random.normal(ks[7], (C,), jnp.float32)
    var   = jax.random.uniform(ks[8], (C,), jnp.float32, 0.5, 1.5)
    w_out = 0.2 * jax.random.normal(ks[9], (3, 3, C, 1), jnp.float32)
    b_out = 0.1 * jax.random.normal(ks[10], (1,), jnp.float32)

    # Fold conv-bias + eval-mode BatchNorm into per-channel scale / shift.
    eps = 1e-5
    inv = gamma / jnp.sqrt(var + eps)
    s_mid = inv
    t_mid = beta + (b_mid - mean) * inv

    params = dict(w_in=w_in, b_in=b_in, w_mid=w_mid, s_mid=s_mid, t_mid=t_mid,
                  w_out=w_out, b_out=b_out)

    out = jax.block_until_ready(enhance_forward(x_nchw, params, LAYERS))

    ref = ref_forward(
        x_nchw,
        dict(w_in=w_in, b_in=b_in, w_mid=w_mid, b_mid=b_mid,
             gamma=gamma, beta=beta, mean=mean, var=var,
             w_out=w_out, b_out=b_out),
        LAYERS)

    assert out.shape == (N, 1, H, W)
    assert np.allclose(np.asarray(out), np.asarray(ref), atol=1e-4, rtol=1e-4)
    print("KERNEL_OK")
</pallas_src>

<mosaic_0001>
module attributes {stable_mosaic.version = 11 : i64} {
  func.func @enhance_kernel(%arg0: i32, %arg1: memref<1x16x128xf32, #tpu.memory_space<vmem>>, %arg2: memref<36xf32, #tpu.memory_space<smem>>, %arg3: memref<4xf32, #tpu.memory_space<smem>>, %arg4: memref<144xf32, #tpu.memory_space<smem>>, %arg5: memref<4xf32, #tpu.memory_space<smem>>, %arg6: memref<4xf32, #tpu.memory_space<smem>>, %arg7: memref<36xf32, #tpu.memory_space<smem>>, %arg8: memref<1xf32, #tpu.memory_space<smem>>, %arg9: memref<1x16x128xf32, #tpu.memory_space<vmem>>) attributes {dimension_semantics = [#tpu.dimension_semantics<parallel>], iteration_bounds = array<i64: 2>, scalar_prefetch = 0 : i64, scratch_operands = 0 : i64, tpu.core_type = #tpu.core_type<tc>, window_params = [{transform_indices = @transform_0, window_bounds = array<i64: 1, 16, 128>}, {transform_indices = @transform_1, window_bounds = array<i64: 36>}, {transform_indices = @transform_2, window_bounds = array<i64: 4>}, {transform_indices = @transform_3, window_bounds = array<i64: 144>}, {transform_indices = @transform_4, window_bounds = array<i64: 4>}, {transform_indices = @transform_5, window_bounds = array<i64: 4>}, {transform_indices = @transform_6, window_bounds = array<i64: 36>}, {transform_indices = @transform_7, window_bounds = array<i64: 1>}, {transform_indices = @transform_8, window_bounds = array<i64: 1, 16, 128>}]} {
    %c0 = arith.constant 0 : index
    %c0_0 = arith.constant 0 : index
    %c0_1 = arith.constant 0 : index
    %0 = vector.load %arg1[%c0, %c0_0, %c0_1] : memref<1x16x128xf32, #tpu.memory_space<vmem>>, vector<1x16x128xf32>
    %1 = vector.shape_cast %0 : vector<1x16x128xf32> to vector<16x128xf32>
    %2 = tpu.iota {dimensions = array<i32: 0>} : vector<16x128xi32>
    %3 = tpu.iota {dimensions = array<i32: 1>} : vector<16x128xi32>
    %c16_i32 = arith.constant 16 : i32
    %c0_i32 = arith.constant 0 : i32
    %4 = arith.cmpi eq, %c16_i32, %c0_i32 : i32
    %c1_i32 = arith.constant 1 : i32
    %5 = arith.select %4, %c1_i32, %c16_i32 : i32
    %6 = vector.broadcast %5 : i32 to vector<16x128xi32>
    %7 = arith.remsi %3, %6 : vector<16x128xi32>
    %c0_i32_2 = arith.constant 0 : i32
    %8 = vector.broadcast %c0_i32_2 : i32 to vector<16x128xi32>
    %9 = arith.cmpi ne, %7, %8 : vector<16x128xi32>
    %c0_i32_3 = arith.constant 0 : i32
    %10 = vector.broadcast %c0_i32_3 : i32 to vector<16x128xi32>
    %11 = arith.cmpi slt, %7, %10 : vector<16x128xi32>
    %c0_i32_4 = arith.constant 0 : i32
    %12 = arith.cmpi slt, %5, %c0_i32_4 : i32
    %13 = vector.broadcast %12 : i1 to vector<16x128xi1>
    %14 = vector.broadcast %13 : vector<16x128xi1> to vector<16x128xi1>
    %15 = arith.xori %11, %14 : vector<16x128xi1>
    %16 = arith.andi %15, %9 : vector<16x128xi1>
    %17 = vector.broadcast %5 : i32 to vector<16x128xi32>
    %18 = arith.addi %7, %17 : vector<16x128xi32>
    %19 = arith.select %16, %18, %7 : vector<16x128xi1>, vector<16x128xi32>
    %c1_i32_5 = arith.constant 1 : i32
    %20 = vector.broadcast %c1_i32_5 : i32 to vector<16x128xi32>
    %21 = arith.cmpi sge, %2, %20 : vector<16x128xi32>
    %c14_i32 = arith.constant 14 : i32
    %22 = vector.broadcast %c14_i32 : i32 to vector<16x128xi32>
    %23 = arith.cmpi sle, %2, %22 : vector<16x128xi32>
    %c1_i32_6 = arith.constant 1 : i32
    %24 = vector.broadcast %c1_i32_6 : i32 to vector<16x128xi32>
    %25 = arith.cmpi sge, %19, %24 : vector<16x128xi32>
    %c14_i32_7 = arith.constant 14 : i32
    %26 = vector.broadcast %c14_i32_7 : i32 to vector<16x128xi32>
    %27 = arith.cmpi sle, %19, %26 : vector<16x128xi32>
    %c0_8 = arith.constant 0 : index
    %28 = memref.load %arg2[%c0_8] : memref<36xf32, #tpu.memory_space<smem>>
    %c1 = arith.constant 1 : index
    %29 = memref.load %arg2[%c1] : memref<36xf32, #tpu.memory_space<smem>>
    %c2 = arith.constant 2 : index
    %30 = memref.load %arg2[%c2] : memref<36xf32, #tpu.memory_space<smem>>
    %c3 = arith.constant 3 : index
    %31 = memref.load %arg2[%c3] : memref<36xf32, #tpu.memory_space<smem>>
    %c4 = arith.constant 4 : index
    %32 = memref.load %arg2[%c4] : memref<36xf32, #tpu.memory_space<smem>>
    %c5 = arith.constant 5 : index
    %33 = memref.load %arg2[%c5] : memref<36xf32, #tpu.memory_space<smem>>
    %c6 = arith.constant 6 : index
    %34 = memref.load %arg2[%c6] : memref<36xf32, #tpu.memory_space<smem>>
    %c7 = arith.constant 7 : index
    %35 = memref.load %arg2[%c7] : memref<36xf32, #tpu.memory_space<smem>>
    %c8 = arith.constant 8 : index
    %36 = memref.load %arg2[%c8] : memref<36xf32, #tpu.memory_space<smem>>
    %c9 = arith.constant 9 : index
    %37 = memref.load %arg2[%c9] : memref<36xf32, #tpu.memory_space<smem>>
    %c10 = arith.constant 10 : index
    %38 = memref.load %arg2[%c10] : memref<36xf32, #tpu.memory_space<smem>>
    %c11 = arith.constant 11 : index
    %39 = memref.load %arg2[%c11] : memref<36xf32, #tpu.memory_space<smem>>
    %c12 = arith.constant 12 : index
    %40 = memref.load %arg2[%c12] : memref<36xf32, #tpu.memory_space<smem>>
    %c13 = arith.constant 13 : index
    %41 = memref.load %arg2[%c13] : memref<36xf32, #tpu.memory_space<smem>>
    %c14 = arith.constant 14 : index
    %42 = memref.load %arg2[%c14] : memref<36xf32, #tpu.memory_space<smem>>
    %c15 = arith.constant 15 : index
    %43 = memref.load %arg2[%c15] : memref<36xf32, #tpu.memory_space<smem>>
    %c16 = arith.constant 16 : index
    %44 = memref.load %arg2[%c16] : memref<36xf32, #tpu.memory_space<smem>>
    %c17 = arith.constant 17 : index
    %45 = memref.load %arg2[%c17] : memref<36xf32, #tpu.memory_space<smem>>
    %c18 = arith.constant 18 : index
    %46 = memref.load %arg2[%c18] : memref<36xf32, #tpu.memory_space<smem>>
    %c19 = arith.constant 19 : index
    %47 = memref.load %arg2[%c19] : memref<36xf32, #tpu.memory_space<smem>>
    %c20 = arith.constant 20 : index
    %48 = memref.load %arg2[%c20] : memref<36xf32, #tpu.memory_space<smem>>
    %c21 = arith.constant 21 : index
    %49 = memref.load %arg2[%c21] : memref<36xf32, #tpu.memory_space<smem>>
    %c22 = arith.constant 22 : index
    %50 = memref.load %arg2[%c22] : memref<36xf32, #tpu.memory_space<smem>>
    %c23 = arith.constant 23 : index
    %51 = memref.load %arg2[%c23] : memref<36xf32, #tpu.memory_space<smem>>
    %c24 = arith.constant 24 : index
    %52 = memref.load %arg2[%c24] : memref<36xf32, #tpu.memory_space<smem>>
    %c25 = arith.constant 25 : index
    %53 = memref.load %arg2[%c25] : memref<36xf32, #tpu.memory_space<smem>>
    %c26 = arith.constant 26 : index
    %54 = memref.load %arg2[%c26] : memref<36xf32, #tpu.memory_space<smem>>
    %c27 = arith.constant 27 : index
    %55 = memref.load %arg2[%c27] : memref<36xf32, #tpu.memory_space<smem>>
    %c28 = arith.constant 28 : index
    %56 = memref.load %arg2[%c28] : memref<36xf32, #tpu.memory_space<smem>>
    %c29 = arith.constant 29 : index
    %57 = memref.load %arg2[%c29] : memref<36xf32, #tpu.memory_space<smem>>
    %c30 = arith.constant 30 : index
    %58 = memref.load %arg2[%c30] : memref<36xf32, #tpu.memory_space<smem>>
    %c31 = arith.constant 31 : index
    %59 = memref.load %arg2[%c31] : memref<36xf32, #tpu.memory_space<smem>>
    %c32 = arith.constant 32 : index
    %60 = memref.load %arg2[%c32] : memref<36xf32, #tpu.memory_space<smem>>
    %c33 = arith.constant 33 : index
    %61 = memref.load %arg2[%c33] : memref<36xf32, #tpu.memory_space<smem>>
    %c34 = arith.constant 34 : index
    %62 = memref.load %arg2[%c34] : memref<36xf32, #tpu.memory_space<smem>>
    %c35 = arith.constant 35 : index
    %63 = memref.load %arg2[%c35] : memref<36xf32, #tpu.memory_space<smem>>
    %c0_9 = arith.constant 0 : index
    %64 = memref.load %arg3[%c0_9] : memref<4xf32, #tpu.memory_space<smem>>
    %c1_10 = arith.constant 1 : index
    %65 = memref.load %arg3[%c1_10] : memref<4xf32, #tpu.memory_space<smem>>
    %c2_11 = arith.constant 2 : index
    %66 = memref.load %arg3[%c2_11] : memref<4xf32, #tpu.memory_space<smem>>
    %c3_12 = arith.constant 3 : index
    %67 = memref.load %arg3[%c3_12] : memref<4xf32, #tpu.memory_space<smem>>
    %c0_13 = arith.constant 0 : index
    %68 = memref.load %arg4[%c0_13] : memref<144xf32, #tpu.memory_space<smem>>
    %c1_14 = arith.constant 1 : index
    %69 = memref.load %arg4[%c1_14] : memref<144xf32, #tpu.memory_space<smem>>
    %c2_15 = arith.constant 2 : index
    %70 = memref.load %arg4[%c2_15] : memref<144xf32, #tpu.memory_space<smem>>
    %c3_16 = arith.constant 3 : index
    %71 = memref.load %arg4[%c3_16] : memref<144xf32, #tpu.memory_space<smem>>
    %c4_17 = arith.constant 4 : index
    %72 = memref.load %arg4[%c4_17] : memref<144xf32, #tpu.memory_space<smem>>
    %c5_18 = arith.constant 5 : index
    %73 = memref.load %arg4[%c5_18] : memref<144xf32, #tpu.memory_space<smem>>
    %c6_19 = arith.constant 6 : index
    %74 = memref.load %arg4[%c6_19] : memref<144xf32, #tpu.memory_space<smem>>
    %c7_20 = arith.constant 7 : index
    %75 = memref.load %arg4[%c7_20] : memref<144xf32, #tpu.memory_space<smem>>
    %c8_21 = arith.constant 8 : index
    %76 = memref.load %arg4[%c8_21] : memref<144xf32, #tpu.memory_space<smem>>
    %c9_22 = arith.constant 9 : index
    %77 = memref.load %arg4[%c9_22] : memref<144xf32, #tpu.memory_space<smem>>
    %c10_23 = arith.constant 10 : index
    %78 = memref.load %arg4[%c10_23] : memref<144xf32, #tpu.memory_space<smem>>
    %c11_24 = arith.constant 11 : index
    %79 = memref.load %arg4[%c11_24] : memref<144xf32, #tpu.memory_space<smem>>
    %c12_25 = arith.constant 12 : index
    %80 = memref.load %arg4[%c12_25] : memref<144xf32, #tpu.memory_space<smem>>
    %c13_26 = arith.constant 13 : index
    %81 = memref.load %arg4[%c13_26] : memref<144xf32, #tpu.memory_space<smem>>
    %c14_27 = arith.constant 14 : index
    %82 = memref.load %arg4[%c14_27] : memref<144xf32, #tpu.memory_space<smem>>
    %c15_28 = arith.constant 15 : index
    %83 = memref.load %arg4[%c15_28] : memref<144xf32, #tpu.memory_space<smem>>
    %c16_29 = arith.constant 16 : index
    %84 = memref.load %arg4[%c16_29] : memref<144xf32, #tpu.memory_space<smem>>
    %c17_30 = arith.constant 17 : index
    %85 = memref.load %arg4[%c17_30] : memref<144xf32, #tpu.memory_space<smem>>
    %c18_31 = arith.constant 18 : index
    %86 = memref.load %arg4[%c18_31] : memref<144xf32, #tpu.memory_space<smem>>
    %c19_32 = arith.constant 19 : index
    %87 = memref.load %arg4[%c19_32] : memref<144xf32, #tpu.memory_space<smem>>
    %c20_33 = arith.constant 20 : index
    %88 = memref.load %arg4[%c20_33] : memref<144xf32, #tpu.memory_space<smem>>
    %c21_34 = arith.constant 21 : index
    %89 = memref.load %arg4[%c21_34] : memref<144xf32, #tpu.memory_space<smem>>
    %c22_35 = arith.constant 22 : index
    %90 = memref.load %arg4[%c22_35] : memref<144xf32, #tpu.memory_space<smem>>
    %c23_36 = arith.constant 23 : index
    %91 = memref.load %arg4[%c23_36] : memref<144xf32, #tpu.memory_space<smem>>
    %c24_37 = arith.constant 24 : index
    %92 = memref.load %arg4[%c24_37] : memref<144xf32, #tpu.memory_space<smem>>
    %c25_38 = arith.constant 25 : index
    %93 = memref.load %arg4[%c25_38] : memref<144xf32, #tpu.memory_space<smem>>
    %c26_39 = arith.constant 26 : index
    %94 = memref.load %arg4[%c26_39] : memref<144xf32, #tpu.memory_space<smem>>
    %c27_40 = arith.constant 27 : index
    %95 = memref.load %arg4[%c27_40] : memref<144xf32, #tpu.memory_space<smem>>
    %c28_41 = arith.constant 28 : index
    %96 = memref.load %arg4[%c28_41] : memref<144xf32, #tpu.memory_space<smem>>
    %c29_42 = arith.constant 29 : index
    %97 = memref.load %arg4[%c29_42] : memref<144xf32, #tpu.memory_space<smem>>
    %c30_43 = arith.constant 30 : index
    %98 = memref.load %arg4[%c30_43] : memref<144xf32, #tpu.memory_space<smem>>
    %c31_44 = arith.constant 31 : index
    %99 = memref.load %arg4[%c31_44] : memref<144xf32, #tpu.memory_space<smem>>
    %c32_45 = arith.constant 32 : index
    %100 = memref.load %arg4[%c32_45] : memref<144xf32, #tpu.memory_space<smem>>
    %c33_46 = arith.constant 33 : index
    %101 = memref.load %arg4[%c33_46] : memref<144xf32, #tpu.memory_space<smem>>
    %c34_47 = arith.constant 34 : index
    %102 = memref.load %arg4[%c34_47] : memref<144xf32, #tpu.memory_space<smem>>
    %c35_48 = arith.constant 35 : index
    %103 = memref.load %arg4[%c35_48] : memref<144xf32, #tpu.memory_space<smem>>
    %c36 = arith.constant 36 : index
    %104 = memref.load %arg4[%c36] : memref<144xf32, #tpu.memory_space<smem>>
    %c37 = arith.constant 37 : index
    %105 = memref.load %arg4[%c37] : memref<144xf32, #tpu.memory_space<smem>>
    %c38 = arith.constant 38 : index
    %106 = memref.load %arg4[%c38] : memref<144xf32, #tpu.memory_space<smem>>
    %c39 = arith.constant 39 : index
    %107 = memref.load %arg4[%c39] : memref<144xf32, #tpu.memory_space<smem>>
    %c40 = arith.constant 40 : index
    %108 = memref.load %arg4[%c40] : memref<144xf32, #tpu.memory_space<smem>>
    %c41 = arith.constant 41 : index
    %109 = memref.load %arg4[%c41] : memref<144xf32, #tpu.memory_space<smem>>
    %c42 = arith.constant 42 : index
    %110 = memref.load %arg4[%c42] : memref<144xf32, #tpu.memory_space<smem>>
    %c43 = arith.constant 43 : index
    %111 = memref.load %arg4[%c43] : memref<144xf32, #tpu.memory_space<smem>>
    %c44 = arith.constant 44 : index
    %112 = memref.load %arg4[%c44] : memref<144xf32, #tpu.memory_space<smem>>
    %c45 = arith.constant 45 : index
    %113 = memref.load %arg4[%c45] : memref<144xf32, #tpu.memory_space<smem>>
    %c46 = arith.constant 46 : index
    %114 = memref.load %arg4[%c46] : memref<144xf32, #tpu.memory_space<smem>>
    %c47 = arith.constant 47 : index
    %115 = memref.load %arg4[%c47] : memref<144xf32, #tpu.memory_space<smem>>
    %c48 = arith.constant 48 : index
    %116 = memref.load %arg4[%c48] : memref<144xf32, #tpu.memory_space<smem>>
    %c49 = arith.constant 49 : index
    %117 = memref.load %arg4[%c49] : memref<144xf32, #tpu.memory_space<smem>>
    %c50 = arith.constant 50 : index
    %118 = memref.load %arg4[%c50] : memref<144xf32, #tpu.memory_space<smem>>
    %c51 = arith.constant 51 : index
    %119 = memref.load %arg4[%c51] : memref<144xf32, #tpu.memory_space<smem>>
    %c52 = arith.constant 52 : index
    %120 = memref.load %arg4[%c52] : memref<144xf32, #tpu.memory_space<smem>>
    %c53 = arith.constant 53 : index
    %121 = memref.load %arg4[%c53] : memref<144xf32, #tpu.memory_space<smem>>
    %c54 = arith.constant 54 : index
    %122 = memref.load %arg4[%c54] : memref<144xf32, #tpu.memory_space<smem>>
    %c55 = arith.constant 55 : index
    %123 = memref.load %arg4[%c55] : memref<144xf32, #tpu.memory_space<smem>>
    %c56 = arith.constant 56 : index
    %124 = memref.load %arg4[%c56] : memref<144xf32, #tpu.memory_space<smem>>
    %c57 = arith.constant 57 : index
    %125 = memref.load %arg4[%c57] : memref<144xf32, #tpu.memory_space<smem>>
    %c58 = arith.constant 58 : index
    %126 = memref.load %arg4[%c58] : memref<144xf32, #tpu.memory_space<smem>>
    %c59 = arith.constant 59 : index
    %127 = memref.load %arg4[%c59] : memref<144xf32, #tpu.memory_space<smem>>
    %c60 = arith.constant 60 : index
    %128 = memref.load %arg4[%c60] : memref<144xf32, #tpu.memory_space<smem>>
    %c61 = arith.constant 61 : index
    %129 = memref.load %arg4[%c61] : memref<144xf32, #tpu.memory_space<smem>>
    %c62 = arith.constant 62 : index
    %130 = memref.load %arg4[%c62] : memref<144xf32, #tpu.memory_space<smem>>
    %c63 = arith.constant 63 : index
    %131 = memref.load %arg4[%c63] : memref<144xf32, #tpu.memory_space<smem>>
    %c64 = arith.constant 64 : index
    %132 = memref.load %arg4[%c64] : memref<144xf32, #tpu.memory_space<smem>>
    %c65 = arith.constant 65 : index
    %133 = memref.load %arg4[%c65] : memref<144xf32, #tpu.memory_space<smem>>
    %c66 = arith.constant 66 : index
    %134 = memref.load %arg4[%c66] : memref<144xf32, #tpu.memory_space<smem>>
    %c67 = arith.constant 67 : index
    %135 = memref.load %arg4[%c67] : memref<144xf32, #tpu.memory_space<smem>>
    %c68 = arith.constant 68 : index
    %136 = memref.load %arg4[%c68] : memref<144xf32, #tpu.memory_space<smem>>
    %c69 = arith.constant 69 : index
    %137 = memref.load %arg4[%c69] : memref<144xf32, #tpu.memory_space<smem>>
    %c70 = arith.constant 70 : index
    %138 = memref.load %arg4[%c70] : memref<144xf32, #tpu.memory_space<smem>>
    %c71 = arith.constant 71 : index
    %139 = memref.load %arg4[%c71] : memref<144xf32, #tpu.memory_space<smem>>
    %c72 = arith.constant 72 : index
    %140 = memref.load %arg4[%c72] : memref<144xf32, #tpu.memory_space<smem>>
    %c73 = arith.constant 73 : index
    %141 = memref.load %arg4[%c73] : memref<144xf32, #tpu.memory_space<smem>>
    %c74 = arith.constant 74 : index
    %142 = memref.load %arg4[%c74] : memref<144xf32, #tpu.memory_space<smem>>
    %c75 = arith.constant 75 : index
    %143 = memref.load %arg4[%c75] : memref<144xf32, #tpu.memory_space<smem>>
    %c76 = arith.constant 76 : index
    %144 = memref.load %arg4[%c76] : memref<144xf32, #tpu.memory_space<smem>>
    %c77 = arith.constant 77 : index
    %145 = memref.load %arg4[%c77] : memref<144xf32, #tpu.memory_space<smem>>
    %c78 = arith.constant 78 : index
    %146 = memref.load %arg4[%c78] : memref<144xf32, #tpu.memory_space<smem>>
    %c79 = arith.constant 79 : index
    %147 = memref.load %arg4[%c79] : memref<144xf32, #tpu.memory_space<smem>>
    %c80 = arith.constant 80 : index
    %148 = memref.load %arg4[%c80] : memref<144xf32, #tpu.memory_space<smem>>
    %c81 = arith.constant 81 : index
    %149 = memref.load %arg4[%c81] : memref<144xf32, #tpu.memory_space<smem>>
    %c82 = arith.constant 82 : index
    %150 = memref.load %arg4[%c82] : memref<144xf32, #tpu.memory_space<smem>>
    %c83 = arith.constant 83 : index
    %151 = memref.load %arg4[%c83] : memref<144xf32, #tpu.memory_space<smem>>
    %c84 = arith.constant 84 : index
    %152 = memref.load %arg4[%c84] : memref<144xf32, #tpu.memory_space<smem>>
    %c85 = arith.constant 85 : index
    %153 = memref.load %arg4[%c85] : memref<144xf32, #tpu.memory_space<smem>>
    %c86 = arith.constant 86 : index
    %154 = memref.load %arg4[%c86] : memref<144xf32, #tpu.memory_space<smem>>
    %c87 = arith.constant 87 : index
    %155 = memref.load %arg4[%c87] : memref<144xf32, #tpu.memory_space<smem>>
    %c88 = arith.constant 88 : index
    %156 = memref.load %arg4[%c88] : memref<144xf32, #tpu.memory_space<smem>>
    %c89 = arith.constant 89 : index
    %157 = memref.load %arg4[%c89] : memref<144xf32, #tpu.memory_space<smem>>
    %c90 = arith.constant 90 : index
    %158 = memref.load %arg4[%c90] : memref<144xf32, #tpu.memory_space<smem>>
    %c91 = arith.constant 91 : index
    %159 = memref.load %arg4[%c91] : memref<144xf32, #tpu.memory_space<smem>>
    %c92 = arith.constant 92 : index
    %160 = memref.load %arg4[%c92] : memref<144xf32, #tpu.memory_space<smem>>
    %c93 = arith.constant 93 : index
    %161 = memref.load %arg4[%c93] : memref<144xf32, #tpu.memory_space<smem>>
    %c94 = arith.constant 94 : index
    %162 = memref.load %arg4[%c94] : memref<144xf32, #tpu.memory_space<smem>>
    %c95 = arith.constant 95 : index
    %163 = memref.load %arg4[%c95] : memref<144xf32, #tpu.memory_space<smem>>
    %c96 = arith.constant 96 : index
    %164 = memref.load %arg4[%c96] : memref<144xf32, #tpu.memory_space<smem>>
    %c97 = arith.constant 97 : index
    %165 = memref.load %arg4[%c97] : memref<144xf32, #tpu.memory_space<smem>>
    %c98 = arith.constant 98 : index
    %166 = memref.load %arg4[%c98] : memref<144xf32, #tpu.memory_space<smem>>
    %c99 = arith.constant 99 : index
    %167 = memref.load %arg4[%c99] : memref<144xf32, #tpu.memory_space<smem>>
    %c100 = arith.constant 100 : index
    %168 = memref.load %arg4[%c100] : memref<144xf32, #tpu.memory_space<smem>>
    %c101 = arith.constant 101 : index
    %169 = memref.load %arg4[%c101] : memref<144xf32, #tpu.memory_space<smem>>
    %c102 = arith.constant 102 : index
    %170 = memref.load %arg4[%c102] : memref<144xf32, #tpu.memory_space<smem>>
    %c103 = arith.constant 103 : index
    %171 = memref.load %arg4[%c103] : memref<144xf32, #tpu.memory_space<smem>>
    %c104 = arith.constant 104 : index
    %172 = memref.load %arg4[%c104] : memref<144xf32, #tpu.memory_space<smem>>
    %c105 = arith.constant 105 : index
    %173 = memref.load %arg4[%c105] : memref<144xf32, #tpu.memory_space<smem>>
    %c106 = arith.constant 106 : index
    %174 = memref.load %arg4[%c106] : memref<144xf32, #tpu.memory_space<smem>>
    %c107 = arith.constant 107 : index
    %175 = memref.load %arg4[%c107] : memref<144xf32, #tpu.memory_space<smem>>
    %c108 = arith.constant 108 : index
    %176 = memref.load %arg4[%c108] : memref<144xf32, #tpu.memory_space<smem>>
    %c109 = arith.constant 109 : index
    %177 = memref.load %arg4[%c109] : memref<144xf32, #tpu.memory_space<smem>>
    %c110 = arith.constant 110 : index
    %178 = memref.load %arg4[%c110] : memref<144xf32, #tpu.memory_space<smem>>
    %c111 = arith.constant 111 : index
    %179 = memref.load %arg4[%c111] : memref<144xf32, #tpu.memory_space<smem>>
    %c112 = arith.constant 112 : index
    %180 = memref.load %arg4[%c112] : memref<144xf32, #tpu.memory_space<smem>>
    %c113 = arith.constant 113 : index
    %181 = memref.load %arg4[%c113] : memref<144xf32, #tpu.memory_space<smem>>
    %c114 = arith.constant 114 : index
    %182 = memref.load %arg4[%c114] : memref<144xf32, #tpu.memory_space<smem>>
    %c115 = arith.constant 115 : index
    %183 = memref.load %arg4[%c115] : memref<144xf32, #tpu.memory_space<smem>>
    %c116 = arith.constant 116 : index
    %184 = memref.load %arg4[%c116] : memref<144xf32, #tpu.memory_space<smem>>
    %c117 = arith.constant 117 : index
    %185 = memref.load %arg4[%c117] : memref<144xf32, #tpu.memory_space<smem>>
    %c118 = arith.constant 118 : index
    %186 = memref.load %arg4[%c118] : memref<144xf32, #tpu.memory_space<smem>>
    %c119 = arith.constant 119 : index
    %187 = memref.load %arg4[%c119] : memref<144xf32, #tpu.memory_space<smem>>
    %c120 = arith.constant 120 : index
    %188 = memref.load %arg4[%c120] : memref<144xf32, #tpu.memory_space<smem>>
    %c121 = arith.constant 121 : index
    %189 = memref.load %arg4[%c121] : memref<144xf32, #tpu.memory_space<smem>>
    %c122 = arith.constant 122 : index
    %190 = memref.load %arg4[%c122] : memref<144xf32, #tpu.memory_space<smem>>
    %c123 = arith.constant 123 : index
    %191 = memref.load %arg4[%c123] : memref<144xf32, #tpu.memory_space<smem>>
    %c124 = arith.constant 124 : index
    %192 = memref.load %arg4[%c124] : memref<144xf32, #tpu.memory_space<smem>>
    %c125 = arith.constant 125 : index
    %193 = memref.load %arg4[%c125] : memref<144xf32, #tpu.memory_space<smem>>
    %c126 = arith.constant 126 : index
    %194 = memref.load %arg4[%c126] : memref<144xf32, #tpu.memory_space<smem>>
    %c127 = arith.constant 127 : index
    %195 = memref.load %arg4[%c127] : memref<144xf32, #tpu.memory_space<smem>>
    %c128 = arith.constant 128 : index
    %196 = memref.load %arg4[%c128] : memref<144xf32, #tpu.memory_space<smem>>
    %c129 = arith.constant 129 : index
    %197 = memref.load %arg4[%c129] : memref<144xf32, #tpu.memory_space<smem>>
    %c130 = arith.constant 130 : index
    %198 = memref.load %arg4[%c130] : memref<144xf32, #tpu.memory_space<smem>>
    %c131 = arith.constant 131 : index
    %199 = memref.load %arg4[%c131] : memref<144xf32, #tpu.memory_space<smem>>
    %c132 = arith.constant 132 : index
    %200 = memref.load %arg4[%c132] : memref<144xf32, #tpu.memory_space<smem>>
    %c133 = arith.constant 133 : index
    %201 = memref.load %arg4[%c133] : memref<144xf32, #tpu.memory_space<smem>>
    %c134 = arith.constant 134 : index
    %202 = memref.load %arg4[%c134] : memref<144xf32, #tpu.memory_space<smem>>
    %c135 = arith.constant 135 : index
    %203 = memref.load %arg4[%c135] : memref<144xf32, #tpu.memory_space<smem>>
    %c136 = arith.constant 136 : index
    %204 = memref.load %arg4[%c136] : memref<144xf32, #tpu.memory_space<smem>>
    %c137 = arith.constant 137 : index
    %205 = memref.load %arg4[%c137] : memref<144xf32, #tpu.memory_space<smem>>
    %c138 = arith.constant 138 : index
    %206 = memref.load %arg4[%c138] : memref<144xf32, #tpu.memory_space<smem>>
    %c139 = arith.constant 139 : index
    %207 = memref.load %arg4[%c139] : memref<144xf32, #tpu.memory_space<smem>>
    %c140 = arith.constant 140 : index
    %208 = memref.load %arg4[%c140] : memref<144xf32, #tpu.memory_space<smem>>
    %c141 = arith.constant 141 : index
    %209 = memref.load %arg4[%c141] : memref<144xf32, #tpu.memory_space<smem>>
    %c142 = arith.constant 142 : index
    %210 = memref.load %arg4[%c142] : memref<144xf32, #tpu.memory_space<smem>>
    %c143 = arith.constant 143 : index
    %211 = memref.load %arg4[%c143] : memref<144xf32, #tpu.memory_space<smem>>
    %c0_49 = arith.constant 0 : index
    %212 = memref.load %arg5[%c0_49] : memref<4xf32, #tpu.memory_space<smem>>
    %c1_50 = arith.constant 1 : index
    %213 = memref.load %arg5[%c1_50] : memref<4xf32, #tpu.memory_space<smem>>
    %c2_51 = arith.constant 2 : index
    %214 = memref.load %arg5[%c2_51] : memref<4xf32, #tpu.memory_space<smem>>
    %c3_52 = arith.constant 3 : index
    %215 = memref.load %arg5[%c3_52] : memref<4xf32, #tpu.memory_space<smem>>
    %c0_53 = arith.constant 0 : index
    %216 = memref.load %arg6[%c0_53] : memref<4xf32, #tpu.memory_space<smem>>
    %c1_54 = arith.constant 1 : index
    %217 = memref.load %arg6[%c1_54] : memref<4xf32, #tpu.memory_space<smem>>
    %c2_55 = arith.constant 2 : index
    %218 = memref.load %arg6[%c2_55] : memref<4xf32, #tpu.memory_space<smem>>
    %c3_56 = arith.constant 3 : index
    %219 = memref.load %arg6[%c3_56] : memref<4xf32, #tpu.memory_space<smem>>
    %c0_57 = arith.constant 0 : index
    %220 = memref.load %arg7[%c0_57] : memref<36xf32, #tpu.memory_space<smem>>
    %c1_58 = arith.constant 1 : index
    %221 = memref.load %arg7[%c1_58] : memref<36xf32, #tpu.memory_space<smem>>
    %c2_59 = arith.constant 2 : index
    %222 = memref.load %arg7[%c2_59] : memref<36xf32, #tpu.memory_space<smem>>
    %c3_60 = arith.constant 3 : index
    %223 = memref.load %arg7[%c3_60] : memref<36xf32, #tpu.memory_space<smem>>
    %c4_61 = arith.constant 4 : index
    %224 = memref.load %arg7[%c4_61] : memref<36xf32, #tpu.memory_space<smem>>
    %c5_62 = arith.constant 5 : index
    %225 = memref.load %arg7[%c5_62] : memref<36xf32, #tpu.memory_space<smem>>
    %c6_63 = arith.constant 6 : index
    %226 = memref.load %arg7[%c6_63] : memref<36xf32, #tpu.memory_space<smem>>
    %c7_64 = arith.constant 7 : index
    %227 = memref.load %arg7[%c7_64] : memref<36xf32, #tpu.memory_space<smem>>
    %c8_65 = arith.constant 8 : index
    %228 = memref.load %arg7[%c8_65] : memref<36xf32, #tpu.memory_space<smem>>
    %c9_66 = arith.constant 9 : index
    %229 = memref.load %arg7[%c9_66] : memref<36xf32, #tpu.memory_space<smem>>
    %c10_67 = arith.constant 10 : index
    %230 = memref.load %arg7[%c10_67] : memref<36xf32, #tpu.memory_space<smem>>
    %c11_68 = arith.constant 11 : index
    %231 = memref.load %arg7[%c11_68] : memref<36xf32, #tpu.memory_space<smem>>
    %c12_69 = arith.constant 12 : index
    %232 = memref.load %arg7[%c12_69] : memref<36xf32, #tpu.memory_space<smem>>
    %c13_70 = arith.constant 13 : index
    %233 = memref.load %arg7[%c13_70] : memref<36xf32, #tpu.memory_space<smem>>
    %c14_71 = arith.constant 14 : index
    %234 = memref.load %arg7[%c14_71] : memref<36xf32, #tpu.memory_space<smem>>
    %c15_72 = arith.constant 15 : index
    %235 = memref.load %arg7[%c15_72] : memref<36xf32, #tpu.memory_space<smem>>
    %c16_73 = arith.constant 16 : index
    %236 = memref.load %arg7[%c16_73] : memref<36xf32, #tpu.memory_space<smem>>
    %c17_74 = arith.constant 17 : index
    %237 = memref.load %arg7[%c17_74] : memref<36xf32, #tpu.memory_space<smem>>
    %c18_75 = arith.constant 18 : index
    %238 = memref.load %arg7[%c18_75] : memref<36xf32, #tpu.memory_space<smem>>
    %c19_76 = arith.constant 19 : index
    %239 = memref.load %arg7[%c19_76] : memref<36xf32, #tpu.memory_space<smem>>
    %c20_77 = arith.constant 20 : index
    %240 = memref.load %arg7[%c20_77] : memref<36xf32, #tpu.memory_space<smem>>
    %c21_78 = arith.constant 21 : index
    %241 = memref.load %arg7[%c21_78] : memref<36xf32, #tpu.memory_space<smem>>
    %c22_79 = arith.constant 22 : index
    %242 = memref.load %arg7[%c22_79] : memref<36xf32, #tpu.memory_space<smem>>
    %c23_80 = arith.constant 23 : index
    %243 = memref.load %arg7[%c23_80] : memref<36xf32, #tpu.memory_space<smem>>
    %c24_81 = arith.constant 24 : index
    %244 = memref.load %arg7[%c24_81] : memref<36xf32, #tpu.memory_space<smem>>
    %c25_82 = arith.constant 25 : index
    %245 = memref.load %arg7[%c25_82] : memref<36xf32, #tpu.memory_space<smem>>
    %c26_83 = arith.constant 26 : index
    %246 = memref.load %arg7[%c26_83] : memref<36xf32, #tpu.memory_space<smem>>
    %c27_84 = arith.constant 27 : index
    %247 = memref.load %arg7[%c27_84] : memref<36xf32, #tpu.memory_space<smem>>
    %c28_85 = arith.constant 28 : index
    %248 = memref.load %arg7[%c28_85] : memref<36xf32, #tpu.memory_space<smem>>
    %c29_86 = arith.constant 29 : index
    %249 = memref.load %arg7[%c29_86] : memref<36xf32, #tpu.memory_space<smem>>
    %c30_87 = arith.constant 30 : index
    %250 = memref.load %arg7[%c30_87] : memref<36xf32, #tpu.memory_space<smem>>
    %c31_88 = arith.constant 31 : index
    %251 = memref.load %arg7[%c31_88] : memref<36xf32, #tpu.memory_space<smem>>
    %c32_89 = arith.constant 32 : index
    %252 = memref.load %arg7[%c32_89] : memref<36xf32, #tpu.memory_space<smem>>
    %c33_90 = arith.constant 33 : index
    %253 = memref.load %arg7[%c33_90] : memref<36xf32, #tpu.memory_space<smem>>
    %c34_91 = arith.constant 34 : index
    %254 = memref.load %arg7[%c34_91] : memref<36xf32, #tpu.memory_space<smem>>
    %c35_92 = arith.constant 35 : index
    %255 = memref.load %arg7[%c35_92] : memref<36xf32, #tpu.memory_space<smem>>
    %c0_93 = arith.constant 0 : index
    %256 = memref.load %arg8[%c0_93] : memref<1xf32, #tpu.memory_space<smem>>
    %c1_i32_94 = arith.constant 1 : i32
    %257 = tpu.dynamic_rotate %1 by %c1_i32_94 dim 0 : vector<16x128xf32>, i32 -> vector<16x128xf32>
    %cst = arith.constant 0.000000e+00 : f32
    %258 = vector.broadcast %cst : f32 to vector<16x128xf32>
    %259 = arith.select %21, %257, %258 : vector<16x128xi1>, vector<16x128xf32>
    %c1_i32_95 = arith.constant 1 : i32
    %260 = tpu.dynamic_rotate %259 by %c1_i32_95 dim 1 : vector<16x128xf32>, i32 -> vector<16x128xf32>
    %cst_96 = arith.constant 0.000000e+00 : f32
    %261 = vector.broadcast %cst_96 : f32 to vector<16x128xf32>
    %262 = arith.select %25, %260, %261 : vector<16x128xi1>, vector<16x128xf32>
    %c127_i32 = arith.constant 127 : i32
    %263 = tpu.dynamic_rotate %259 by %c127_i32 dim 1 : vector<16x128xf32>, i32 -> vector<16x128xf32>
    %cst_97 = arith.constant 0.000000e+00 : f32
    %264 = vector.broadcast %cst_97 : f32 to vector<16x128xf32>
    %265 = arith.select %27, %263, %264 : vector<16x128xi1>, vector<16x128xf32>
    %c1_i32_98 = arith.constant 1 : i32
    %266 = tpu.dynamic_rotate %1 by %c1_i32_98 dim 1 : vector<16x128xf32>, i32 -> vector<16x128xf32>
    %cst_99 = arith.constant 0.000000e+00 : f32
    %267 = vector.broadcast %cst_99 : f32 to vector<16x128xf32>
    %268 = arith.select %25, %266, %267 : vector<16x128xi1>, vector<16x128xf32>
    %c127_i32_100 = arith.constant 127 : i32
    %269 = tpu.dynamic_rotate %1 by %c127_i32_100 dim 1 : vector<16x128xf32>, i32 -> vector<16x128xf32>
    %cst_101 = arith.constant 0.000000e+00 : f32
    %270 = vector.broadcast %cst_101 : f32 to vector<16x128xf32>
    %271 = arith.select %27, %269, %270 : vector<16x128xi1>, vector<16x128xf32>
    %c15_i32 = arith.constant 15 : i32
    %272 = tpu.dynamic_rotate %1 by %c15_i32 dim 0 : vector<16x128xf32>, i32 -> vector<16x128xf32>
    %cst_102 = arith.constant 0.000000e+00 : f32
    %273 = vector.broadcast %cst_102 : f32 to vector<16x128xf32>
    %274 = arith.select %23, %272, %273 : vector<16x128xi1>, vector<16x128xf32>
    %c1_i32_103 = arith.constant 1 : i32
    %275 = tpu.dynamic_rotate %274 by %c1_i32_103 dim 1 : vector<16x128xf32>, i32 -> vector<16x128xf32>
    %cst_104 = arith.constant 0.000000e+00 : f32
    %276 = vector.broadcast %cst_104 : f32 to vector<16x128xf32>
    %277 = arith.select %25, %275, %276 : vector<16x128xi1>, vector<16x128xf32>
    %c127_i32_105 = arith.constant 127 : i32
    %278 = tpu.dynamic_rotate %274 by %c127_i32_105 dim 1 : vector<16x128xf32>, i32 -> vector<16x128xf32>
    %cst_106 = arith.constant 0.000000e+00 : f32
    %279 = vector.broadcast %cst_106 : f32 to vector<16x128xf32>
    %280 = arith.select %27, %278, %279 : vector<16x128xi1>, vector<16x128xf32>
    %281 = vector.broadcast %28 : f32 to vector<16x128xf32>
    %282 = arith.mulf %281, %262 : vector<16x128xf32>
    %283 = vector.broadcast %32 : f32 to vector<16x128xf32>
    %284 = arith.mulf %283, %259 : vector<16x128xf32>
    %285 = arith.addf %282, %284 : vector<16x128xf32>
    %286 = vector.broadcast %36 : f32 to vector<16x128xf32>
    %287 = arith.mulf %286, %265 : vector<16x128xf32>
    %288 = arith.addf %285, %287 : vector<16x128xf32>
    %289 = vector.broadcast %40 : f32 to vector<16x128xf32>
    %290 = arith.mulf %289, %268 : vector<16x128xf32>
    %291 = arith.addf %288, %290 : vector<16x128xf32>
    %292 = vector.broadcast %44 : f32 to vector<16x128xf32>
    %293 = arith.mulf %292, %1 : vector<16x128xf32>
    %294 = arith.addf %291, %293 : vector<16x128xf32>
    %295 = vector.broadcast %48 : f32 to vector<16x128xf32>
    %296 = arith.mulf %295, %271 : vector<16x128xf32>
    %297 = arith.addf %294, %296 : vector<16x128xf32>
    %298 = vector.broadcast %52 : f32 to vector<16x128xf32>
    %299 = arith.mulf %298, %277 : vector<16x128xf32>
    %300 = arith.addf %297, %299 : vector<16x128xf32>
    %301 = vector.broadcast %56 : f32 to vector<16x128xf32>
    %302 = arith.mulf %301, %274 : vector<16x128xf32>
    %303 = arith.addf %300, %302 : vector<16x128xf32>
    %304 = vector.broadcast %60 : f32 to vector<16x128xf32>
    %305 = arith.mulf %304, %280 : vector<16x128xf32>
    %306 = arith.addf %303, %305 : vector<16x128xf32>
    %307 = vector.broadcast %64 : f32 to vector<16x128xf32>
    %308 = arith.addf %306, %307 : vector<16x128xf32>
    %cst_107 = arith.constant 0.000000e+00 : f32
    %309 = vector.broadcast %cst_107 : f32 to vector<16x128xf32>
    %310 = arith.maximumf %308, %309 : vector<16x128xf32>
    %311 = vector.broadcast %29 : f32 to vector<16x128xf32>
    %312 = arith.mulf %311, %262 : vector<16x128xf32>
    %313 = vector.broadcast %33 : f32 to vector<16x128xf32>
    %314 = arith.mulf %313, %259 : vector<16x128xf32>
    %315 = arith.addf %312, %314 : vector<16x128xf32>
    %316 = vector.broadcast %37 : f32 to vector<16x128xf32>
    %317 = arith.mulf %316, %265 : vector<16x128xf32>
    %318 = arith.addf %315, %317 : vector<16x128xf32>
    %319 = vector.broadcast %41 : f32 to vector<16x128xf32>
    %320 = arith.mulf %319, %268 : vector<16x128xf32>
    %321 = arith.addf %318, %320 : vector<16x128xf32>
    %322 = vector.broadcast %45 : f32 to vector<16x128xf32>
    %323 = arith.mulf %322, %1 : vector<16x128xf32>
    %324 = arith.addf %321, %323 : vector<16x128xf32>
    %325 = vector.broadcast %49 : f32 to vector<16x128xf32>
    %326 = arith.mulf %325, %271 : vector<16x128xf32>
    %327 = arith.addf %324, %326 : vector<16x128xf32>
    %328 = vector.broadcast %53 : f32 to vector<16x128xf32>
    %329 = arith.mulf %328, %277 : vector<16x128xf32>
    %330 = arith.addf %327, %329 : vector<16x128xf32>
    %331 = vector.broadcast %57 : f32 to vector<16x128xf32>
    %332 = arith.mulf %331, %274 : vector<16x128xf32>
    %333 = arith.addf %330, %332 : vector<16x128xf32>
    %334 = vector.broadcast %61 : f32 to vector<16x128xf32>
    %335 = arith.mulf %334, %280 : vector<16x128xf32>
    %336 = arith.addf %333, %335 : vector<16x128xf32>
    %337 = vector.broadcast %65 : f32 to vector<16x128xf32>
    %338 = arith.addf %336, %337 : vector<16x128xf32>
    %cst_108 = arith.constant 0.000000e+00 : f32
    %339 = vector.broadcast %cst_108 : f32 to vector<16x128xf32>
    %340 = arith.maximumf %338, %339 : vector<16x128xf32>
    %341 = vector.broadcast %30 : f32 to vector<16x128xf32>
    %342 = arith.mulf %341, %262 : vector<16x128xf32>
    %343 = vector.broadcast %34 : f32 to vector<16x128xf32>
    %344 = arith.mulf %343, %259 : vector<16x128xf32>
    %345 = arith.addf %342, %344 : vector<16x128xf32>
    %346 = vector.broadcast %38 : f32 to vector<16x128xf32>
    %347 = arith.mulf %346, %265 : vector<16x128xf32>
    %348 = arith.addf %345, %347 : vector<16x128xf32>
    %349 = vector.broadcast %42 : f32 to vector<16x128xf32>
    %350 = arith.mulf %349, %268 : vector<16x128xf32>
    %351 = arith.addf %348, %350 : vector<16x128xf32>
    %352 = vector.broadcast %46 : f32 to vector<16x128xf32>
    %353 = arith.mulf %352, %1 : vector<16x128xf32>
    %354 = arith.addf %351, %353 : vector<16x128xf32>
    %355 = vector.broadcast %50 : f32 to vector<16x128xf32>
    %356 = arith.mulf %355, %271 : vector<16x128xf32>
    %357 = arith.addf %354, %356 : vector<16x128xf32>
    %358 = vector.broadcast %54 : f32 to vector<16x128xf32>
    %359 = arith.mulf %358, %277 : vector<16x128xf32>
    %360 = arith.addf %357, %359 : vector<16x128xf32>
    %361 = vector.broadcast %58 : f32 to vector<16x128xf32>
    %362 = arith.mulf %361, %274 : vector<16x128xf32>
    %363 = arith.addf %360, %362 : vector<16x128xf32>
    %364 = vector.broadcast %62 : f32 to vector<16x128xf32>
    %365 = arith.mulf %364, %280 : vector<16x128xf32>
    %366 = arith.addf %363, %365 : vector<16x128xf32>
    %367 = vector.broadcast %66 : f32 to vector<16x128xf32>
    %368 = arith.addf %366, %367 : vector<16x128xf32>
    %cst_109 = arith.constant 0.000000e+00 : f32
    %369 = vector.broadcast %cst_109 : f32 to vector<16x128xf32>
    %370 = arith.maximumf %368, %369 : vector<16x128xf32>
    %371 = vector.broadcast %31 : f32 to vector<16x128xf32>
    %372 = arith.mulf %371, %262 : vector<16x128xf32>
    %373 = vector.broadcast %35 : f32 to vector<16x128xf32>
    %374 = arith.mulf %373, %259 : vector<16x128xf32>
    %375 = arith.addf %372, %374 : vector<16x128xf32>
    %376 = vector.broadcast %39 : f32 to vector<16x128xf32>
    %377 = arith.mulf %376, %265 : vector<16x128xf32>
    %378 = arith.addf %375, %377 : vector<16x128xf32>
    %379 = vector.broadcast %43 : f32 to vector<16x128xf32>
    %380 = arith.mulf %379, %268 : vector<16x128xf32>
    %381 = arith.addf %378, %380 : vector<16x128xf32>
    %382 = vector.broadcast %47 : f32 to vector<16x128xf32>
    %383 = arith.mulf %382, %1 : vector<16x128xf32>
    %384 = arith.addf %381, %383 : vector<16x128xf32>
    %385 = vector.broadcast %51 : f32 to vector<16x128xf32>
    %386 = arith.mulf %385, %271 : vector<16x128xf32>
    %387 = arith.addf %384, %386 : vector<16x128xf32>
    %388 = vector.broadcast %55 : f32 to vector<16x128xf32>
    %389 = arith.mulf %388, %277 : vector<16x128xf32>
    %390 = arith.addf %387, %389 : vector<16x128xf32>
    %391 = vector.broadcast %59 : f32 to vector<16x128xf32>
    %392 = arith.mulf %391, %274 : vector<16x128xf32>
    %393 = arith.addf %390, %392 : vector<16x128xf32>
    %394 = vector.broadcast %63 : f32 to vector<16x128xf32>
    %395 = arith.mulf %394, %280 : vector<16x128xf32>
    %396 = arith.addf %393, %395 : vector<16x128xf32>
    %397 = vector.broadcast %67 : f32 to vector<16x128xf32>
    %398 = arith.addf %396, %397 : vector<16x128xf32>
    %cst_110 = arith.constant 0.000000e+00 : f32
    %399 = vector.broadcast %cst_110 : f32 to vector<16x128xf32>
    %400 = arith.maximumf %398, %399 : vector<16x128xf32>
    %c1_i32_111 = arith.constant 1 : i32
    %401 = tpu.dynamic_rotate %310 by %c1_i32_111 dim 0 : vector<16x128xf32>, i32 -> vector<16x128xf32>
    %cst_112 = arith.constant 0.000000e+00 : f32
    %402 = vector.broadcast %cst_112 : f32 to vector<16x128xf32>
    %403 = arith.select %21, %401, %402 : vector<16x128xi1>, vector<16x128xf32>
    %c1_i32_113 = arith.constant 1 : i32
    %404 = tpu.dynamic_rotate %403 by %c1_i32_113 dim 1 : vector<16x128xf32>, i32 -> vector<16x128xf32>
    %cst_114 = arith.constant 0.000000e+00 : f32
    %405 = vector.broadcast %cst_114 : f32 to vector<16x128xf32>
    %406 = arith.select %25, %404, %405 : vector<16x128xi1>, vector<16x128xf32>
    %c127_i32_115 = arith.constant 127 : i32
    %407 = tpu.dynamic_rotate %403 by %c127_i32_115 dim 1 : vector<16x128xf32>, i32 -> vector<16x128xf32>
    %cst_116 = arith.constant 0.000000e+00 : f32
    %408 = vector.broadcast %cst_116 : f32 to vector<16x128xf32>
    %409 = arith.select %27, %407, %408 : vector<16x128xi1>, vector<16x128xf32>
    %c1_i32_117 = arith.constant 1 : i32
    %410 = tpu.dynamic_rotate %310 by %c1_i32_117 dim 1 : vector<16x128xf32>, i32 -> vector<16x128xf32>
    %cst_118 = arith.constant 0.000000e+00 : f32
    %411 = vector.broadcast %cst_118 : f32 to vector<16x128xf32>
    %412 = arith.select %25, %410, %411 : vector<16x128xi1>, vector<16x128xf32>
    %c127_i32_119 = arith.constant 127 : i32
    %413 = tpu.dynamic_rotate %310 by %c127_i32_119 dim 1 : vector<16x128xf32>, i32 -> vector<16x128xf32>
    %cst_120 = arith.constant 0.000000e+00 : f32
    %414 = vector.broadcast %cst_120 : f32 to vector<16x128xf32>
    %415 = arith.select %27, %413, %414 : vector<16x128xi1>, vector<16x128xf32>
    %c15_i32_121 = arith.constant 15 : i32
    %416 = tpu.dynamic_rotate %310 by %c15_i32_121 dim 0 : vector<16x128xf32>, i32 -> vector<16x128xf32>
    %cst_122 = arith.constant 0.000000e+00 : f32
    %417 = vector.broadcast %cst_122 : f32 to vector<16x128xf32>
    %418 = arith.select %23, %416, %417 : vector<16x128xi1>, vector<16x128xf32>
    %c1_i32_123 = arith.constant 1 : i32
    %419 = tpu.dynamic_rotate %418 by %c1_i32_123 dim 1 : vector<16x128xf32>, i32 -> vector<16x128xf32>
    %cst_124 = arith.constant 0.000000e+00 : f32
    %420 = vector.broadcast %cst_124 : f32 to vector<16x128xf32>
    %421 = arith.select %25, %419, %420 : vector<16x128xi1>, vector<16x128xf32>
    %c127_i32_125 = arith.constant 127 : i32
    %422 = tpu.dynamic_rotate %418 by %c127_i32_125 dim 1 : vector<16x128xf32>, i32 -> vector<16x128xf32>
    %cst_126 = arith.constant 0.000000e+00 : f32
    %423 = vector.broadcast %cst_126 : f32 to vector<16x128xf32>
    %424 = arith.select %27, %422, %423 : vector<16x128xi1>, vector<16x128xf32>
    %425 = vector.broadcast %68 : f32 to vector<16x128xf32>
    %426 = arith.mulf %425, %406 : vector<16x128xf32>
    %427 = vector.broadcast %69 : f32 to vector<16x128xf32>
    %428 = arith.mulf %427, %406 : vector<16x128xf32>
    %429 = vector.broadcast %70 : f32 to vector<16x128xf32>
    %430 = arith.mulf %429, %406 : vector<16x128xf32>
    %431 = vector.broadcast %71 : f32 to vector<16x128xf32>
    %432 = arith.mulf %431, %406 : vector<16x128xf32>
    %433 = vector.broadcast %84 : f32 to vector<16x128xf32>
    %434 = arith.mulf %433, %403 : vector<16x128xf32>
    %435 = arith.addf %426, %434 : vector<16x128xf32>
    %436 = vector.broadcast %85 : f32 to vector<16x128xf32>
    %437 = arith.mulf %436, %403 : vector<16x128xf32>
    %438 = arith.addf %428, %437 : vector<16x128xf32>
    %439 = vector.broadcast %86 : f32 to vector<16x128xf32>
    %440 = arith.mulf %439, %403 : vector<16x128xf32>
    %441 = arith.addf %430, %440 : vector<16x128xf32>
    %442 = vector.broadcast %87 : f32 to vector<16x128xf32>
    %443 = arith.mulf %442, %403 : vector<16x128xf32>
    %444 = arith.addf %432, %443 : vector<16x128xf32>
    %445 = vector.broadcast %100 : f32 to vector<16x128xf32>
    %446 = arith.mulf %445, %409 : vector<16x128xf32>
    %447 = arith.addf %435, %446 : vector<16x128xf32>
    %448 = vector.broadcast %101 : f32 to vector<16x128xf32>
    %449 = arith.mulf %448, %409 : vector<16x128xf32>
    %450 = arith.addf %438, %449 : vector<16x128xf32>
    %451 = vector.broadcast %102 : f32 to vector<16x128xf32>
    %452 = arith.mulf %451, %409 : vector<16x128xf32>
    %453 = arith.addf %441, %452 : vector<16x128xf32>
    %454 = vector.broadcast %103 : f32 to vector<16x128xf32>
    %455 = arith.mulf %454, %409 : vector<16x128xf32>
    %456 = arith.addf %444, %455 : vector<16x128xf32>
    %457 = vector.broadcast %116 : f32 to vector<16x128xf32>
    %458 = arith.mulf %457, %412 : vector<16x128xf32>
    %459 = arith.addf %447, %458 : vector<16x128xf32>
    %460 = vector.broadcast %117 : f32 to vector<16x128xf32>
    %461 = arith.mulf %460, %412 : vector<16x128xf32>
    %462 = arith.addf %450, %461 : vector<16x128xf32>
    %463 = vector.broadcast %118 : f32 to vector<16x128xf32>
    %464 = arith.mulf %463, %412 : vector<16x128xf32>
    %465 = arith.addf %453, %464 : vector<16x128xf32>
    %466 = vector.broadcast %119 : f32 to vector<16x128xf32>
    %467 = arith.mulf %466, %412 : vector<16x128xf32>
    %468 = arith.addf %456, %467 : vector<16x128xf32>
    %469 = vector.broadcast %132 : f32 to vector<16x128xf32>
    %470 = arith.mulf %469, %310 : vector<16x128xf32>
    %471 = arith.addf %459, %470 : vector<16x128xf32>
    %472 = vector.broadcast %133 : f32 to vector<16x128xf32>
    %473 = arith.mulf %472, %310 : vector<16x128xf32>
    %474 = arith.addf %462, %473 : vector<16x128xf32>
    %475 = vector.broadcast %134 : f32 to vector<16x128xf32>
    %476 = arith.mulf %475, %310 : vector<16x128xf32>
    %477 = arith.addf %465, %476 : vector<16x128xf32>
    %478 = vector.broadcast %135 : f32 to vector<16x128xf32>
    %479 = arith.mulf %478, %310 : vector<16x128xf32>
    %480 = arith.addf %468, %479 : vector<16x128xf32>
    %481 = vector.broadcast %148 : f32 to vector<16x128xf32>
    %482 = arith.mulf %481, %415 : vector<16x128xf32>
    %483 = arith.addf %471, %482 : vector<16x128xf32>
    %484 = vector.broadcast %149 : f32 to vector<16x128xf32>
    %485 = arith.mulf %484, %415 : vector<16x128xf32>
    %486 = arith.addf %474, %485 : vector<16x128xf32>
    %487 = vector.broadcast %150 : f32 to vector<16x128xf32>
    %488 = arith.mulf %487, %415 : vector<16x128xf32>
    %489 = arith.addf %477, %488 : vector<16x128xf32>
    %490 = vector.broadcast %151 : f32 to vector<16x128xf32>
    %491 = arith.mulf %490, %415 : vector<16x128xf32>
    %492 = arith.addf %480, %491 : vector<16x128xf32>
    %493 = vector.broadcast %164 : f32 to vector<16x128xf32>
    %494 = arith.mulf %493, %421 : vector<16x128xf32>
    %495 = arith.addf %483, %494 : vector<16x128xf32>
    %496 = vector.broadcast %165 : f32 to vector<16x128xf32>
    %497 = arith.mulf %496, %421 : vector<16x128xf32>
    %498 = arith.addf %486, %497 : vector<16x128xf32>
    %499 = vector.broadcast %166 : f32 to vector<16x128xf32>
    %500 = arith.mulf %499, %421 : vector<16x128xf32>
    %501 = arith.addf %489, %500 : vector<16x128xf32>
    %502 = vector.broadcast %167 : f32 to vector<16x128xf32>
    %503 = arith.mulf %502, %421 : vector<16x128xf32>
    %504 = arith.addf %492, %503 : vector<16x128xf32>
    %505 = vector.broadcast %180 : f32 to vector<16x128xf32>
    %506 = arith.mulf %505, %418 : vector<16x128xf32>
    %507 = arith.addf %495, %506 : vector<16x128xf32>
    %508 = vector.broadcast %181 : f32 to vector<16x128xf32>
    %509 = arith.mulf %508, %418 : vector<16x128xf32>
    %510 = arith.addf %498, %509 : vector<16x128xf32>
    %511 = vector.broadcast %182 : f32 to vector<16x128xf32>
    %512 = arith.mulf %511, %418 : vector<16x128xf32>
    %513 = arith.addf %501, %512 : vector<16x128xf32>
    %514 = vector.broadcast %183 : f32 to vector<16x128xf32>
    %515 = arith.mulf %514, %418 : vector<16x128xf32>
    %516 = arith.addf %504, %515 : vector<16x128xf32>
    %517 = vector.broadcast %196 : f32 to vector<16x128xf32>
    %518 = arith.mulf %517, %424 : vector<16x128xf32>
    %519 = arith.addf %507, %518 : vector<16x128xf32>
    %520 = vector.broadcast %197 : f32 to vector<16x128xf32>
    %521 = arith.mulf %520, %424 : vector<16x128xf32>
    %522 = arith.addf %510, %521 : vector<16x128xf32>
    %523 = vector.broadcast %198 : f32 to vector<16x128xf32>
    %524 = arith.mulf %523, %424 : vector<16x128xf32>
    %525 = arith.addf %513, %524 : vector<16x128xf32>
    %526 = vector.broadcast %199 : f32 to vector<16x128xf32>
    %527 = arith.mulf %526, %424 : vector<16x128xf32>
    %528 = arith.addf %516, %527 : vector<16x128xf32>
    %c1_i32_127 = arith.constant 1 : i32
    %529 = tpu.dynamic_rotate %340 by %c1_i32_127 dim 0 : vector<16x128xf32>, i32 -> vector<16x128xf32>
    %cst_128 = arith.constant 0.000000e+00 : f32
    %530 = vector.broadcast %cst_128 : f32 to vector<16x128xf32>
    %531 = arith.select %21, %529, %530 : vector<16x128xi1>, vector<16x128xf32>
    %c1_i32_129 = arith.constant 1 : i32
    %532 = tpu.dynamic_rotate %531 by %c1_i32_129 dim 1 : vector<16x128xf32>, i32 -> vector<16x128xf32>
    %cst_130 = arith.constant 0.000000e+00 : f32
    %533 = vector.broadcast %cst_130 : f32 to vector<16x128xf32>
    %534 = arith.select %25, %532, %533 : vector<16x128xi1>, vector<16x128xf32>
    %c127_i32_131 = arith.constant 127 : i32
    %535 = tpu.dynamic_rotate %531 by %c127_i32_131 dim 1 : vector<16x128xf32>, i32 -> vector<16x128xf32>
    %cst_132 = arith.constant 0.000000e+00 : f32
    %536 = vector.broadcast %cst_132 : f32 to vector<16x128xf32>
    %537 = arith.select %27, %535, %536 : vector<16x128xi1>, vector<16x128xf32>
    %c1_i32_133 = arith.constant 1 : i32
    %538 = tpu.dynamic_rotate %340 by %c1_i32_133 dim 1 : vector<16x128xf32>, i32 -> vector<16x128xf32>
    %cst_134 = arith.constant 0.000000e+00 : f32
    %539 = vector.broadcast %cst_134 : f32 to vector<16x128xf32>
    %540 = arith.select %25, %538, %539 : vector<16x128xi1>, vector<16x128xf32>
    %c127_i32_135 = arith.constant 127 : i32
    %541 = tpu.dynamic_rotate %340 by %c127_i32_135 dim 1 : vector<16x128xf32>, i32 -> vector<16x128xf32>
    %cst_136 = arith.constant 0.000000e+00 : f32
    %542 = vector.broadcast %cst_136 : f32 to vector<16x128xf32>
    %543 = arith.select %27, %541, %542 : vector<16x128xi1>, vector<16x128xf32>
    %c15_i32_137 = arith.constant 15 : i32
    %544 = tpu.dynamic_rotate %340 by %c15_i32_137 dim 0 : vector<16x128xf32>, i32 -> vector<16x128xf32>
    %cst_138 = arith.constant 0.000000e+00 : f32
    %545 = vector.broadcast %cst_138 : f32 to vector<16x128xf32>
    %546 = arith.select %23, %544, %545 : vector<16x128xi1>, vector<16x128xf32>
    %c1_i32_139 = arith.constant 1 : i32
    %547 = tpu.dynamic_rotate %546 by %c1_i32_139 dim 1 : vector<16x128xf32>, i32 -> vector<16x128xf32>
    %cst_140 = arith.constant 0.000000e+00 : f32
    %548 = vector.broadcast %cst_140 : f32 to vector<16x128xf32>
    %549 = arith.select %25, %547, %548 : vector<16x128xi1>, vector<16x128xf32>
    %c127_i32_141 = arith.constant 127 : i32
    %550 = tpu.dynamic_rotate %546 by %c127_i32_141 dim 1 : vector<16x128xf32>, i32 -> vector<16x128xf32>
    %cst_142 = arith.constant 0.000000e+00 : f32
    %551 = vector.broadcast %cst_142 : f32 to vector<16x128xf32>
    %552 = arith.select %27, %550, %551 : vector<16x128xi1>, vector<16x128xf32>
    %553 = vector.broadcast %72 : f32 to vector<16x128xf32>
    %554 = arith.mulf %553, %534 : vector<16x128xf32>
    %555 = arith.addf %519, %554 : vector<16x128xf32>
    %556 = vector.broadcast %73 : f32 to vector<16x128xf32>
    %557 = arith.mulf %556, %534 : vector<16x128xf32>
    %558 = arith.addf %522, %557 : vector<16x128xf32>
    %559 = vector.broadcast %74 : f32 to vector<16x128xf32>
    %560 = arith.mulf %559, %534 : vector<16x128xf32>
    %561 = arith.addf %525, %560 : vector<16x128xf32>
    %562 = vector.broadcast %75 : f32 to vector<16x128xf32>
    %563 = arith.mulf %562, %534 : vector<16x128xf32>
    %564 = arith.addf %528, %563 : vector<16x128xf32>
    %565 = vector.broadcast %88 : f32 to vector<16x128xf32>
    %566 = arith.mulf %565, %531 : vector<16x128xf32>
    %567 = arith.addf %555, %566 : vector<16x128xf32>
    %568 = vector.broadcast %89 : f32 to vector<16x128xf32>
    %569 = arith.mulf %568, %531 : vector<16x128xf32>
    %570 = arith.addf %558, %569 : vector<16x128xf32>
    %571 = vector.broadcast %90 : f32 to vector<16x128xf32>
    %572 = arith.mulf %571, %531 : vector<16x128xf32>
    %573 = arith.addf %561, %572 : vector<16x128xf32>
    %574 = vector.broadcast %91 : f32 to vector<16x128xf32>
    %575 = arith.mulf %574, %531 : vector<16x128xf32>
    %576 = arith.addf %564, %575 : vector<16x128xf32>
    %577 = vector.broadcast %104 : f32 to vector<16x128xf32>
    %578 = arith.mulf %577, %537 : vector<16x128xf32>
    %579 = arith.addf %567, %578 : vector<16x128xf32>
    %580 = vector.broadcast %105 : f32 to vector<16x128xf32>
    %581 = arith.mulf %580, %537 : vector<16x128xf32>
    %582 = arith.addf %570, %581 : vector<16x128xf32>
    %583 = vector.broadcast %106 : f32 to vector<16x128xf32>
    %584 = arith.mulf %583, %537 : vector<16x128xf32>
    %585 = arith.addf %573, %584 : vector<16x128xf32>
    %586 = vector.broadcast %107 : f32 to vector<16x128xf32>
    %587 = arith.mulf %586, %537 : vector<16x128xf32>
    %588 = arith.addf %576, %587 : vector<16x128xf32>
    %589 = vector.broadcast %120 : f32 to vector<16x128xf32>
    %590 = arith.mulf %589, %540 : vector<16x128xf32>
    %591 = arith.addf %579, %590 : vector<16x128xf32>
    %592 = vector.broadcast %121 : f32 to vector<16x128xf32>
    %593 = arith.mulf %592, %540 : vector<16x128xf32>
    %594 = arith.addf %582, %593 : vector<16x128xf32>
    %595 = vector.broadcast %122 : f32 to vector<16x128xf32>
    %596 = arith.mulf %595, %540 : vector<16x128xf32>
    %597 = arith.addf %585, %596 : vector<16x128xf32>
    %598 = vector.broadcast %123 : f32 to vector<16x128xf32>
    %599 = arith.mulf %598, %540 : vector<16x128xf32>
    %600 = arith.addf %588, %599 : vector<16x128xf32>
    %601 = vector.broadcast %136 : f32 to vector<16x128xf32>
    %602 = arith.mulf %601, %340 : vector<16x128xf32>
    %603 = arith.addf %591, %602 : vector<16x128xf32>
    %604 = vector.broadcast %137 : f32 to vector<16x128xf32>
    %605 = arith.mulf %604, %340 : vector<16x128xf32>
    %606 = arith.addf %594, %605 : vector<16x128xf32>
    %607 = vector.broadcast %138 : f32 to vector<16x128xf32>
    %608 = arith.mulf %607, %340 : vector<16x128xf32>
    %609 = arith.addf %597, %608 : vector<16x128xf32>
    %610 = vector.broadcast %139 : f32 to vector<16x128xf32>
    %611 = arith.mulf %610, %340 : vector<16x128xf32>
    %612 = arith.addf %600, %611 : vector<16x128xf32>
    %613 = vector.broadcast %152 : f32 to vector<16x128xf32>
    %614 = arith.mulf %613, %543 : vector<16x128xf32>
    %615 = arith.addf %603, %614 : vector<16x128xf32>
    %616 = vector.broadcast %153 : f32 to vector<16x128xf32>
    %617 = arith.mulf %616, %543 : vector<16x128xf32>
    %618 = arith.addf %606, %617 : vector<16x128xf32>
    %619 = vector.broadcast %154 : f32 to vector<16x128xf32>
    %620 = arith.mulf %619, %543 : vector<16x128xf32>
    %621 = arith.addf %609, %620 : vector<16x128xf32>
    %622 = vector.broadcast %155 : f32 to vector<16x128xf32>
    %623 = arith.mulf %622, %543 : vector<16x128xf32>
    %624 = arith.addf %612, %623 : vector<16x128xf32>
    %625 = vector.broadcast %168 : f32 to vector<16x128xf32>
    %626 = arith.mulf %625, %549 : vector<16x128xf32>
    %627 = arith.addf %615, %626 : vector<16x128xf32>
    %628 = vector.broadcast %169 : f32 to vector<16x128xf32>
    %629 = arith.mulf %628, %549 : vector<16x128xf32>
    %630 = arith.addf %618, %629 : vector<16x128xf32>
    %631 = vector.broadcast %170 : f32 to vector<16x128xf32>
    %632 = arith.mulf %631, %549 : vector<16x128xf32>
    %633 = arith.addf %621, %632 : vector<16x128xf32>
    %634 = vector.broadcast %171 : f32 to vector<16x128xf32>
    %635 = arith.mulf %634, %549 : vector<16x128xf32>
    %636 = arith.addf %624, %635 : vector<16x128xf32>
    %637 = vector.broadcast %184 : f32 to vector<16x128xf32>
    %638 = arith.mulf %637, %546 : vector<16x128xf32>
    %639 = arith.addf %627, %638 : vector<16x128xf32>
    %640 = vector.broadcast %185 : f32 to vector<16x128xf32>
    %641 = arith.mulf %640, %546 : vector<16x128xf32>
    %642 = arith.addf %630, %641 : vector<16x128xf32>
    %643 = vector.broadcast %186 : f32 to vector<16x128xf32>
    %644 = arith.mulf %643, %546 : vector<16x128xf32>
    %645 = arith.addf %633, %644 : vector<16x128xf32>
    %646 = vector.broadcast %187 : f32 to vector<16x128xf32>
    %647 = arith.mulf %646, %546 : vector<16x128xf32>
    %648 = arith.addf %636, %647 : vector<16x128xf32>
    %649 = vector.broadcast %200 : f32 to vector<16x128xf32>
    %650 = arith.mulf %649, %552 : vector<16x128xf32>
    %651 = arith.addf %639, %650 : vector<16x128xf32>
    %652 = vector.broadcast %201 : f32 to vector<16x128xf32>
    %653 = arith.mulf %652, %552 : vector<16x128xf32>
    %654 = arith.addf %642, %653 : vector<16x128xf32>
    %655 = vector.broadcast %202 : f32 to vector<16x128xf32>
    %656 = arith.mulf %655, %552 : vector<16x128xf32>
    %657 = arith.addf %645, %656 : vector<16x128xf32>
    %658 = vector.broadcast %203 : f32 to vector<16x128xf32>
    %659 = arith.mulf %658, %552 : vector<16x128xf32>
    %660 = arith.addf %648, %659 : vector<16x128xf32>
    %c1_i32_143 = arith.constant 1 : i32
    %661 = tpu.dynamic_rotate %370 by %c1_i32_143 dim 0 : vector<16x128xf32>, i32 -> vector<16x128xf32>
    %cst_144 = arith.constant 0.000000e+00 : f32
    %662 = vector.broadcast %cst_144 : f32 to vector<16x128xf32>
    %663 = arith.select %21, %661, %662 : vector<16x128xi1>, vector<16x128xf32>
    %c1_i32_145 = arith.constant 1 : i32
    %664 = tpu.dynamic_rotate %663 by %c1_i32_145 dim 1 : vector<16x128xf32>, i32 -> vector<16x128xf32>
    %cst_146 = arith.constant 0.000000e+00 : f32
    %665 = vector.broadcast %cst_146 : f32 to vector<16x128xf32>
    %666 = arith.select %25, %664, %665 : vector<16x128xi1>, vector<16x128xf32>
    %c127_i32_147 = arith.constant 127 : i32
    %667 = tpu.dynamic_rotate %663 by %c127_i32_147 dim 1 : vector<16x128xf32>, i32 -> vector<16x128xf32>
    %cst_148 = arith.constant 0.000000e+00 : f32
    %668 = vector.broadcast %cst_148 : f32 to vector<16x128xf32>
    %669 = arith.select %27, %667, %668 : vector<16x128xi1>, vector<16x128xf32>
    %c1_i32_149 = arith.constant 1 : i32
    %670 = tpu.dynamic_rotate %370 by %c1_i32_149 dim 1 : vector<16x128xf32>, i32 -> vector<16x128xf32>
    %cst_150 = arith.constant 0.000000e+00 : f32
    %671 = vector.broadcast %cst_150 : f32 to vector<16x128xf32>
    %672 = arith.select %25, %670, %671 : vector<16x128xi1>, vector<16x128xf32>
    %c127_i32_151 = arith.constant 127 : i32
    %673 = tpu.dynamic_rotate %370 by %c127_i32_151 dim 1 : vector<16x128xf32>, i32 -> vector<16x128xf32>
    %cst_152 = arith.constant 0.000000e+00 : f32
    %674 = vector.broadcast %cst_152 : f32 to vector<16x128xf32>
    %675 = arith.select %27, %673, %674 : vector<16x128xi1>, vector<16x128xf32>
    %c15_i32_153 = arith.constant 15 : i32
    %676 = tpu.dynamic_rotate %370 by %c15_i32_153 dim 0 : vector<16x128xf32>, i32 -> vector<16x128xf32>
    %cst_154 = arith.constant 0.000000e+00 : f32
    %677 = vector.broadcast %cst_154 : f32 to vector<16x128xf32>
    %678 = arith.select %23, %676, %677 : vector<16x128xi1>, vector<16x128xf32>
    %c1_i32_155 = arith.constant 1 : i32
    %679 = tpu.dynamic_rotate %678 by %c1_i32_155 dim 1 : vector<16x128xf32>, i32 -> vector<16x128xf32>
    %cst_156 = arith.constant 0.000000e+00 : f32
    %680 = vector.broadcast %cst_156 : f32 to vector<16x128xf32>
    %681 = arith.select %25, %679, %680 : vector<16x128xi1>, vector<16x128xf32>
    %c127_i32_157 = arith.constant 127 : i32
    %682 = tpu.dynamic_rotate %678 by %c127_i32_157 dim 1 : vector<16x128xf32>, i32 -> vector<16x128xf32>
    %cst_158 = arith.constant 0.000000e+00 : f32
    %683 = vector.broadcast %cst_158 : f32 to vector<16x128xf32>
    %684 = arith.select %27, %682, %683 : vector<16x128xi1>, vector<16x128xf32>
    %685 = vector.broadcast %76 : f32 to vector<16x128xf32>
    %686 = arith.mulf %685, %666 : vector<16x128xf32>
    %687 = arith.addf %651, %686 : vector<16x128xf32>
    %688 = vector.broadcast %77 : f32 to vector<16x128xf32>
    %689 = arith.mulf %688, %666 : vector<16x128xf32>
    %690 = arith.addf %654, %689 : vector<16x128xf32>
    %691 = vector.broadcast %78 : f32 to vector<16x128xf32>
    %692 = arith.mulf %691, %666 : vector<16x128xf32>
    %693 = arith.addf %657, %692 : vector<16x128xf32>
    %694 = vector.broadcast %79 : f32 to vector<16x128xf32>
    %695 = arith.mulf %694, %666 : vector<16x128xf32>
    %696 = arith.addf %660, %695 : vector<16x128xf32>
    %697 = vector.broadcast %92 : f32 to vector<16x128xf32>
    %698 = arith.mulf %697, %663 : vector<16x128xf32>
    %699 = arith.addf %687, %698 : vector<16x128xf32>
    %700 = vector.broadcast %93 : f32 to vector<16x128xf32>
    %701 = arith.mulf %700, %663 : vector<16x128xf32>
    %702 = arith.addf %690, %701 : vector<16x128xf32>
    %703 = vector.broadcast %94 : f32 to vector<16x128xf32>
    %704 = arith.mulf %703, %663 : vector<16x128xf32>
    %705 = arith.addf %693, %704 : vector<16x128xf32>
    %706 = vector.broadcast %95 : f32 to vector<16x128xf32>
    %707 = arith.mulf %706, %663 : vector<16x128xf32>
    %708 = arith.addf %696, %707 : vector<16x128xf32>
    %709 = vector.broadcast %108 : f32 to vector<16x128xf32>
    %710 = arith.mulf %709, %669 : vector<16x128xf32>
    %711 = arith.addf %699, %710 : vector<16x128xf32>
    %712 = vector.broadcast %109 : f32 to vector<16x128xf32>
    %713 = arith.mulf %712, %669 : vector<16x128xf32>
    %714 = arith.addf %702, %713 : vector<16x128xf32>
    %715 = vector.broadcast %110 : f32 to vector<16x128xf32>
    %716 = arith.mulf %715, %669 : vector<16x128xf32>
    %717 = arith.addf %705, %716 : vector<16x128xf32>
    %718 = vector.broadcast %111 : f32 to vector<16x128xf32>
    %719 = arith.mulf %718, %669 : vector<16x128xf32>
    %720 = arith.addf %708, %719 : vector<16x128xf32>
    %721 = vector.broadcast %124 : f32 to vector<16x128xf32>
    %722 = arith.mulf %721, %672 : vector<16x128xf32>
    %723 = arith.addf %711, %722 : vector<16x128xf32>
    %724 = vector.broadcast %125 : f32 to vector<16x128xf32>
    %725 = arith.mulf %724, %672 : vector<16x128xf32>
    %726 = arith.addf %714, %725 : vector<16x128xf32>
    %727 = vector.broadcast %126 : f32 to vector<16x128xf32>
    %728 = arith.mulf %727, %672 : vector<16x128xf32>
    %729 = arith.addf %717, %728 : vector<16x128xf32>
    %730 = vector.broadcast %127 : f32 to vector<16x128xf32>
    %731 = arith.mulf %730, %672 : vector<16x128xf32>
    %732 = arith.addf %720, %731 : vector<16x128xf32>
    %733 = vector.broadcast %140 : f32 to vector<16x128xf32>
    %734 = arith.mulf %733, %370 : vector<16x128xf32>
    %735 = arith.addf %723, %734 : vector<16x128xf32>
    %736 = vector.broadcast %141 : f32 to vector<16x128xf32>
    %737 = arith.mulf %736, %370 : vector<16x128xf32>
    %738 = arith.addf %726, %737 : vector<16x128xf32>
    %739 = vector.broadcast %142 : f32 to vector<16x128xf32>
    %740 = arith.mulf %739, %370 : vector<16x128xf32>
    %741 = arith.addf %729, %740 : vector<16x128xf32>
    %742 = vector.broadcast %143 : f32 to vector<16x128xf32>
    %743 = arith.mulf %742, %370 : vector<16x128xf32>
    %744 = arith.addf %732, %743 : vector<16x128xf32>
    %745 = vector.broadcast %156 : f32 to vector<16x128xf32>
    %746 = arith.mulf %745, %675 : vector<16x128xf32>
    %747 = arith.addf %735, %746 : vector<16x128xf32>
    %748 = vector.broadcast %157 : f32 to vector<16x128xf32>
    %749 = arith.mulf %748, %675 : vector<16x128xf32>
    %750 = arith.addf %738, %749 : vector<16x128xf32>
    %751 = vector.broadcast %158 : f32 to vector<16x128xf32>
    %752 = arith.mulf %751, %675 : vector<16x128xf32>
    %753 = arith.addf %741, %752 : vector<16x128xf32>
    %754 = vector.broadcast %159 : f32 to vector<16x128xf32>
    %755 = arith.mulf %754, %675 : vector<16x128xf32>
    %756 = arith.addf %744, %755 : vector<16x128xf32>
    %757 = vector.broadcast %172 : f32 to vector<16x128xf32>
    %758 = arith.mulf %757, %681 : vector<16x128xf32>
    %759 = arith.addf %747, %758 : vector<16x128xf32>
    %760 = vector.broadcast %173 : f32 to vector<16x128xf32>
    %761 = arith.mulf %760, %681 : vector<16x128xf32>
    %762 = arith.addf %750, %761 : vector<16x128xf32>
    %763 = vector.broadcast %174 : f32 to vector<16x128xf32>
    %764 = arith.mulf %763, %681 : vector<16x128xf32>
    %765 = arith.addf %753, %764 : vector<16x128xf32>
    %766 = vector.broadcast %175 : f32 to vector<16x128xf32>
    %767 = arith.mulf %766, %681 : vector<16x128xf32>
    %768 = arith.addf %756, %767 : vector<16x128xf32>
    %769 = vector.broadcast %188 : f32 to vector<16x128xf32>
    %770 = arith.mulf %769, %678 : vector<16x128xf32>
    %771 = arith.addf %759, %770 : vector<16x128xf32>
    %772 = vector.broadcast %189 : f32 to vector<16x128xf32>
    %773 = arith.mulf %772, %678 : vector<16x128xf32>
    %774 = arith.addf %762, %773 : vector<16x128xf32>
    %775 = vector.broadcast %190 : f32 to vector<16x128xf32>
    %776 = arith.mulf %775, %678 : vector<16x128xf32>
    %777 = arith.addf %765, %776 : vector<16x128xf32>
    %778 = vector.broadcast %191 : f32 to vector<16x128xf32>
    %779 = arith.mulf %778, %678 : vector<16x128xf32>
    %780 = arith.addf %768, %779 : vector<16x128xf32>
    %781 = vector.broadcast %204 : f32 to vector<16x128xf32>
    %782 = arith.mulf %781, %684 : vector<16x128xf32>
    %783 = arith.addf %771, %782 : vector<16x128xf32>
    %784 = vector.broadcast %205 : f32 to vector<16x128xf32>
    %785 = arith.mulf %784, %684 : vector<16x128xf32>
    %786 = arith.addf %774, %785 : vector<16x128xf32>
    %787 = vector.broadcast %206 : f32 to vector<16x128xf32>
    %788 = arith.mulf %787, %684 : vector<16x128xf32>
    %789 = arith.addf %777, %788 : vector<16x128xf32>
    %790 = vector.broadcast %207 : f32 to vector<16x128xf32>
    %791 = arith.mulf %790, %684 : vector<16x128xf32>
    %792 = arith.addf %780, %791 : vector<16x128xf32>
    %c1_i32_159 = arith.constant 1 : i32
    %793 = tpu.dynamic_rotate %400 by %c1_i32_159 dim 0 : vector<16x128xf32>, i32 -> vector<16x128xf32>
    %cst_160 = arith.constant 0.000000e+00 : f32
    %794 = vector.broadcast %cst_160 : f32 to vector<16x128xf32>
    %795 = arith.select %21, %793, %794 : vector<16x128xi1>, vector<16x128xf32>
    %c1_i32_161 = arith.constant 1 : i32
    %796 = tpu.dynamic_rotate %795 by %c1_i32_161 dim 1 : vector<16x128xf32>, i32 -> vector<16x128xf32>
    %cst_162 = arith.constant 0.000000e+00 : f32
    %797 = vector.broadcast %cst_162 : f32 to vector<16x128xf32>
    %798 = arith.select %25, %796, %797 : vector<16x128xi1>, vector<16x128xf32>
    %c127_i32_163 = arith.constant 127 : i32
    %799 = tpu.dynamic_rotate %795 by %c127_i32_163 dim 1 : vector<16x128xf32>, i32 -> vector<16x128xf32>
    %cst_164 = arith.constant 0.000000e+00 : f32
    %800 = vector.broadcast %cst_164 : f32 to vector<16x128xf32>
    %801 = arith.select %27, %799, %800 : vector<16x128xi1>, vector<16x128xf32>
    %c1_i32_165 = arith.constant 1 : i32
    %802 = tpu.dynamic_rotate %400 by %c1_i32_165 dim 1 : vector<16x128xf32>, i32 -> vector<16x128xf32>
    %cst_166 = arith.constant 0.000000e+00 : f32
    %803 = vector.broadcast %cst_166 : f32 to vector<16x128xf32>
    %804 = arith.select %25, %802, %803 : vector<16x128xi1>, vector<16x128xf32>
    %c127_i32_167 = arith.constant 127 : i32
    %805 = tpu.dynamic_rotate %400 by %c127_i32_167 dim 1 : vector<16x128xf32>, i32 -> vector<16x128xf32>
    %cst_168 = arith.constant 0.000000e+00 : f32
    %806 = vector.broadcast %cst_168 : f32 to vector<16x128xf32>
    %807 = arith.select %27, %805, %806 : vector<16x128xi1>, vector<16x128xf32>
    %c15_i32_169 = arith.constant 15 : i32
    %808 = tpu.dynamic_rotate %400 by %c15_i32_169 dim 0 : vector<16x128xf32>, i32 -> vector<16x128xf32>
    %cst_170 = arith.constant 0.000000e+00 : f32
    %809 = vector.broadcast %cst_170 : f32 to vector<16x128xf32>
    %810 = arith.select %23, %808, %809 : vector<16x128xi1>, vector<16x128xf32>
    %c1_i32_171 = arith.constant 1 : i32
    %811 = tpu.dynamic_rotate %810 by %c1_i32_171 dim 1 : vector<16x128xf32>, i32 -> vector<16x128xf32>
    %cst_172 = arith.constant 0.000000e+00 : f32
    %812 = vector.broadcast %cst_172 : f32 to vector<16x128xf32>
    %813 = arith.select %25, %811, %812 : vector<16x128xi1>, vector<16x128xf32>
    %c127_i32_173 = arith.constant 127 : i32
    %814 = tpu.dynamic_rotate %810 by %c127_i32_173 dim 1 : vector<16x128xf32>, i32 -> vector<16x128xf32>
    %cst_174 = arith.constant 0.000000e+00 : f32
    %815 = vector.broadcast %cst_174 : f32 to vector<16x128xf32>
    %816 = arith.select %27, %814, %815 : vector<16x128xi1>, vector<16x128xf32>
    %817 = vector.broadcast %80 : f32 to vector<16x128xf32>
    %818 = arith.mulf %817, %798 : vector<16x128xf32>
    %819 = arith.addf %783, %818 : vector<16x128xf32>
    %820 = vector.broadcast %81 : f32 to vector<16x128xf32>
    %821 = arith.mulf %820, %798 : vector<16x128xf32>
    %822 = arith.addf %786, %821 : vector<16x128xf32>
    %823 = vector.broadcast %82 : f32 to vector<16x128xf32>
    %824 = arith.mulf %823, %798 : vector<16x128xf32>
    %825 = arith.addf %789, %824 : vector<16x128xf32>
    %826 = vector.broadcast %83 : f32 to vector<16x128xf32>
    %827 = arith.mulf %826, %798 : vector<16x128xf32>
    %828 = arith.addf %792, %827 : vector<16x128xf32>
    %829 = vector.broadcast %96 : f32 to vector<16x128xf32>
    %830 = arith.mulf %829, %795 : vector<16x128xf32>
    %831 = arith.addf %819, %830 : vector<16x128xf32>
    %832 = vector.broadcast %97 : f32 to vector<16x128xf32>
    %833 = arith.mulf %832, %795 : vector<16x128xf32>
    %834 = arith.addf %822, %833 : vector<16x128xf32>
    %835 = vector.broadcast %98 : f32 to vector<16x128xf32>
    %836 = arith.mulf %835, %795 : vector<16x128xf32>
    %837 = arith.addf %825, %836 : vector<16x128xf32>
    %838 = vector.broadcast %99 : f32 to vector<16x128xf32>
    %839 = arith.mulf %838, %795 : vector<16x128xf32>
    %840 = arith.addf %828, %839 : vector<16x128xf32>
    %841 = vector.broadcast %112 : f32 to vector<16x128xf32>
    %842 = arith.mulf %841, %801 : vector<16x128xf32>
    %843 = arith.addf %831, %842 : vector<16x128xf32>
    %844 = vector.broadcast %113 : f32 to vector<16x128xf32>
    %845 = arith.mulf %844, %801 : vector<16x128xf32>
    %846 = arith.addf %834, %845 : vector<16x128xf32>
    %847 = vector.broadcast %114 : f32 to vector<16x128xf32>
    %848 = arith.mulf %847, %801 : vector<16x128xf32>
    %849 = arith.addf %837, %848 : vector<16x128xf32>
    %850 = vector.broadcast %115 : f32 to vector<16x128xf32>
    %851 = arith.mulf %850, %801 : vector<16x128xf32>
    %852 = arith.addf %840, %851 : vector<16x128xf32>
    %853 = vector.broadcast %128 : f32 to vector<16x128xf32>
    %854 = arith.mulf %853, %804 : vector<16x128xf32>
    %855 = arith.addf %843, %854 : vector<16x128xf32>
    %856 = vector.broadcast %129 : f32 to vector<16x128xf32>
    %857 = arith.mulf %856, %804 : vector<16x128xf32>
    %858 = arith.addf %846, %857 : vector<16x128xf32>
    %859 = vector.broadcast %130 : f32 to vector<16x128xf32>
    %860 = arith.mulf %859, %804 : vector<16x128xf32>
    %861 = arith.addf %849, %860 : vector<16x128xf32>
    %862 = vector.broadcast %131 : f32 to vector<16x128xf32>
    %863 = arith.mulf %862, %804 : vector<16x128xf32>
    %864 = arith.addf %852, %863 : vector<16x128xf32>
    %865 = vector.broadcast %144 : f32 to vector<16x128xf32>
    %866 = arith.mulf %865, %400 : vector<16x128xf32>
    %867 = arith.addf %855, %866 : vector<16x128xf32>
    %868 = vector.broadcast %145 : f32 to vector<16x128xf32>
    %869 = arith.mulf %868, %400 : vector<16x128xf32>
    %870 = arith.addf %858, %869 : vector<16x128xf32>
    %871 = vector.broadcast %146 : f32 to vector<16x128xf32>
    %872 = arith.mulf %871, %400 : vector<16x128xf32>
    %873 = arith.addf %861, %872 : vector<16x128xf32>
    %874 = vector.broadcast %147 : f32 to vector<16x128xf32>
    %875 = arith.mulf %874, %400 : vector<16x128xf32>
    %876 = arith.addf %864, %875 : vector<16x128xf32>
    %877 = vector.broadcast %160 : f32 to vector<16x128xf32>
    %878 = arith.mulf %877, %807 : vector<16x128xf32>
    %879 = arith.addf %867, %878 : vector<16x128xf32>
    %880 = vector.broadcast %161 : f32 to vector<16x128xf32>
    %881 = arith.mulf %880, %807 : vector<16x128xf32>
    %882 = arith.addf %870, %881 : vector<16x128xf32>
    %883 = vector.broadcast %162 : f32 to vector<16x128xf32>
    %884 = arith.mulf %883, %807 : vector<16x128xf32>
    %885 = arith.addf %873, %884 : vector<16x128xf32>
    %886 = vector.broadcast %163 : f32 to vector<16x128xf32>
    %887 = arith.mulf %886, %807 : vector<16x128xf32>
    %888 = arith.addf %876, %887 : vector<16x128xf32>
    %889 = vector.broadcast %176 : f32 to vector<16x128xf32>
    %890 = arith.mulf %889, %813 : vector<16x128xf32>
    %891 = arith.addf %879, %890 : vector<16x128xf32>
    %892 = vector.broadcast %177 : f32 to vector<16x128xf32>
    %893 = arith.mulf %892, %813 : vector<16x128xf32>
    %894 = arith.addf %882, %893 : vector<16x128xf32>
    %895 = vector.broadcast %178 : f32 to vector<16x128xf32>
    %896 = arith.mulf %895, %813 : vector<16x128xf32>
    %897 = arith.addf %885, %896 : vector<16x128xf32>
    %898 = vector.broadcast %179 : f32 to vector<16x128xf32>
    %899 = arith.mulf %898, %813 : vector<16x128xf32>
    %900 = arith.addf %888, %899 : vector<16x128xf32>
    %901 = vector.broadcast %192 : f32 to vector<16x128xf32>
    %902 = arith.mulf %901, %810 : vector<16x128xf32>
    %903 = arith.addf %891, %902 : vector<16x128xf32>
    %904 = vector.broadcast %193 : f32 to vector<16x128xf32>
    %905 = arith.mulf %904, %810 : vector<16x128xf32>
    %906 = arith.addf %894, %905 : vector<16x128xf32>
    %907 = vector.broadcast %194 : f32 to vector<16x128xf32>
    %908 = arith.mulf %907, %810 : vector<16x128xf32>
    %909 = arith.addf %897, %908 : vector<16x128xf32>
    %910 = vector.broadcast %195 : f32 to vector<16x128xf32>
    %911 = arith.mulf %910, %810 : vector<16x128xf32>
    %912 = arith.addf %900, %911 : vector<16x128xf32>
    %913 = vector.broadcast %208 : f32 to vector<16x128xf32>
    %914 = arith.mulf %913, %816 : vector<16x128xf32>
    %915 = arith.addf %903, %914 : vector<16x128xf32>
    %916 = vector.broadcast %209 : f32 to vector<16x128xf32>
    %917 = arith.mulf %916, %816 : vector<16x128xf32>
    %918 = arith.addf %906, %917 : vector<16x128xf32>
    %919 = vector.broadcast %210 : f32 to vector<16x128xf32>
    %920 = arith.mulf %919, %816 : vector<16x128xf32>
    %921 = arith.addf %909, %920 : vector<16x128xf32>
    %922 = vector.broadcast %211 : f32 to vector<16x128xf32>
    %923 = arith.mulf %922, %816 : vector<16x128xf32>
    %924 = arith.addf %912, %923 : vector<16x128xf32>
    %925 = vector.broadcast %212 : f32 to vector<16x128xf32>
    %926 = arith.mulf %915, %925 : vector<16x128xf32>
    %927 = vector.broadcast %216 : f32 to vector<16x128xf32>
    %928 = arith.addf %926, %927 : vector<16x128xf32>
    %cst_175 = arith.constant 0.000000e+00 : f32
    %929 = vector.broadcast %cst_175 : f32 to vector<16x128xf32>
    %930 = arith.maximumf %928, %929 : vector<16x128xf32>
    %931 = arith.addf %310, %930 : vector<16x128xf32>
    %932 = vector.broadcast %213 : f32 to vector<16x128xf32>
    %933 = arith.mulf %918, %932 : vector<16x128xf32>
    %934 = vector.broadcast %217 : f32 to vector<16x128xf32>
    %935 = arith.addf %933, %934 : vector<16x128xf32>
    %cst_176 = arith.constant 0.000000e+00 : f32
    %936 = vector.broadcast %cst_176 : f32 to vector<16x128xf32>
    %937 = arith.maximumf %935, %936 : vector<16x128xf32>
    %938 = arith.addf %340, %937 : vector<16x128xf32>
    %939 = vector.broadcast %214 : f32 to vector<16x128xf32>
    %940 = arith.mulf %921, %939 : vector<16x128xf32>
    %941 = vector.broadcast %218 : f32 to vector<16x128xf32>
    %942 = arith.addf %940, %941 : vector<16x128xf32>
    %cst_177 = arith.constant 0.000000e+00 : f32
    %943 = vector.broadcast %cst_177 : f32 to vector<16x128xf32>
    %944 = arith.maximumf %942, %943 : vector<16x128xf32>
    %945 = arith.addf %370, %944 : vector<16x128xf32>
    %946 = vector.broadcast %215 : f32 to vector<16x128xf32>
    %947 = arith.mulf %924, %946 : vector<16x128xf32>
    %948 = vector.broadcast %219 : f32 to vector<16x128xf32>
    %949 = arith.addf %947, %948 : vector<16x128xf32>
    %cst_178 = arith.constant 0.000000e+00 : f32
    %950 = vector.broadcast %cst_178 : f32 to vector<16x128xf32>
    %951 = arith.maximumf %949, %950 : vector<16x128xf32>
    %952 = arith.addf %400, %951 : vector<16x128xf32>
    %c1_i32_179 = arith.constant 1 : i32
    %953 = tpu.dynamic_rotate %931 by %c1_i32_179 dim 0 : vector<16x128xf32>, i32 -> vector<16x128xf32>
    %cst_180 = arith.constant 0.000000e+00 : f32
    %954 = vector.broadcast %cst_180 : f32 to vector<16x128xf32>
    %955 = arith.select %21, %953, %954 : vector<16x128xi1>, vector<16x128xf32>
    %c1_i32_181 = arith.constant 1 : i32
    %956 = tpu.dynamic_rotate %955 by %c1_i32_181 dim 1 : vector<16x128xf32>, i32 -> vector<16x128xf32>
    %cst_182 = arith.constant 0.000000e+00 : f32
    %957 = vector.broadcast %cst_182 : f32 to vector<16x128xf32>
    %958 = arith.select %25, %956, %957 : vector<16x128xi1>, vector<16x128xf32>
    %c127_i32_183 = arith.constant 127 : i32
    %959 = tpu.dynamic_rotate %955 by %c127_i32_183 dim 1 : vector<16x128xf32>, i32 -> vector<16x128xf32>
    %cst_184 = arith.constant 0.000000e+00 : f32
    %960 = vector.broadcast %cst_184 : f32 to vector<16x128xf32>
    %961 = arith.select %27, %959, %960 : vector<16x128xi1>, vector<16x128xf32>
    %c1_i32_185 = arith.constant 1 : i32
    %962 = tpu.dynamic_rotate %931 by %c1_i32_185 dim 1 : vector<16x128xf32>, i32 -> vector<16x128xf32>
    %cst_186 = arith.constant 0.000000e+00 : f32
    %963 = vector.broadcast %cst_186 : f32 to vector<16x128xf32>
    %964 = arith.select %25, %962, %963 : vector<16x128xi1>, vector<16x128xf32>
    %c127_i32_187 = arith.constant 127 : i32
    %965 = tpu.dynamic_rotate %931 by %c127_i32_187 dim 1 : vector<16x128xf32>, i32 -> vector<16x128xf32>
    %cst_188 = arith.constant 0.000000e+00 : f32
    %966 = vector.broadcast %cst_188 : f32 to vector<16x128xf32>
    %967 = arith.select %27, %965, %966 : vector<16x128xi1>, vector<16x128xf32>
    %c15_i32_189 = arith.constant 15 : i32
    %968 = tpu.dynamic_rotate %931 by %c15_i32_189 dim 0 : vector<16x128xf32>, i32 -> vector<16x128xf32>
    %cst_190 = arith.constant 0.000000e+00 : f32
    %969 = vector.broadcast %cst_190 : f32 to vector<16x128xf32>
    %970 = arith.select %23, %968, %969 : vector<16x128xi1>, vector<16x128xf32>
    %c1_i32_191 = arith.constant 1 : i32
    %971 = tpu.dynamic_rotate %970 by %c1_i32_191 dim 1 : vector<16x128xf32>, i32 -> vector<16x128xf32>
    %cst_192 = arith.constant 0.000000e+00 : f32
    %972 = vector.broadcast %cst_192 : f32 to vector<16x128xf32>
    %973 = arith.select %25, %971, %972 : vector<16x128xi1>, vector<16x128xf32>
    %c127_i32_193 = arith.constant 127 : i32
    %974 = tpu.dynamic_rotate %970 by %c127_i32_193 dim 1 : vector<16x128xf32>, i32 -> vector<16x128xf32>
    %cst_194 = arith.constant 0.000000e+00 : f32
    %975 = vector.broadcast %cst_194 : f32 to vector<16x128xf32>
    %976 = arith.select %27, %974, %975 : vector<16x128xi1>, vector<16x128xf32>
    %977 = vector.broadcast %68 : f32 to vector<16x128xf32>
    %978 = arith.mulf %977, %958 : vector<16x128xf32>
    %979 = vector.broadcast %69 : f32 to vector<16x128xf32>
    %980 = arith.mulf %979, %958 : vector<16x128xf32>
    %981 = vector.broadcast %70 : f32 to vector<16x128xf32>
    %982 = arith.mulf %981, %958 : vector<16x128xf32>
    %983 = vector.broadcast %71 : f32 to vector<16x128xf32>
    %984 = arith.mulf %983, %958 : vector<16x128xf32>
    %985 = vector.broadcast %84 : f32 to vector<16x128xf32>
    %986 = arith.mulf %985, %955 : vector<16x128xf32>
    %987 = arith.addf %978, %986 : vector<16x128xf32>
    %988 = vector.broadcast %85 : f32 to vector<16x128xf32>
    %989 = arith.mulf %988, %955 : vector<16x128xf32>
    %990 = arith.addf %980, %989 : vector<16x128xf32>
    %991 = vector.broadcast %86 : f32 to vector<16x128xf32>
    %992 = arith.mulf %991, %955 : vector<16x128xf32>
    %993 = arith.addf %982, %992 : vector<16x128xf32>
    %994 = vector.broadcast %87 : f32 to vector<16x128xf32>
    %995 = arith.mulf %994, %955 : vector<16x128xf32>
    %996 = arith.addf %984, %995 : vector<16x128xf32>
    %997 = vector.broadcast %100 : f32 to vector<16x128xf32>
    %998 = arith.mulf %997, %961 : vector<16x128xf32>
    %999 = arith.addf %987, %998 : vector<16x128xf32>
    %1000 = vector.broadcast %101 : f32 to vector<16x128xf32>
    %1001 = arith.mulf %1000, %961 : vector<16x128xf32>
    %1002 = arith.addf %990, %1001 : vector<16x128xf32>
    %1003 = vector.broadcast %102 : f32 to vector<16x128xf32>
    %1004 = arith.mulf %1003, %961 : vector<16x128xf32>
    %1005 = arith.addf %993, %1004 : vector<16x128xf32>
    %1006 = vector.broadcast %103 : f32 to vector<16x128xf32>
    %1007 = arith.mulf %1006, %961 : vector<16x128xf32>
    %1008 = arith.addf %996, %1007 : vector<16x128xf32>
    %1009 = vector.broadcast %116 : f32 to vector<16x128xf32>
    %1010 = arith.mulf %1009, %964 : vector<16x128xf32>
    %1011 = arith.addf %999, %1010 : vector<16x128xf32>
    %1012 = vector.broadcast %117 : f32 to vector<16x128xf32>
    %1013 = arith.mulf %1012, %964 : vector<16x128xf32>
    %1014 = arith.addf %1002, %1013 : vector<16x128xf32>
    %1015 = vector.broadcast %118 : f32 to vector<16x128xf32>
    %1016 = arith.mulf %1015, %964 : vector<16x128xf32>
    %1017 = arith.addf %1005, %1016 : vector<16x128xf32>
    %1018 = vector.broadcast %119 : f32 to vector<16x128xf32>
    %1019 = arith.mulf %1018, %964 : vector<16x128xf32>
    %1020 = arith.addf %1008, %1019 : vector<16x128xf32>
    %1021 = vector.broadcast %132 : f32 to vector<16x128xf32>
    %1022 = arith.mulf %1021, %931 : vector<16x128xf32>
    %1023 = arith.addf %1011, %1022 : vector<16x128xf32>
    %1024 = vector.broadcast %133 : f32 to vector<16x128xf32>
    %1025 = arith.mulf %1024, %931 : vector<16x128xf32>
    %1026 = arith.addf %1014, %1025 : vector<16x128xf32>
    %1027 = vector.broadcast %134 : f32 to vector<16x128xf32>
    %1028 = arith.mulf %1027, %931 : vector<16x128xf32>
    %1029 = arith.addf %1017, %1028 : vector<16x128xf32>
    %1030 = vector.broadcast %135 : f32 to vector<16x128xf32>
    %1031 = arith.mulf %1030, %931 : vector<16x128xf32>
    %1032 = arith.addf %1020, %1031 : vector<16x128xf32>
    %1033 = vector.broadcast %148 : f32 to vector<16x128xf32>
    %1034 = arith.mulf %1033, %967 : vector<16x128xf32>
    %1035 = arith.addf %1023, %1034 : vector<16x128xf32>
    %1036 = vector.broadcast %149 : f32 to vector<16x128xf32>
    %1037 = arith.mulf %1036, %967 : vector<16x128xf32>
    %1038 = arith.addf %1026, %1037 : vector<16x128xf32>
    %1039 = vector.broadcast %150 : f32 to vector<16x128xf32>
    %1040 = arith.mulf %1039, %967 : vector<16x128xf32>
    %1041 = arith.addf %1029, %1040 : vector<16x128xf32>
    %1042 = vector.broadcast %151 : f32 to vector<16x128xf32>
    %1043 = arith.mulf %1042, %967 : vector<16x128xf32>
    %1044 = arith.addf %1032, %1043 : vector<16x128xf32>
    %1045 = vector.broadcast %164 : f32 to vector<16x128xf32>
    %1046 = arith.mulf %1045, %973 : vector<16x128xf32>
    %1047 = arith.addf %1035, %1046 : vector<16x128xf32>
    %1048 = vector.broadcast %165 : f32 to vector<16x128xf32>
    %1049 = arith.mulf %1048, %973 : vector<16x128xf32>
    %1050 = arith.addf %1038, %1049 : vector<16x128xf32>
    %1051 = vector.broadcast %166 : f32 to vector<16x128xf32>
    %1052 = arith.mulf %1051, %973 : vector<16x128xf32>
    %1053 = arith.addf %1041, %1052 : vector<16x128xf32>
    %1054 = vector.broadcast %167 : f32 to vector<16x128xf32>
    %1055 = arith.mulf %1054, %973 : vector<16x128xf32>
    %1056 = arith.addf %1044, %1055 : vector<16x128xf32>
    %1057 = vector.broadcast %180 : f32 to vector<16x128xf32>
    %1058 = arith.mulf %1057, %970 : vector<16x128xf32>
    %1059 = arith.addf %1047, %1058 : vector<16x128xf32>
    %1060 = vector.broadcast %181 : f32 to vector<16x128xf32>
    %1061 = arith.mulf %1060, %970 : vector<16x128xf32>
    %1062 = arith.addf %1050, %1061 : vector<16x128xf32>
    %1063 = vector.broadcast %182 : f32 to vector<16x128xf32>
    %1064 = arith.mulf %1063, %970 : vector<16x128xf32>
    %1065 = arith.addf %1053, %1064 : vector<16x128xf32>
    %1066 = vector.broadcast %183 : f32 to vector<16x128xf32>
    %1067 = arith.mulf %1066, %970 : vector<16x128xf32>
    %1068 = arith.addf %1056, %1067 : vector<16x128xf32>
    %1069 = vector.broadcast %196 : f32 to vector<16x128xf32>
    %1070 = arith.mulf %1069, %976 : vector<16x128xf32>
    %1071 = arith.addf %1059, %1070 : vector<16x128xf32>
    %1072 = vector.broadcast %197 : f32 to vector<16x128xf32>
    %1073 = arith.mulf %1072, %976 : vector<16x128xf32>
    %1074 = arith.addf %1062, %1073 : vector<16x128xf32>
    %1075 = vector.broadcast %198 : f32 to vector<16x128xf32>
    %1076 = arith.mulf %1075, %976 : vector<16x128xf32>
    %1077 = arith.addf %1065, %1076 : vector<16x128xf32>
    %1078 = vector.broadcast %199 : f32 to vector<16x128xf32>
    %1079 = arith.mulf %1078, %976 : vector<16x128xf32>
    %1080 = arith.addf %1068, %1079 : vector<16x128xf32>
    %c1_i32_195 = arith.constant 1 : i32
    %1081 = tpu.dynamic_rotate %938 by %c1_i32_195 dim 0 : vector<16x128xf32>, i32 -> vector<16x128xf32>
    %cst_196 = arith.constant 0.000000e+00 : f32
    %1082 = vector.broadcast %cst_196 : f32 to vector<16x128xf32>
    %1083 = arith.select %21, %1081, %1082 : vector<16x128xi1>, vector<16x128xf32>
    %c1_i32_197 = arith.constant 1 : i32
    %1084 = tpu.dynamic_rotate %1083 by %c1_i32_197 dim 1 : vector<16x128xf32>, i32 -> vector<16x128xf32>
    %cst_198 = arith.constant 0.000000e+00 : f32
    %1085 = vector.broadcast %cst_198 : f32 to vector<16x128xf32>
    %1086 = arith.select %25, %1084, %1085 : vector<16x128xi1>, vector<16x128xf32>
    %c127_i32_199 = arith.constant 127 : i32
    %1087 = tpu.dynamic_rotate %1083 by %c127_i32_199 dim 1 : vector<16x128xf32>, i32 -> vector<16x128xf32>
    %cst_200 = arith.constant 0.000000e+00 : f32
    %1088 = vector.broadcast %cst_200 : f32 to vector<16x128xf32>
    %1089 = arith.select %27, %1087, %1088 : vector<16x128xi1>, vector<16x128xf32>
    %c1_i32_201 = arith.constant 1 : i32
    %1090 = tpu.dynamic_rotate %938 by %c1_i32_201 dim 1 : vector<16x128xf32>, i32 -> vector<16x128xf32>
    %cst_202 = arith.constant 0.000000e+00 : f32
    %1091 = vector.broadcast %cst_202 : f32 to vector<16x128xf32>
    %1092 = arith.select %25, %1090, %1091 : vector<16x128xi1>, vector<16x128xf32>
    %c127_i32_203 = arith.constant 127 : i32
    %1093 = tpu.dynamic_rotate %938 by %c127_i32_203 dim 1 : vector<16x128xf32>, i32 -> vector<16x128xf32>
    %cst_204 = arith.constant 0.000000e+00 : f32
    %1094 = vector.broadcast %cst_204 : f32 to vector<16x128xf32>
    %1095 = arith.select %27, %1093, %1094 : vector<16x128xi1>, vector<16x128xf32>
    %c15_i32_205 = arith.constant 15 : i32
    %1096 = tpu.dynamic_rotate %938 by %c15_i32_205 dim 0 : vector<16x128xf32>, i32 -> vector<16x128xf32>
    %cst_206 = arith.constant 0.000000e+00 : f32
    %1097 = vector.broadcast %cst_206 : f32 to vector<16x128xf32>
    %1098 = arith.select %23, %1096, %1097 : vector<16x128xi1>, vector<16x128xf32>
    %c1_i32_207 = arith.constant 1 : i32
    %1099 = tpu.dynamic_rotate %1098 by %c1_i32_207 dim 1 : vector<16x128xf32>, i32 -> vector<16x128xf32>
    %cst_208 = arith.constant 0.000000e+00 : f32
    %1100 = vector.broadcast %cst_208 : f32 to vector<16x128xf32>
    %1101 = arith.select %25, %1099, %1100 : vector<16x128xi1>, vector<16x128xf32>
    %c127_i32_209 = arith.constant 127 : i32
    %1102 = tpu.dynamic_rotate %1098 by %c127_i32_209 dim 1 : vector<16x128xf32>, i32 -> vector<16x128xf32>
    %cst_210 = arith.constant 0.000000e+00 : f32
    %1103 = vector.broadcast %cst_210 : f32 to vector<16x128xf32>
    %1104 = arith.select %27, %1102, %1103 : vector<16x128xi1>, vector<16x128xf32>
    %1105 = vector.broadcast %72 : f32 to vector<16x128xf32>
    %1106 = arith.mulf %1105, %1086 : vector<16x128xf32>
    %1107 = arith.addf %1071, %1106 : vector<16x128xf32>
    %1108 = vector.broadcast %73 : f32 to vector<16x128xf32>
    %1109 = arith.mulf %1108, %1086 : vector<16x128xf32>
    %1110 = arith.addf %1074, %1109 : vector<16x128xf32>
    %1111 = vector.broadcast %74 : f32 to vector<16x128xf32>
    %1112 = arith.mulf %1111, %1086 : vector<16x128xf32>
    %1113 = arith.addf %1077, %1112 : vector<16x128xf32>
    %1114 = vector.broadcast %75 : f32 to vector<16x128xf32>
    %1115 = arith.mulf %1114, %1086 : vector<16x128xf32>
    %1116 = arith.addf %1080, %1115 : vector<16x128xf32>
    %1117 = vector.broadcast %88 : f32 to vector<16x128xf32>
    %1118 = arith.mulf %1117, %1083 : vector<16x128xf32>
    %1119 = arith.addf %1107, %1118 : vector<16x128xf32>
    %1120 = vector.broadcast %89 : f32 to vector<16x128xf32>
    %1121 = arith.mulf %1120, %1083 : vector<16x128xf32>
    %1122 = arith.addf %1110, %1121 : vector<16x128xf32>
    %1123 = vector.broadcast %90 : f32 to vector<16x128xf32>
    %1124 = arith.mulf %1123, %1083 : vector<16x128xf32>
    %1125 = arith.addf %1113, %1124 : vector<16x128xf32>
    %1126 = vector.broadcast %91 : f32 to vector<16x128xf32>
    %1127 = arith.mulf %1126, %1083 : vector<16x128xf32>
    %1128 = arith.addf %1116, %1127 : vector<16x128xf32>
    %1129 = vector.broadcast %104 : f32 to vector<16x128xf32>
    %1130 = arith.mulf %1129, %1089 : vector<16x128xf32>
    %1131 = arith.addf %1119, %1130 : vector<16x128xf32>
    %1132 = vector.broadcast %105 : f32 to vector<16x128xf32>
    %1133 = arith.mulf %1132, %1089 : vector<16x128xf32>
    %1134 = arith.addf %1122, %1133 : vector<16x128xf32>
    %1135 = vector.broadcast %106 : f32 to vector<16x128xf32>
    %1136 = arith.mulf %1135, %1089 : vector<16x128xf32>
    %1137 = arith.addf %1125, %1136 : vector<16x128xf32>
    %1138 = vector.broadcast %107 : f32 to vector<16x128xf32>
    %1139 = arith.mulf %1138, %1089 : vector<16x128xf32>
    %1140 = arith.addf %1128, %1139 : vector<16x128xf32>
    %1141 = vector.broadcast %120 : f32 to vector<16x128xf32>
    %1142 = arith.mulf %1141, %1092 : vector<16x128xf32>
    %1143 = arith.addf %1131, %1142 : vector<16x128xf32>
    %1144 = vector.broadcast %121 : f32 to vector<16x128xf32>
    %1145 = arith.mulf %1144, %1092 : vector<16x128xf32>
    %1146 = arith.addf %1134, %1145 : vector<16x128xf32>
    %1147 = vector.broadcast %122 : f32 to vector<16x128xf32>
    %1148 = arith.mulf %1147, %1092 : vector<16x128xf32>
    %1149 = arith.addf %1137, %1148 : vector<16x128xf32>
    %1150 = vector.broadcast %123 : f32 to vector<16x128xf32>
    %1151 = arith.mulf %1150, %1092 : vector<16x128xf32>
    %1152 = arith.addf %1140, %1151 : vector<16x128xf32>
    %1153 = vector.broadcast %136 : f32 to vector<16x128xf32>
    %1154 = arith.mulf %1153, %938 : vector<16x128xf32>
    %1155 = arith.addf %1143, %1154 : vector<16x128xf32>
    %1156 = vector.broadcast %137 : f32 to vector<16x128xf32>
    %1157 = arith.mulf %1156, %938 : vector<16x128xf32>
    %1158 = arith.addf %1146, %1157 : vector<16x128xf32>
    %1159 = vector.broadcast %138 : f32 to vector<16x128xf32>
    %1160 = arith.mulf %1159, %938 : vector<16x128xf32>
    %1161 = arith.addf %1149, %1160 : vector<16x128xf32>
    %1162 = vector.broadcast %139 : f32 to vector<16x128xf32>
    %1163 = arith.mulf %1162, %938 : vector<16x128xf32>
    %1164 = arith.addf %1152, %1163 : vector<16x128xf32>
    %1165 = vector.broadcast %152 : f32 to vector<16x128xf32>
    %1166 = arith.mulf %1165, %1095 : vector<16x128xf32>
    %1167 = arith.addf %1155, %1166 : vector<16x128xf32>
    %1168 = vector.broadcast %153 : f32 to vector<16x128xf32>
    %1169 = arith.mulf %1168, %1095 : vector<16x128xf32>
    %1170 = arith.addf %1158, %1169 : vector<16x128xf32>
    %1171 = vector.broadcast %154 : f32 to vector<16x128xf32>
    %1172 = arith.mulf %1171, %1095 : vector<16x128xf32>
    %1173 = arith.addf %1161, %1172 : vector<16x128xf32>
    %1174 = vector.broadcast %155 : f32 to vector<16x128xf32>
    %1175 = arith.mulf %1174, %1095 : vector<16x128xf32>
    %1176 = arith.addf %1164, %1175 : vector<16x128xf32>
    %1177 = vector.broadcast %168 : f32 to vector<16x128xf32>
    %1178 = arith.mulf %1177, %1101 : vector<16x128xf32>
    %1179 = arith.addf %1167, %1178 : vector<16x128xf32>
    %1180 = vector.broadcast %169 : f32 to vector<16x128xf32>
    %1181 = arith.mulf %1180, %1101 : vector<16x128xf32>
    %1182 = arith.addf %1170, %1181 : vector<16x128xf32>
    %1183 = vector.broadcast %170 : f32 to vector<16x128xf32>
    %1184 = arith.mulf %1183, %1101 : vector<16x128xf32>
    %1185 = arith.addf %1173, %1184 : vector<16x128xf32>
    %1186 = vector.broadcast %171 : f32 to vector<16x128xf32>
    %1187 = arith.mulf %1186, %1101 : vector<16x128xf32>
    %1188 = arith.addf %1176, %1187 : vector<16x128xf32>
    %1189 = vector.broadcast %184 : f32 to vector<16x128xf32>
    %1190 = arith.mulf %1189, %1098 : vector<16x128xf32>
    %1191 = arith.addf %1179, %1190 : vector<16x128xf32>
    %1192 = vector.broadcast %185 : f32 to vector<16x128xf32>
    %1193 = arith.mulf %1192, %1098 : vector<16x128xf32>
    %1194 = arith.addf %1182, %1193 : vector<16x128xf32>
    %1195 = vector.broadcast %186 : f32 to vector<16x128xf32>
    %1196 = arith.mulf %1195, %1098 : vector<16x128xf32>
    %1197 = arith.addf %1185, %1196 : vector<16x128xf32>
    %1198 = vector.broadcast %187 : f32 to vector<16x128xf32>
    %1199 = arith.mulf %1198, %1098 : vector<16x128xf32>
    %1200 = arith.addf %1188, %1199 : vector<16x128xf32>
    %1201 = vector.broadcast %200 : f32 to vector<16x128xf32>
    %1202 = arith.mulf %1201, %1104 : vector<16x128xf32>
    %1203 = arith.addf %1191, %1202 : vector<16x128xf32>
    %1204 = vector.broadcast %201 : f32 to vector<16x128xf32>
    %1205 = arith.mulf %1204, %1104 : vector<16x128xf32>
    %1206 = arith.addf %1194, %1205 : vector<16x128xf32>
    %1207 = vector.broadcast %202 : f32 to vector<16x128xf32>
    %1208 = arith.mulf %1207, %1104 : vector<16x128xf32>
    %1209 = arith.addf %1197, %1208 : vector<16x128xf32>
    %1210 = vector.broadcast %203 : f32 to vector<16x128xf32>
    %1211 = arith.mulf %1210, %1104 : vector<16x128xf32>
    %1212 = arith.addf %1200, %1211 : vector<16x128xf32>
    %c1_i32_211 = arith.constant 1 : i32
    %1213 = tpu.dynamic_rotate %945 by %c1_i32_211 dim 0 : vector<16x128xf32>, i32 -> vector<16x128xf32>
    %cst_212 = arith.constant 0.000000e+00 : f32
    %1214 = vector.broadcast %cst_212 : f32 to vector<16x128xf32>
    %1215 = arith.select %21, %1213, %1214 : vector<16x128xi1>, vector<16x128xf32>
    %c1_i32_213 = arith.constant 1 : i32
    %1216 = tpu.dynamic_rotate %1215 by %c1_i32_213 dim 1 : vector<16x128xf32>, i32 -> vector<16x128xf32>
    %cst_214 = arith.constant 0.000000e+00 : f32
    %1217 = vector.broadcast %cst_214 : f32 to vector<16x128xf32>
    %1218 = arith.select %25, %1216, %1217 : vector<16x128xi1>, vector<16x128xf32>
    %c127_i32_215 = arith.constant 127 : i32
    %1219 = tpu.dynamic_rotate %1215 by %c127_i32_215 dim 1 : vector<16x128xf32>, i32 -> vector<16x128xf32>
    %cst_216 = arith.constant 0.000000e+00 : f32
    %1220 = vector.broadcast %cst_216 : f32 to vector<16x128xf32>
    %1221 = arith.select %27, %1219, %1220 : vector<16x128xi1>, vector<16x128xf32>
    %c1_i32_217 = arith.constant 1 : i32
    %1222 = tpu.dynamic_rotate %945 by %c1_i32_217 dim 1 : vector<16x128xf32>, i32 -> vector<16x128xf32>
    %cst_218 = arith.constant 0.000000e+00 : f32
    %1223 = vector.broadcast %cst_218 : f32 to vector<16x128xf32>
    %1224 = arith.select %25, %1222, %1223 : vector<16x128xi1>, vector<16x128xf32>
    %c127_i32_219 = arith.constant 127 : i32
    %1225 = tpu.dynamic_rotate %945 by %c127_i32_219 dim 1 : vector<16x128xf32>, i32 -> vector<16x128xf32>
    %cst_220 = arith.constant 0.000000e+00 : f32
    %1226 = vector.broadcast %cst_220 : f32 to vector<16x128xf32>
    %1227 = arith.select %27, %1225, %1226 : vector<16x128xi1>, vector<16x128xf32>
    %c15_i32_221 = arith.constant 15 : i32
    %1228 = tpu.dynamic_rotate %945 by %c15_i32_221 dim 0 : vector<16x128xf32>, i32 -> vector<16x128xf32>
    %cst_222 = arith.constant 0.000000e+00 : f32
    %1229 = vector.broadcast %cst_222 : f32 to vector<16x128xf32>
    %1230 = arith.select %23, %1228, %1229 : vector<16x128xi1>, vector<16x128xf32>
    %c1_i32_223 = arith.constant 1 : i32
    %1231 = tpu.dynamic_rotate %1230 by %c1_i32_223 dim 1 : vector<16x128xf32>, i32 -> vector<16x128xf32>
    %cst_224 = arith.constant 0.000000e+00 : f32
    %1232 = vector.broadcast %cst_224 : f32 to vector<16x128xf32>
    %1233 = arith.select %25, %1231, %1232 : vector<16x128xi1>, vector<16x128xf32>
    %c127_i32_225 = arith.constant 127 : i32
    %1234 = tpu.dynamic_rotate %1230 by %c127_i32_225 dim 1 : vector<16x128xf32>, i32 -> vector<16x128xf32>
    %cst_226 = arith.constant 0.000000e+00 : f32
    %1235 = vector.broadcast %cst_226 : f32 to vector<16x128xf32>
    %1236 = arith.select %27, %1234, %1235 : vector<16x128xi1>, vector<16x128xf32>
    %1237 = vector.broadcast %76 : f32 to vector<16x128xf32>
    %1238 = arith.mulf %1237, %1218 : vector<16x128xf32>
    %1239 = arith.addf %1203, %1238 : vector<16x128xf32>
    %1240 = vector.broadcast %77 : f32 to vector<16x128xf32>
    %1241 = arith.mulf %1240, %1218 : vector<16x128xf32>
    %1242 = arith.addf %1206, %1241 : vector<16x128xf32>
    %1243 = vector.broadcast %78 : f32 to vector<16x128xf32>
    %1244 = arith.mulf %1243, %1218 : vector<16x128xf32>
    %1245 = arith.addf %1209, %1244 : vector<16x128xf32>
    %1246 = vector.broadcast %79 : f32 to vector<16x128xf32>
    %1247 = arith.mulf %1246, %1218 : vector<16x128xf32>
    %1248 = arith.addf %1212, %1247 : vector<16x128xf32>
    %1249 = vector.broadcast %92 : f32 to vector<16x128xf32>
    %1250 = arith.mulf %1249, %1215 : vector<16x128xf32>
    %1251 = arith.addf %1239, %1250 : vector<16x128xf32>
    %1252 = vector.broadcast %93 : f32 to vector<16x128xf32>
    %1253 = arith.mulf %1252, %1215 : vector<16x128xf32>
    %1254 = arith.addf %1242, %1253 : vector<16x128xf32>
    %1255 = vector.broadcast %94 : f32 to vector<16x128xf32>
    %1256 = arith.mulf %1255, %1215 : vector<16x128xf32>
    %1257 = arith.addf %1245, %1256 : vector<16x128xf32>
    %1258 = vector.broadcast %95 : f32 to vector<16x128xf32>
    %1259 = arith.mulf %1258, %1215 : vector<16x128xf32>
    %1260 = arith.addf %1248, %1259 : vector<16x128xf32>
    %1261 = vector.broadcast %108 : f32 to vector<16x128xf32>
    %1262 = arith.mulf %1261, %1221 : vector<16x128xf32>
    %1263 = arith.addf %1251, %1262 : vector<16x128xf32>
    %1264 = vector.broadcast %109 : f32 to vector<16x128xf32>
    %1265 = arith.mulf %1264, %1221 : vector<16x128xf32>
    %1266 = arith.addf %1254, %1265 : vector<16x128xf32>
    %1267 = vector.broadcast %110 : f32 to vector<16x128xf32>
    %1268 = arith.mulf %1267, %1221 : vector<16x128xf32>
    %1269 = arith.addf %1257, %1268 : vector<16x128xf32>
    %1270 = vector.broadcast %111 : f32 to vector<16x128xf32>
    %1271 = arith.mulf %1270, %1221 : vector<16x128xf32>
    %1272 = arith.addf %1260, %1271 : vector<16x128xf32>
    %1273 = vector.broadcast %124 : f32 to vector<16x128xf32>
    %1274 = arith.mulf %1273, %1224 : vector<16x128xf32>
    %1275 = arith.addf %1263, %1274 : vector<16x128xf32>
    %1276 = vector.broadcast %125 : f32 to vector<16x128xf32>
    %1277 = arith.mulf %1276, %1224 : vector<16x128xf32>
    %1278 = arith.addf %1266, %1277 : vector<16x128xf32>
    %1279 = vector.broadcast %126 : f32 to vector<16x128xf32>
    %1280 = arith.mulf %1279, %1224 : vector<16x128xf32>
    %1281 = arith.addf %1269, %1280 : vector<16x128xf32>
    %1282 = vector.broadcast %127 : f32 to vector<16x128xf32>
    %1283 = arith.mulf %1282, %1224 : vector<16x128xf32>
    %1284 = arith.addf %1272, %1283 : vector<16x128xf32>
    %1285 = vector.broadcast %140 : f32 to vector<16x128xf32>
    %1286 = arith.mulf %1285, %945 : vector<16x128xf32>
    %1287 = arith.addf %1275, %1286 : vector<16x128xf32>
    %1288 = vector.broadcast %141 : f32 to vector<16x128xf32>
    %1289 = arith.mulf %1288, %945 : vector<16x128xf32>
    %1290 = arith.addf %1278, %1289 : vector<16x128xf32>
    %1291 = vector.broadcast %142 : f32 to vector<16x128xf32>
    %1292 = arith.mulf %1291, %945 : vector<16x128xf32>
    %1293 = arith.addf %1281, %1292 : vector<16x128xf32>
    %1294 = vector.broadcast %143 : f32 to vector<16x128xf32>
    %1295 = arith.mulf %1294, %945 : vector<16x128xf32>
    %1296 = arith.addf %1284, %1295 : vector<16x128xf32>
    %1297 = vector.broadcast %156 : f32 to vector<16x128xf32>
    %1298 = arith.mulf %1297, %1227 : vector<16x128xf32>
    %1299 = arith.addf %1287, %1298 : vector<16x128xf32>
    %1300 = vector.broadcast %157 : f32 to vector<16x128xf32>
    %1301 = arith.mulf %1300, %1227 : vector<16x128xf32>
    %1302 = arith.addf %1290, %1301 : vector<16x128xf32>
    %1303 = vector.broadcast %158 : f32 to vector<16x128xf32>
    %1304 = arith.mulf %1303, %1227 : vector<16x128xf32>
    %1305 = arith.addf %1293, %1304 : vector<16x128xf32>
    %1306 = vector.broadcast %159 : f32 to vector<16x128xf32>
    %1307 = arith.mulf %1306, %1227 : vector<16x128xf32>
    %1308 = arith.addf %1296, %1307 : vector<16x128xf32>
    %1309 = vector.broadcast %172 : f32 to vector<16x128xf32>
    %1310 = arith.mulf %1309, %1233 : vector<16x128xf32>
    %1311 = arith.addf %1299, %1310 : vector<16x128xf32>
    %1312 = vector.broadcast %173 : f32 to vector<16x128xf32>
    %1313 = arith.mulf %1312, %1233 : vector<16x128xf32>
    %1314 = arith.addf %1302, %1313 : vector<16x128xf32>
    %1315 = vector.broadcast %174 : f32 to vector<16x128xf32>
    %1316 = arith.mulf %1315, %1233 : vector<16x128xf32>
    %1317 = arith.addf %1305, %1316 : vector<16x128xf32>
    %1318 = vector.broadcast %175 : f32 to vector<16x128xf32>
    %1319 = arith.mulf %1318, %1233 : vector<16x128xf32>
    %1320 = arith.addf %1308, %1319 : vector<16x128xf32>
    %1321 = vector.broadcast %188 : f32 to vector<16x128xf32>
    %1322 = arith.mulf %1321, %1230 : vector<16x128xf32>
    %1323 = arith.addf %1311, %1322 : vector<16x128xf32>
    %1324 = vector.broadcast %189 : f32 to vector<16x128xf32>
    %1325 = arith.mulf %1324, %1230 : vector<16x128xf32>
    %1326 = arith.addf %1314, %1325 : vector<16x128xf32>
    %1327 = vector.broadcast %190 : f32 to vector<16x128xf32>
    %1328 = arith.mulf %1327, %1230 : vector<16x128xf32>
    %1329 = arith.addf %1317, %1328 : vector<16x128xf32>
    %1330 = vector.broadcast %191 : f32 to vector<16x128xf32>
    %1331 = arith.mulf %1330, %1230 : vector<16x128xf32>
    %1332 = arith.addf %1320, %1331 : vector<16x128xf32>
    %1333 = vector.broadcast %204 : f32 to vector<16x128xf32>
    %1334 = arith.mulf %1333, %1236 : vector<16x128xf32>
    %1335 = arith.addf %1323, %1334 : vector<16x128xf32>
    %1336 = vector.broadcast %205 : f32 to vector<16x128xf32>
    %1337 = arith.mulf %1336, %1236 : vector<16x128xf32>
    %1338 = arith.addf %1326, %1337 : vector<16x128xf32>
    %1339 = vector.broadcast %206 : f32 to vector<16x128xf32>
    %1340 = arith.mulf %1339, %1236 : vector<16x128xf32>
    %1341 = arith.addf %1329, %1340 : vector<16x128xf32>
    %1342 = vector.broadcast %207 : f32 to vector<16x128xf32>
    %1343 = arith.mulf %1342, %1236 : vector<16x128xf32>
    %1344 = arith.addf %1332, %1343 : vector<16x128xf32>
    %c1_i32_227 = arith.constant 1 : i32
    %1345 = tpu.dynamic_rotate %952 by %c1_i32_227 dim 0 : vector<16x128xf32>, i32 -> vector<16x128xf32>
    %cst_228 = arith.constant 0.000000e+00 : f32
    %1346 = vector.broadcast %cst_228 : f32 to vector<16x128xf32>
    %1347 = arith.select %21, %1345, %1346 : vector<16x128xi1>, vector<16x128xf32>
    %c1_i32_229 = arith.constant 1 : i32
    %1348 = tpu.dynamic_rotate %1347 by %c1_i32_229 dim 1 : vector<16x128xf32>, i32 -> vector<16x128xf32>
    %cst_230 = arith.constant 0.000000e+00 : f32
    %1349 = vector.broadcast %cst_230 : f32 to vector<16x128xf32>
    %1350 = arith.select %25, %1348, %1349 : vector<16x128xi1>, vector<16x128xf32>
    %c127_i32_231 = arith.constant 127 : i32
    %1351 = tpu.dynamic_rotate %1347 by %c127_i32_231 dim 1 : vector<16x128xf32>, i32 -> vector<16x128xf32>
    %cst_232 = arith.constant 0.000000e+00 : f32
    %1352 = vector.broadcast %cst_232 : f32 to vector<16x128xf32>
    %1353 = arith.select %27, %1351, %1352 : vector<16x128xi1>, vector<16x128xf32>
    %c1_i32_233 = arith.constant 1 : i32
    %1354 = tpu.dynamic_rotate %952 by %c1_i32_233 dim 1 : vector<16x128xf32>, i32 -> vector<16x128xf32>
    %cst_234 = arith.constant 0.000000e+00 : f32
    %1355 = vector.broadcast %cst_234 : f32 to vector<16x128xf32>
    %1356 = arith.select %25, %1354, %1355 : vector<16x128xi1>, vector<16x128xf32>
    %c127_i32_235 = arith.constant 127 : i32
    %1357 = tpu.dynamic_rotate %952 by %c127_i32_235 dim 1 : vector<16x128xf32>, i32 -> vector<16x128xf32>
    %cst_236 = arith.constant 0.000000e+00 : f32
    %1358 = vector.broadcast %cst_236 : f32 to vector<16x128xf32>
    %1359 = arith.select %27, %1357, %1358 : vector<16x128xi1>, vector<16x128xf32>
    %c15_i32_237 = arith.constant 15 : i32
    %1360 = tpu.dynamic_rotate %952 by %c15_i32_237 dim 0 : vector<16x128xf32>, i32 -> vector<16x128xf32>
    %cst_238 = arith.constant 0.000000e+00 : f32
    %1361 = vector.broadcast %cst_238 : f32 to vector<16x128xf32>
    %1362 = arith.select %23, %1360, %1361 : vector<16x128xi1>, vector<16x128xf32>
    %c1_i32_239 = arith.constant 1 : i32
    %1363 = tpu.dynamic_rotate %1362 by %c1_i32_239 dim 1 : vector<16x128xf32>, i32 -> vector<16x128xf32>
    %cst_240 = arith.constant 0.000000e+00 : f32
    %1364 = vector.broadcast %cst_240 : f32 to vector<16x128xf32>
    %1365 = arith.select %25, %1363, %1364 : vector<16x128xi1>, vector<16x128xf32>
    %c127_i32_241 = arith.constant 127 : i32
    %1366 = tpu.dynamic_rotate %1362 by %c127_i32_241 dim 1 : vector<16x128xf32>, i32 -> vector<16x128xf32>
    %cst_242 = arith.constant 0.000000e+00 : f32
    %1367 = vector.broadcast %cst_242 : f32 to vector<16x128xf32>
    %1368 = arith.select %27, %1366, %1367 : vector<16x128xi1>, vector<16x128xf32>
    %1369 = vector.broadcast %80 : f32 to vector<16x128xf32>
    %1370 = arith.mulf %1369, %1350 : vector<16x128xf32>
    %1371 = arith.addf %1335, %1370 : vector<16x128xf32>
    %1372 = vector.broadcast %81 : f32 to vector<16x128xf32>
    %1373 = arith.mulf %1372, %1350 : vector<16x128xf32>
    %1374 = arith.addf %1338, %1373 : vector<16x128xf32>
    %1375 = vector.broadcast %82 : f32 to vector<16x128xf32>
    %1376 = arith.mulf %1375, %1350 : vector<16x128xf32>
    %1377 = arith.addf %1341, %1376 : vector<16x128xf32>
    %1378 = vector.broadcast %83 : f32 to vector<16x128xf32>
    %1379 = arith.mulf %1378, %1350 : vector<16x128xf32>
    %1380 = arith.addf %1344, %1379 : vector<16x128xf32>
    %1381 = vector.broadcast %96 : f32 to vector<16x128xf32>
    %1382 = arith.mulf %1381, %1347 : vector<16x128xf32>
    %1383 = arith.addf %1371, %1382 : vector<16x128xf32>
    %1384 = vector.broadcast %97 : f32 to vector<16x128xf32>
    %1385 = arith.mulf %1384, %1347 : vector<16x128xf32>
    %1386 = arith.addf %1374, %1385 : vector<16x128xf32>
    %1387 = vector.broadcast %98 : f32 to vector<16x128xf32>
    %1388 = arith.mulf %1387, %1347 : vector<16x128xf32>
    %1389 = arith.addf %1377, %1388 : vector<16x128xf32>
    %1390 = vector.broadcast %99 : f32 to vector<16x128xf32>
    %1391 = arith.mulf %1390, %1347 : vector<16x128xf32>
    %1392 = arith.addf %1380, %1391 : vector<16x128xf32>
    %1393 = vector.broadcast %112 : f32 to vector<16x128xf32>
    %1394 = arith.mulf %1393, %1353 : vector<16x128xf32>
    %1395 = arith.addf %1383, %1394 : vector<16x128xf32>
    %1396 = vector.broadcast %113 : f32 to vector<16x128xf32>
    %1397 = arith.mulf %1396, %1353 : vector<16x128xf32>
    %1398 = arith.addf %1386, %1397 : vector<16x128xf32>
    %1399 = vector.broadcast %114 : f32 to vector<16x128xf32>
    %1400 = arith.mulf %1399, %1353 : vector<16x128xf32>
    %1401 = arith.addf %1389, %1400 : vector<16x128xf32>
    %1402 = vector.broadcast %115 : f32 to vector<16x128xf32>
    %1403 = arith.mulf %1402, %1353 : vector<16x128xf32>
    %1404 = arith.addf %1392, %1403 : vector<16x128xf32>
    %1405 = vector.broadcast %128 : f32 to vector<16x128xf32>
    %1406 = arith.mulf %1405, %1356 : vector<16x128xf32>
    %1407 = arith.addf %1395, %1406 : vector<16x128xf32>
    %1408 = vector.broadcast %129 : f32 to vector<16x128xf32>
    %1409 = arith.mulf %1408, %1356 : vector<16x128xf32>
    %1410 = arith.addf %1398, %1409 : vector<16x128xf32>
    %1411 = vector.broadcast %130 : f32 to vector<16x128xf32>
    %1412 = arith.mulf %1411, %1356 : vector<16x128xf32>
    %1413 = arith.addf %1401, %1412 : vector<16x128xf32>
    %1414 = vector.broadcast %131 : f32 to vector<16x128xf32>
    %1415 = arith.mulf %1414, %1356 : vector<16x128xf32>
    %1416 = arith.addf %1404, %1415 : vector<16x128xf32>
    %1417 = vector.broadcast %144 : f32 to vector<16x128xf32>
    %1418 = arith.mulf %1417, %952 : vector<16x128xf32>
    %1419 = arith.addf %1407, %1418 : vector<16x128xf32>
    %1420 = vector.broadcast %145 : f32 to vector<16x128xf32>
    %1421 = arith.mulf %1420, %952 : vector<16x128xf32>
    %1422 = arith.addf %1410, %1421 : vector<16x128xf32>
    %1423 = vector.broadcast %146 : f32 to vector<16x128xf32>
    %1424 = arith.mulf %1423, %952 : vector<16x128xf32>
    %1425 = arith.addf %1413, %1424 : vector<16x128xf32>
    %1426 = vector.broadcast %147 : f32 to vector<16x128xf32>
    %1427 = arith.mulf %1426, %952 : vector<16x128xf32>
    %1428 = arith.addf %1416, %1427 : vector<16x128xf32>
    %1429 = vector.broadcast %160 : f32 to vector<16x128xf32>
    %1430 = arith.mulf %1429, %1359 : vector<16x128xf32>
    %1431 = arith.addf %1419, %1430 : vector<16x128xf32>
    %1432 = vector.broadcast %161 : f32 to vector<16x128xf32>
    %1433 = arith.mulf %1432, %1359 : vector<16x128xf32>
    %1434 = arith.addf %1422, %1433 : vector<16x128xf32>
    %1435 = vector.broadcast %162 : f32 to vector<16x128xf32>
    %1436 = arith.mulf %1435, %1359 : vector<16x128xf32>
    %1437 = arith.addf %1425, %1436 : vector<16x128xf32>
    %1438 = vector.broadcast %163 : f32 to vector<16x128xf32>
    %1439 = arith.mulf %1438, %1359 : vector<16x128xf32>
    %1440 = arith.addf %1428, %1439 : vector<16x128xf32>
    %1441 = vector.broadcast %176 : f32 to vector<16x128xf32>
    %1442 = arith.mulf %1441, %1365 : vector<16x128xf32>
    %1443 = arith.addf %1431, %1442 : vector<16x128xf32>
    %1444 = vector.broadcast %177 : f32 to vector<16x128xf32>
    %1445 = arith.mulf %1444, %1365 : vector<16x128xf32>
    %1446 = arith.addf %1434, %1445 : vector<16x128xf32>
    %1447 = vector.broadcast %178 : f32 to vector<16x128xf32>
    %1448 = arith.mulf %1447, %1365 : vector<16x128xf32>
    %1449 = arith.addf %1437, %1448 : vector<16x128xf32>
    %1450 = vector.broadcast %179 : f32 to vector<16x128xf32>
    %1451 = arith.mulf %1450, %1365 : vector<16x128xf32>
    %1452 = arith.addf %1440, %1451 : vector<16x128xf32>
    %1453 = vector.broadcast %192 : f32 to vector<16x128xf32>
    %1454 = arith.mulf %1453, %1362 : vector<16x128xf32>
    %1455 = arith.addf %1443, %1454 : vector<16x128xf32>
    %1456 = vector.broadcast %193 : f32 to vector<16x128xf32>
    %1457 = arith.mulf %1456, %1362 : vector<16x128xf32>
    %1458 = arith.addf %1446, %1457 : vector<16x128xf32>
    %1459 = vector.broadcast %194 : f32 to vector<16x128xf32>
    %1460 = arith.mulf %1459, %1362 : vector<16x128xf32>
    %1461 = arith.addf %1449, %1460 : vector<16x128xf32>
    %1462 = vector.broadcast %195 : f32 to vector<16x128xf32>
    %1463 = arith.mulf %1462, %1362 : vector<16x128xf32>
    %1464 = arith.addf %1452, %1463 : vector<16x128xf32>
    %1465 = vector.broadcast %208 : f32 to vector<16x128xf32>
    %1466 = arith.mulf %1465, %1368 : vector<16x128xf32>
    %1467 = arith.addf %1455, %1466 : vector<16x128xf32>
    %1468 = vector.broadcast %209 : f32 to vector<16x128xf32>
    %1469 = arith.mulf %1468, %1368 : vector<16x128xf32>
    %1470 = arith.addf %1458, %1469 : vector<16x128xf32>
    %1471 = vector.broadcast %210 : f32 to vector<16x128xf32>
    %1472 = arith.mulf %1471, %1368 : vector<16x128xf32>
    %1473 = arith.addf %1461, %1472 : vector<16x128xf32>
    %1474 = vector.broadcast %211 : f32 to vector<16x128xf32>
    %1475 = arith.mulf %1474, %1368 : vector<16x128xf32>
    %1476 = arith.addf %1464, %1475 : vector<16x128xf32>
    %1477 = vector.broadcast %212 : f32 to vector<16x128xf32>
    %1478 = arith.mulf %1467, %1477 : vector<16x128xf32>
    %1479 = vector.broadcast %216 : f32 to vector<16x128xf32>
    %1480 = arith.addf %1478, %1479 : vector<16x128xf32>
    %cst_243 = arith.constant 0.000000e+00 : f32
    %1481 = vector.broadcast %cst_243 : f32 to vector<16x128xf32>
    %1482 = arith.maximumf %1480, %1481 : vector<16x128xf32>
    %1483 = arith.addf %931, %1482 : vector<16x128xf32>
    %1484 = vector.broadcast %213 : f32 to vector<16x128xf32>
    %1485 = arith.mulf %1470, %1484 : vector<16x128xf32>
    %1486 = vector.broadcast %217 : f32 to vector<16x128xf32>
    %1487 = arith.addf %1485, %1486 : vector<16x128xf32>
    %cst_244 = arith.constant 0.000000e+00 : f32
    %1488 = vector.broadcast %cst_244 : f32 to vector<16x128xf32>
    %1489 = arith.maximumf %1487, %1488 : vector<16x128xf32>
    %1490 = arith.addf %938, %1489 : vector<16x128xf32>
    %1491 = vector.broadcast %214 : f32 to vector<16x128xf32>
    %1492 = arith.mulf %1473, %1491 : vector<16x128xf32>
    %1493 = vector.broadcast %218 : f32 to vector<16x128xf32>
    %1494 = arith.addf %1492, %1493 : vector<16x128xf32>
    %cst_245 = arith.constant 0.000000e+00 : f32
    %1495 = vector.broadcast %cst_245 : f32 to vector<16x128xf32>
    %1496 = arith.maximumf %1494, %1495 : vector<16x128xf32>
    %1497 = arith.addf %945, %1496 : vector<16x128xf32>
    %1498 = vector.broadcast %215 : f32 to vector<16x128xf32>
    %1499 = arith.mulf %1476, %1498 : vector<16x128xf32>
    %1500 = vector.broadcast %219 : f32 to vector<16x128xf32>
    %1501 = arith.addf %1499, %1500 : vector<16x128xf32>
    %cst_246 = arith.constant 0.000000e+00 : f32
    %1502 = vector.broadcast %cst_246 : f32 to vector<16x128xf32>
    %1503 = arith.maximumf %1501, %1502 : vector<16x128xf32>
    %1504 = arith.addf %952, %1503 : vector<16x128xf32>
    %c1_i32_247 = arith.constant 1 : i32
    %1505 = tpu.dynamic_rotate %1483 by %c1_i32_247 dim 0 : vector<16x128xf32>, i32 -> vector<16x128xf32>
    %cst_248 = arith.constant 0.000000e+00 : f32
    %1506 = vector.broadcast %cst_248 : f32 to vector<16x128xf32>
    %1507 = arith.select %21, %1505, %1506 : vector<16x128xi1>, vector<16x128xf32>
    %c1_i32_249 = arith.constant 1 : i32
    %1508 = tpu.dynamic_rotate %1507 by %c1_i32_249 dim 1 : vector<16x128xf32>, i32 -> vector<16x128xf32>
    %cst_250 = arith.constant 0.000000e+00 : f32
    %1509 = vector.broadcast %cst_250 : f32 to vector<16x128xf32>
    %1510 = arith.select %25, %1508, %1509 : vector<16x128xi1>, vector<16x128xf32>
    %c127_i32_251 = arith.constant 127 : i32
    %1511 = tpu.dynamic_rotate %1507 by %c127_i32_251 dim 1 : vector<16x128xf32>, i32 -> vector<16x128xf32>
    %cst_252 = arith.constant 0.000000e+00 : f32
    %1512 = vector.broadcast %cst_252 : f32 to vector<16x128xf32>
    %1513 = arith.select %27, %1511, %1512 : vector<16x128xi1>, vector<16x128xf32>
    %c1_i32_253 = arith.constant 1 : i32
    %1514 = tpu.dynamic_rotate %1483 by %c1_i32_253 dim 1 : vector<16x128xf32>, i32 -> vector<16x128xf32>
    %cst_254 = arith.constant 0.000000e+00 : f32
    %1515 = vector.broadcast %cst_254 : f32 to vector<16x128xf32>
    %1516 = arith.select %25, %1514, %1515 : vector<16x128xi1>, vector<16x128xf32>
    %c127_i32_255 = arith.constant 127 : i32
    %1517 = tpu.dynamic_rotate %1483 by %c127_i32_255 dim 1 : vector<16x128xf32>, i32 -> vector<16x128xf32>
    %cst_256 = arith.constant 0.000000e+00 : f32
    %1518 = vector.broadcast %cst_256 : f32 to vector<16x128xf32>
    %1519 = arith.select %27, %1517, %1518 : vector<16x128xi1>, vector<16x128xf32>
    %c15_i32_257 = arith.constant 15 : i32
    %1520 = tpu.dynamic_rotate %1483 by %c15_i32_257 dim 0 : vector<16x128xf32>, i32 -> vector<16x128xf32>
    %cst_258 = arith.constant 0.000000e+00 : f32
    %1521 = vector.broadcast %cst_258 : f32 to vector<16x128xf32>
    %1522 = arith.select %23, %1520, %1521 : vector<16x128xi1>, vector<16x128xf32>
    %c1_i32_259 = arith.constant 1 : i32
    %1523 = tpu.dynamic_rotate %1522 by %c1_i32_259 dim 1 : vector<16x128xf32>, i32 -> vector<16x128xf32>
    %cst_260 = arith.constant 0.000000e+00 : f32
    %1524 = vector.broadcast %cst_260 : f32 to vector<16x128xf32>
    %1525 = arith.select %25, %1523, %1524 : vector<16x128xi1>, vector<16x128xf32>
    %c127_i32_261 = arith.constant 127 : i32
    %1526 = tpu.dynamic_rotate %1522 by %c127_i32_261 dim 1 : vector<16x128xf32>, i32 -> vector<16x128xf32>
    %cst_262 = arith.constant 0.000000e+00 : f32
    %1527 = vector.broadcast %cst_262 : f32 to vector<16x128xf32>
    %1528 = arith.select %27, %1526, %1527 : vector<16x128xi1>, vector<16x128xf32>
    %1529 = vector.broadcast %220 : f32 to vector<16x128xf32>
    %1530 = arith.mulf %1529, %1510 : vector<16x128xf32>
    %1531 = vector.broadcast %224 : f32 to vector<16x128xf32>
    %1532 = arith.mulf %1531, %1507 : vector<16x128xf32>
    %1533 = arith.addf %1530, %1532 : vector<16x128xf32>
    %1534 = vector.broadcast %228 : f32 to vector<16x128xf32>
    %1535 = arith.mulf %1534, %1513 : vector<16x128xf32>
    %1536 = arith.addf %1533, %1535 : vector<16x128xf32>
    %1537 = vector.broadcast %232 : f32 to vector<16x128xf32>
    %1538 = arith.mulf %1537, %1516 : vector<16x128xf32>
    %1539 = arith.addf %1536, %1538 : vector<16x128xf32>
    %1540 = vector.broadcast %236 : f32 to vector<16x128xf32>
    %1541 = arith.mulf %1540, %1483 : vector<16x128xf32>
    %1542 = arith.addf %1539, %1541 : vector<16x128xf32>
    %1543 = vector.broadcast %240 : f32 to vector<16x128xf32>
    %1544 = arith.mulf %1543, %1519 : vector<16x128xf32>
    %1545 = arith.addf %1542, %1544 : vector<16x128xf32>
    %1546 = vector.broadcast %244 : f32 to vector<16x128xf32>
    %1547 = arith.mulf %1546, %1525 : vector<16x128xf32>
    %1548 = arith.addf %1545, %1547 : vector<16x128xf32>
    %1549 = vector.broadcast %248 : f32 to vector<16x128xf32>
    %1550 = arith.mulf %1549, %1522 : vector<16x128xf32>
    %1551 = arith.addf %1548, %1550 : vector<16x128xf32>
    %1552 = vector.broadcast %252 : f32 to vector<16x128xf32>
    %1553 = arith.mulf %1552, %1528 : vector<16x128xf32>
    %1554 = arith.addf %1551, %1553 : vector<16x128xf32>
    %c1_i32_263 = arith.constant 1 : i32
    %1555 = tpu.dynamic_rotate %1490 by %c1_i32_263 dim 0 : vector<16x128xf32>, i32 -> vector<16x128xf32>
    %cst_264 = arith.constant 0.000000e+00 : f32
    %1556 = vector.broadcast %cst_264 : f32 to vector<16x128xf32>
    %1557 = arith.select %21, %1555, %1556 : vector<16x128xi1>, vector<16x128xf32>
    %c1_i32_265 = arith.constant 1 : i32
    %1558 = tpu.dynamic_rotate %1557 by %c1_i32_265 dim 1 : vector<16x128xf32>, i32 -> vector<16x128xf32>
    %cst_266 = arith.constant 0.000000e+00 : f32
    %1559 = vector.broadcast %cst_266 : f32 to vector<16x128xf32>
    %1560 = arith.select %25, %1558, %1559 : vector<16x128xi1>, vector<16x128xf32>
    %c127_i32_267 = arith.constant 127 : i32
    %1561 = tpu.dynamic_rotate %1557 by %c127_i32_267 dim 1 : vector<16x128xf32>, i32 -> vector<16x128xf32>
    %cst_268 = arith.constant 0.000000e+00 : f32
    %1562 = vector.broadcast %cst_268 : f32 to vector<16x128xf32>
    %1563 = arith.select %27, %1561, %1562 : vector<16x128xi1>, vector<16x128xf32>
    %c1_i32_269 = arith.constant 1 : i32
    %1564 = tpu.dynamic_rotate %1490 by %c1_i32_269 dim 1 : vector<16x128xf32>, i32 -> vector<16x128xf32>
    %cst_270 = arith.constant 0.000000e+00 : f32
    %1565 = vector.broadcast %cst_270 : f32 to vector<16x128xf32>
    %1566 = arith.select %25, %1564, %1565 : vector<16x128xi1>, vector<16x128xf32>
    %c127_i32_271 = arith.constant 127 : i32
    %1567 = tpu.dynamic_rotate %1490 by %c127_i32_271 dim 1 : vector<16x128xf32>, i32 -> vector<16x128xf32>
    %cst_272 = arith.constant 0.000000e+00 : f32
    %1568 = vector.broadcast %cst_272 : f32 to vector<16x128xf32>
    %1569 = arith.select %27, %1567, %1568 : vector<16x128xi1>, vector<16x128xf32>
    %c15_i32_273 = arith.constant 15 : i32
    %1570 = tpu.dynamic_rotate %1490 by %c15_i32_273 dim 0 : vector<16x128xf32>, i32 -> vector<16x128xf32>
    %cst_274 = arith.constant 0.000000e+00 : f32
    %1571 = vector.broadcast %cst_274 : f32 to vector<16x128xf32>
    %1572 = arith.select %23, %1570, %1571 : vector<16x128xi1>, vector<16x128xf32>
    %c1_i32_275 = arith.constant 1 : i32
    %1573 = tpu.dynamic_rotate %1572 by %c1_i32_275 dim 1 : vector<16x128xf32>, i32 -> vector<16x128xf32>
    %cst_276 = arith.constant 0.000000e+00 : f32
    %1574 = vector.broadcast %cst_276 : f32 to vector<16x128xf32>
    %1575 = arith.select %25, %1573, %1574 : vector<16x128xi1>, vector<16x128xf32>
    %c127_i32_277 = arith.constant 127 : i32
    %1576 = tpu.dynamic_rotate %1572 by %c127_i32_277 dim 1 : vector<16x128xf32>, i32 -> vector<16x128xf32>
    %cst_278 = arith.constant 0.000000e+00 : f32
    %1577 = vector.broadcast %cst_278 : f32 to vector<16x128xf32>
    %1578 = arith.select %27, %1576, %1577 : vector<16x128xi1>, vector<16x128xf32>
    %1579 = vector.broadcast %221 : f32 to vector<16x128xf32>
    %1580 = arith.mulf %1579, %1560 : vector<16x128xf32>
    %1581 = arith.addf %1554, %1580 : vector<16x128xf32>
    %1582 = vector.broadcast %225 : f32 to vector<16x128xf32>
    %1583 = arith.mulf %1582, %1557 : vector<16x128xf32>
    %1584 = arith.addf %1581, %1583 : vector<16x128xf32>
    %1585 = vector.broadcast %229 : f32 to vector<16x128xf32>
    %1586 = arith.mulf %1585, %1563 : vector<16x128xf32>
    %1587 = arith.addf %1584, %1586 : vector<16x128xf32>
    %1588 = vector.broadcast %233 : f32 to vector<16x128xf32>
    %1589 = arith.mulf %1588, %1566 : vector<16x128xf32>
    %1590 = arith.addf %1587, %1589 : vector<16x128xf32>
    %1591 = vector.broadcast %237 : f32 to vector<16x128xf32>
    %1592 = arith.mulf %1591, %1490 : vector<16x128xf32>
    %1593 = arith.addf %1590, %1592 : vector<16x128xf32>
    %1594 = vector.broadcast %241 : f32 to vector<16x128xf32>
    %1595 = arith.mulf %1594, %1569 : vector<16x128xf32>
    %1596 = arith.addf %1593, %1595 : vector<16x128xf32>
    %1597 = vector.broadcast %245 : f32 to vector<16x128xf32>
    %1598 = arith.mulf %1597, %1575 : vector<16x128xf32>
    %1599 = arith.addf %1596, %1598 : vector<16x128xf32>
    %1600 = vector.broadcast %249 : f32 to vector<16x128xf32>
    %1601 = arith.mulf %1600, %1572 : vector<16x128xf32>
    %1602 = arith.addf %1599, %1601 : vector<16x128xf32>
    %1603 = vector.broadcast %253 : f32 to vector<16x128xf32>
    %1604 = arith.mulf %1603, %1578 : vector<16x128xf32>
    %1605 = arith.addf %1602, %1604 : vector<16x128xf32>
    %c1_i32_279 = arith.constant 1 : i32
    %1606 = tpu.dynamic_rotate %1497 by %c1_i32_279 dim 0 : vector<16x128xf32>, i32 -> vector<16x128xf32>
    %cst_280 = arith.constant 0.000000e+00 : f32
    %1607 = vector.broadcast %cst_280 : f32 to vector<16x128xf32>
    %1608 = arith.select %21, %1606, %1607 : vector<16x128xi1>, vector<16x128xf32>
    %c1_i32_281 = arith.constant 1 : i32
    %1609 = tpu.dynamic_rotate %1608 by %c1_i32_281 dim 1 : vector<16x128xf32>, i32 -> vector<16x128xf32>
    %cst_282 = arith.constant 0.000000e+00 : f32
    %1610 = vector.broadcast %cst_282 : f32 to vector<16x128xf32>
    %1611 = arith.select %25, %1609, %1610 : vector<16x128xi1>, vector<16x128xf32>
    %c127_i32_283 = arith.constant 127 : i32
    %1612 = tpu.dynamic_rotate %1608 by %c127_i32_283 dim 1 : vector<16x128xf32>, i32 -> vector<16x128xf32>
    %cst_284 = arith.constant 0.000000e+00 : f32
    %1613 = vector.broadcast %cst_284 : f32 to vector<16x128xf32>
    %1614 = arith.select %27, %1612, %1613 : vector<16x128xi1>, vector<16x128xf32>
    %c1_i32_285 = arith.constant 1 : i32
    %1615 = tpu.dynamic_rotate %1497 by %c1_i32_285 dim 1 : vector<16x128xf32>, i32 -> vector<16x128xf32>
    %cst_286 = arith.constant 0.000000e+00 : f32
    %1616 = vector.broadcast %cst_286 : f32 to vector<16x128xf32>
    %1617 = arith.select %25, %1615, %1616 : vector<16x128xi1>, vector<16x128xf32>
    %c127_i32_287 = arith.constant 127 : i32
    %1618 = tpu.dynamic_rotate %1497 by %c127_i32_287 dim 1 : vector<16x128xf32>, i32 -> vector<16x128xf32>
    %cst_288 = arith.constant 0.000000e+00 : f32
    %1619 = vector.broadcast %cst_288 : f32 to vector<16x128xf32>
    %1620 = arith.select %27, %1618, %1619 : vector<16x128xi1>, vector<16x128xf32>
    %c15_i32_289 = arith.constant 15 : i32
    %1621 = tpu.dynamic_rotate %1497 by %c15_i32_289 dim 0 : vector<16x128xf32>, i32 -> vector<16x128xf32>
    %cst_290 = arith.constant 0.000000e+00 : f32
    %1622 = vector.broadcast %cst_290 : f32 to vector<16x128xf32>
    %1623 = arith.select %23, %1621, %1622 : vector<16x128xi1>, vector<16x128xf32>
    %c1_i32_291 = arith.constant 1 : i32
    %1624 = tpu.dynamic_rotate %1623 by %c1_i32_291 dim 1 : vector<16x128xf32>, i32 -> vector<16x128xf32>
    %cst_292 = arith.constant 0.000000e+00 : f32
    %1625 = vector.broadcast %cst_292 : f32 to vector<16x128xf32>
    %1626 = arith.select %25, %1624, %1625 : vector<16x128xi1>, vector<16x128xf32>
    %c127_i32_293 = arith.constant 127 : i32
    %1627 = tpu.dynamic_rotate %1623 by %c127_i32_293 dim 1 : vector<16x128xf32>, i32 -> vector<16x128xf32>
    %cst_294 = arith.constant 0.000000e+00 : f32
    %1628 = vector.broadcast %cst_294 : f32 to vector<16x128xf32>
    %1629 = arith.select %27, %1627, %1628 : vector<16x128xi1>, vector<16x128xf32>
    %1630 = vector.broadcast %222 : f32 to vector<16x128xf32>
    %1631 = arith.mulf %1630, %1611 : vector<16x128xf32>
    %1632 = arith.addf %1605, %1631 : vector<16x128xf32>
    %1633 = vector.broadcast %226 : f32 to vector<16x128xf32>
    %1634 = arith.mulf %1633, %1608 : vector<16x128xf32>
    %1635 = arith.addf %1632, %1634 : vector<16x128xf32>
    %1636 = vector.broadcast %230 : f32 to vector<16x128xf32>
    %1637 = arith.mulf %1636, %1614 : vector<16x128xf32>
    %1638 = arith.addf %1635, %1637 : vector<16x128xf32>
    %1639 = vector.broadcast %234 : f32 to vector<16x128xf32>
    %1640 = arith.mulf %1639, %1617 : vector<16x128xf32>
    %1641 = arith.addf %1638, %1640 : vector<16x128xf32>
    %1642 = vector.broadcast %238 : f32 to vector<16x128xf32>
    %1643 = arith.mulf %1642, %1497 : vector<16x128xf32>
    %1644 = arith.addf %1641, %1643 : vector<16x128xf32>
    %1645 = vector.broadcast %242 : f32 to vector<16x128xf32>
    %1646 = arith.mulf %1645, %1620 : vector<16x128xf32>
    %1647 = arith.addf %1644, %1646 : vector<16x128xf32>
    %1648 = vector.broadcast %246 : f32 to vector<16x128xf32>
    %1649 = arith.mulf %1648, %1626 : vector<16x128xf32>
    %1650 = arith.addf %1647, %1649 : vector<16x128xf32>
    %1651 = vector.broadcast %250 : f32 to vector<16x128xf32>
    %1652 = arith.mulf %1651, %1623 : vector<16x128xf32>
    %1653 = arith.addf %1650, %1652 : vector<16x128xf32>
    %1654 = vector.broadcast %254 : f32 to vector<16x128xf32>
    %1655 = arith.mulf %1654, %1629 : vector<16x128xf32>
    %1656 = arith.addf %1653, %1655 : vector<16x128xf32>
    %c1_i32_295 = arith.constant 1 : i32
    %1657 = tpu.dynamic_rotate %1504 by %c1_i32_295 dim 0 : vector<16x128xf32>, i32 -> vector<16x128xf32>
    %cst_296 = arith.constant 0.000000e+00 : f32
    %1658 = vector.broadcast %cst_296 : f32 to vector<16x128xf32>
    %1659 = arith.select %21, %1657, %1658 : vector<16x128xi1>, vector<16x128xf32>
    %c1_i32_297 = arith.constant 1 : i32
    %1660 = tpu.dynamic_rotate %1659 by %c1_i32_297 dim 1 : vector<16x128xf32>, i32 -> vector<16x128xf32>
    %cst_298 = arith.constant 0.000000e+00 : f32
    %1661 = vector.broadcast %cst_298 : f32 to vector<16x128xf32>
    %1662 = arith.select %25, %1660, %1661 : vector<16x128xi1>, vector<16x128xf32>
    %c127_i32_299 = arith.constant 127 : i32
    %1663 = tpu.dynamic_rotate %1659 by %c127_i32_299 dim 1 : vector<16x128xf32>, i32 -> vector<16x128xf32>
    %cst_300 = arith.constant 0.000000e+00 : f32
    %1664 = vector.broadcast %cst_300 : f32 to vector<16x128xf32>
    %1665 = arith.select %27, %1663, %1664 : vector<16x128xi1>, vector<16x128xf32>
    %c1_i32_301 = arith.constant 1 : i32
    %1666 = tpu.dynamic_rotate %1504 by %c1_i32_301 dim 1 : vector<16x128xf32>, i32 -> vector<16x128xf32>
    %cst_302 = arith.constant 0.000000e+00 : f32
    %1667 = vector.broadcast %cst_302 : f32 to vector<16x128xf32>
    %1668 = arith.select %25, %1666, %1667 : vector<16x128xi1>, vector<16x128xf32>
    %c127_i32_303 = arith.constant 127 : i32
    %1669 = tpu.dynamic_rotate %1504 by %c127_i32_303 dim 1 : vector<16x128xf32>, i32 -> vector<16x128xf32>
    %cst_304 = arith.constant 0.000000e+00 : f32
    %1670 = vector.broadcast %cst_304 : f32 to vector<16x128xf32>
    %1671 = arith.select %27, %1669, %1670 : vector<16x128xi1>, vector<16x128xf32>
    %c15_i32_305 = arith.constant 15 : i32
    %1672 = tpu.dynamic_rotate %1504 by %c15_i32_305 dim 0 : vector<16x128xf32>, i32 -> vector<16x128xf32>
    %cst_306 = arith.constant 0.000000e+00 : f32
    %1673 = vector.broadcast %cst_306 : f32 to vector<16x128xf32>
    %1674 = arith.select %23, %1672, %1673 : vector<16x128xi1>, vector<16x128xf32>
    %c1_i32_307 = arith.constant 1 : i32
    %1675 = tpu.dynamic_rotate %1674 by %c1_i32_307 dim 1 : vector<16x128xf32>, i32 -> vector<16x128xf32>
    %cst_308 = arith.constant 0.000000e+00 : f32
    %1676 = vector.broadcast %cst_308 : f32 to vector<16x128xf32>
    %1677 = arith.select %25, %1675, %1676 : vector<16x128xi1>, vector<16x128xf32>
    %c127_i32_309 = arith.constant 127 : i32
    %1678 = tpu.dynamic_rotate %1674 by %c127_i32_309 dim 1 : vector<16x128xf32>, i32 -> vector<16x128xf32>
    %cst_310 = arith.constant 0.000000e+00 : f32
    %1679 = vector.broadcast %cst_310 : f32 to vector<16x128xf32>
    %1680 = arith.select %27, %1678, %1679 : vector<16x128xi1>, vector<16x128xf32>
    %1681 = vector.broadcast %223 : f32 to vector<16x128xf32>
    %1682 = arith.mulf %1681, %1662 : vector<16x128xf32>
    %1683 = arith.addf %1656, %1682 : vector<16x128xf32>
    %1684 = vector.broadcast %227 : f32 to vector<16x128xf32>
    %1685 = arith.mulf %1684, %1659 : vector<16x128xf32>
    %1686 = arith.addf %1683, %1685 : vector<16x128xf32>
    %1687 = vector.broadcast %231 : f32 to vector<16x128xf32>
    %1688 = arith.mulf %1687, %1665 : vector<16x128xf32>
    %1689 = arith.addf %1686, %1688 : vector<16x128xf32>
    %1690 = vector.broadcast %235 : f32 to vector<16x128xf32>
    %1691 = arith.mulf %1690, %1668 : vector<16x128xf32>
    %1692 = arith.addf %1689, %1691 : vector<16x128xf32>
    %1693 = vector.broadcast %239 : f32 to vector<16x128xf32>
    %1694 = arith.mulf %1693, %1504 : vector<16x128xf32>
    %1695 = arith.addf %1692, %1694 : vector<16x128xf32>
    %1696 = vector.broadcast %243 : f32 to vector<16x128xf32>
    %1697 = arith.mulf %1696, %1671 : vector<16x128xf32>
    %1698 = arith.addf %1695, %1697 : vector<16x128xf32>
    %1699 = vector.broadcast %247 : f32 to vector<16x128xf32>
    %1700 = arith.mulf %1699, %1677 : vector<16x128xf32>
    %1701 = arith.addf %1698, %1700 : vector<16x128xf32>
    %1702 = vector.broadcast %251 : f32 to vector<16x128xf32>
    %1703 = arith.mulf %1702, %1674 : vector<16x128xf32>
    %1704 = arith.addf %1701, %1703 : vector<16x128xf32>
    %1705 = vector.broadcast %255 : f32 to vector<16x128xf32>
    %1706 = arith.mulf %1705, %1680 : vector<16x128xf32>
    %1707 = arith.addf %1704, %1706 : vector<16x128xf32>
    %1708 = vector.broadcast %256 : f32 to vector<16x128xf32>
    %1709 = arith.addf %1707, %1708 : vector<16x128xf32>
    %1710 = arith.negf %1709 : vector<16x128xf32>
    %1711 = math.exp %1710 : vector<16x128xf32>
    %cst_311 = arith.constant 1.000000e+00 : f32
    %1712 = vector.broadcast %cst_311 : f32 to vector<16x128xf32>
    %1713 = arith.addf %1712, %1711 : vector<16x128xf32>
    %1714 = arith.divf %1712, %1713 : vector<16x128xf32>
    %1715 = arith.addf %1714, %1 : vector<16x128xf32>
    %cst_312 = arith.constant 9.99999974E-5 : f32
    %cst_313 = arith.constant 1.000000e+00 : f32
    %1716 = vector.broadcast %cst_312 : f32 to vector<16x128xf32>
    %1717 = arith.maximumf %1716, %1715 : vector<16x128xf32>
    %1718 = vector.broadcast %cst_313 : f32 to vector<16x128xf32>
    %1719 = arith.minimumf %1718, %1717 : vector<16x128xf32>
    %c0_314 = arith.constant 0 : index
    %c0_315 = arith.constant 0 : index
    %c0_316 = arith.constant 0 : index
    %1720 = vector.load %arg9[%c0_314, %c0_315, %c0_316] : memref<1x16x128xf32, #tpu.memory_space<vmem>>, vector<1x16x128xf32>
    %1721 = vector.shape_cast %1720 : vector<1x16x128xf32> to vector<16x128xf32>
    %1722 = vector.shape_cast %1719 : vector<16x128xf32> to vector<1x16x128xf32>
    tpu.vector_store %arg9[%c0_314, %c0_315, %c0_316], %1722 {strides = array<i32>} : memref<1x16x128xf32, #tpu.memory_space<vmem>>, vector<1x16x128xf32>,
    return
  }
  func.func @transform_0(%arg0: i32) -> (i32, i32, i32) {
    %c0_i32 = arith.constant 0 : i32
    %c0_i32_0 = arith.constant 0 : i32
    %c0_i32_1 = arith.constant 0 : i32
    return %arg0, %c0_i32, %c0_i32_0 : i32, i32, i32
  }
  func.func @transform_1(%arg0: i32) -> i32 {
    %c0_i32 = arith.constant 0 : i32
    %c0_i32_0 = arith.constant 0 : i32
    return %c0_i32 : i32
  }
  func.func @transform_2(%arg0: i32) -> i32 {
    %c0_i32 = arith.constant 0 : i32
    %c0_i32_0 = arith.constant 0 : i32
    return %c0_i32 : i32
  }
  func.func @transform_3(%arg0: i32) -> i32 {
    %c0_i32 = arith.constant 0 : i32
    %c0_i32_0 = arith.constant 0 : i32
    return %c0_i32 : i32
  }
  func.func @transform_4(%arg0: i32) -> i32 {
    %c0_i32 = arith.constant 0 : i32
    %c0_i32_0 = arith.constant 0 : i32
    return %c0_i32 : i32
  }
  func.func @transform_5(%arg0: i32) -> i32 {
    %c0_i32 = arith.constant 0 : i32
    %c0_i32_0 = arith.constant 0 : i32
    return %c0_i32 : i32
  }
  func.func @transform_6(%arg0: i32) -> i32 {
    %c0_i32 = arith.constant 0 : i32
    %c0_i32_0 = arith.constant 0 : i32
    return %c0_i32 : i32
  }
  func.func @transform_7(%arg0: i32) -> i32 {
    %c0_i32 = arith.constant 0 : i32
    %c0_i32_0 = arith.constant 0 : i32
    return %c0_i32 : i32
  }
  func.func @transform_8(%arg0: i32) -> (i32, i32, i32) {
    %c0_i32 = arith.constant 0 : i32
    %c0_i32_0 = arith.constant 0 : i32
    %c0_i32_1 = arith.constant 0 : i32
    return %arg0, %c0_i32, %c0_i32_0 : i32, i32, i32
  }
}

</mosaic_0001>

<llo_original>
// kernel: tpu_custom_call.1
$region0: #{tpu_custom_call.1}
  #allocation0 [shape = 'u32[]', space=smem, size = 0x4, offset = 0x4, fixed_abs, tag = 'smem constant byte address 0x4 - core index']
  #allocation1 [shape = 'u32[144,128]{1,0:T(1,128)}', space=vmem, size = 0x12000, scoped, tag = 'internal scratch']
  #allocation2 [shape = 'f32[1]{0:T(128)S(6)}', space=smem, size = 0x200, scoped, tag = 'scoped memory for tpu_custom_call.1']
  %s0 = inlined_call_operand.hbm [shape: f32[2,16,128], index: 0, kind: input, shape index: {}]
  %s1 = inlined_call_operand.vmem [shape: f32[36], index: 1, kind: input, shape index: {}]
  %s2 = inlined_call_operand.vmem [shape: f32[4], index: 2, kind: input, shape index: {}]
  %s3 = inlined_call_operand.vmem [shape: f32[144], index: 3, kind: input, shape index: {}]
  %s4 = inlined_call_operand.vmem [shape: f32[4], index: 4, kind: input, shape index: {}]
  %s5 = inlined_call_operand.vmem [shape: f32[4], index: 5, kind: input, shape index: {}]
  %s6 = inlined_call_operand.vmem [shape: f32[36], index: 6, kind: input, shape index: {}]
  %s7 = inlined_call_operand.<no memory space> [shape: f32[1], index: 7, kind: input, shape index: {}]
  %s8 = inlined_call_operand.hbm [shape: f32[2,16,128], index: 8, kind: output, shape index: {}]
  %s9 = sld [smem:[#allocation0]]
  $region93: #{tpu_custom_call.1} parent=0
    _
  %s11 = ssub.s32 1, %s9
  %s12 = scalar_select 0, %s11, %s9
  %13 = sst [smem:[#allocation2]] %s7
  $region1: #{tpu_custom_call.1} parent=0
    #allocation3 [shape = 'u8[16384]{0}', space=vmem, size = 0x4000, scoped, tag = 'input window, operand 0']
    #allocation4 [shape = 's32[2]{0}', space=sflag, size = 0x8, scoped, tag = 'scoped memory for tpu_custom_call.1']
    #allocation5 [shape = 's32[2]{0}', space=sflag, size = 0x8, scoped, tag = 'scoped memory for tpu_custom_call.1']
    #allocation6 [shape = 's32[2]{0}', space=sflag, size = 0x8, scoped, tag = 'scoped memory for tpu_custom_call.1']
    #allocation7 [shape = 'u8[512]{0}', space=smem, size = 0x200, scoped, tag = 'input window, operand 1, single buffered']
    #allocation8 [shape = 'u8[512]{0}', space=smem, size = 0x200, scoped, tag = 'input window, operand 2, single buffered']
    #allocation9 [shape = 's32[1]{0}', space=sflag, size = 0x4, scoped, tag = 'scoped memory for tpu_custom_call.1']
    #allocation10 [shape = 'u8[1024]{0}', space=smem, size = 0x400, scoped, tag = 'input window, operand 3, single buffered']
    #allocation11 [shape = 'u8[512]{0}', space=smem, size = 0x200, scoped, tag = 'input window, operand 4, single buffered']
    #allocation12 [shape = 's32[1]{0}', space=sflag, size = 0x4, scoped, tag = 'scoped memory for tpu_custom_call.1']
    #allocation13 [shape = 'u8[512]{0}', space=smem, size = 0x200, scoped, tag = 'input window, operand 5, single buffered']
    #allocation14 [shape = 'u8[512]{0}', space=smem, size = 0x200, scoped, tag = 'input window, operand 6, single buffered']
    #allocation15 [shape = 's32[1]{0}', space=sflag, size = 0x4, scoped, tag = 'scoped memory for tpu_custom_call.1']
    #allocation16 [shape = 'u8[16384]{0}', space=vmem, size = 0x4000, scoped, tag = 'output window, operand 0']
    %14 = vsyncpa [#allocation4], 0
    %s15 = scalar_lea.sflag [#allocation4], 1
    %16 = vsyncpa %s15, 0
    %17 = vsyncpa [#allocation6], 0
    %18 = vsyncpa [#allocation9], 0
    %19 = vsyncpa [#allocation12], 0
    %20 = vsyncpa [#allocation15], 0
    %21 = vsyncpa [#allocation5], 0
    %s22 = scalar_lea.sflag [#allocation5], 1
    %23 = vsyncpa %s22, 0
    loop: start=0, step=1, limit=4
    $region2: #{tpu_custom_call.1} parent=1 // loop_pre_header
      _
    $region3: #{tpu_custom_call.1} parent=1 // loop_header
      %s25 = sphi 0, %s29
      %p26 = scmp.ge.s32.totalorder %s25, 4
      %s35 = sphi 0, %s37
      %s38 = sphi 0, %s35
      %s39 = sphi 0, %s38
      %s55 = sphi 0, %s39
      %s59 = sphi 0, %s59
      %s61 = sphi 0, %s59
      %s62 = sphi 0, %s61
      %s76 = sphi 0, %s62
      %s80 = sphi 0, %s80
      %s82 = sphi 0, %s80
      %s83 = sphi 0, %s82
      %s97 = sphi 0, %s83
      %s101 = sphi 0, %s101
      %s103 = sphi 0, %s101
      %s104 = sphi 0, %s103
      %s118 = sphi 0, %s104
      %s122 = sphi 0, %s122
      %s124 = sphi 0, %s122
      %s125 = sphi 0, %s124
      %s139 = sphi 0, %s125
      %s143 = sphi 0, %s143
      %s145 = sphi 0, %s143
      %s146 = sphi 0, %s145
      %s160 = sphi 0, %s146
      %s164 = sphi 0, %s164
      %s166 = sphi 0, %s164
      %s167 = sphi 0, %s166
      %s181 = sphi 0, %s167
      %s185 = sphi 0, %s185
      %s187 = sphi 0, %s185
      %s188 = sphi 0, %s187
      %s202 = sphi 0, %s188
      %s208 = sphi 0, %s210
      %s211 = sphi 0, %s208
      %s212 = sphi 0, %s211
      %s228 = sphi 0, %s212
    $region4: #{tpu_custom_call.1} parent=1 // loop_header_branch
      %28 = sbr.rel (%p26) target = $region8
    $region5: #{tpu_custom_call.1} parent=1 // loop_body
      %s30 = ssub.s32 %s25, 1
      %s31 = ssub.s32 %s25, 2
      %s32 = sadd.s32 %s25, 1
      %s33 = ssub.s32 %s25, %s32
      %p34 = scmp.eq.s32.totalorder %s33, 0
      %s36 = sadd.s32 %s35, 1
      %s37 = scalar_select %p34, %s35, %s36
      %p40 = pneg %p34
      %p41 = scmp.eq.s32.totalorder %s25, 1
      %p42 = por %p40, %p41
      %p43 = scmp.ne.s32.totalorder %s35, %s38
      %p44 = scmp.eq.s32.totalorder %s25, 0
      %p45 = por %p43, %p44
      %p46 = scmp.ne.s32.totalorder %s35, %s38
      %p47 = scmp.eq.s32.totalorder %s30, 1
      %p48 = por %p46, %p47
      %p49 = scmp.ne.s32.totalorder %s38, %s39
      %p50 = scmp.eq.s32.totalorder %s30, 0
      %p51 = por %p49, %p50
      %p52 = scmp.ne.s32.totalorder %s38, %s39
      %p53 = scmp.eq.s32.totalorder %s31, 1
      %p54 = por %p52, %p53
      %p56 = scmp.ne.s32.totalorder %s39, %s55
      %p57 = scmp.eq.s32.totalorder %s31, 0
      %p58 = por %p56, %p57
      %s60 = sadd.s32 %s59, 1
      %p63 = scmp.eq.s32.totalorder %s25, 1
      %p64 = scmp.ne.s32.totalorder %s59, %s61
      %p65 = scmp.eq.s32.totalorder %s25, 0
      %p66 = por %p64, %p65
      %p67 = scmp.ne.s32.totalorder %s59, %s61
      %p68 = scmp.eq.s32.totalorder %s30, 1
      %p69 = por %p67, %p68
      %p70 = scmp.ne.s32.totalorder %s61, %s62
      %p71 = scmp.eq.s32.totalorder %s30, 0
      %p72 = por %p70, %p71
      %p73 = scmp.ne.s32.totalorder %s61, %s62
      %p74 = scmp.eq.s32.totalorder %s31, 1
      %p75 = por %p73, %p74
      %p77 = scmp.ne.s32.totalorder %s62, %s76
      %p78 = scmp.eq.s32.totalorder %s31, 0
      %p79 = por %p77, %p78
      %s81 = sadd.s32 %s80, 1
      %p84 = scmp.eq.s32.totalorder %s25, 1
      %p85 = scmp.ne.s32.totalorder %s80, %s82
      %p86 = scmp.eq.s32.totalorder %s25, 0
      %p87 = por %p85, %p86
      %p88 = scmp.ne.s32.totalorder %s80, %s82
      %p89 = scmp.eq.s32.totalorder %s30, 1
      %p90 = por %p88, %p89
      %p91 = scmp.ne.s32.totalorder %s82, %s83
      %p92 = scmp.eq.s32.totalorder %s30, 0
      %p93 = por %p91, %p92
      %p94 = scmp.ne.s32.totalorder %s82, %s83
      %p95 = scmp.eq.s32.totalorder %s31, 1
      %p96 = por %p94, %p95
      %p98 = scmp.ne.s32.totalorder %s83, %s97
      %p99 = scmp.eq.s32.totalorder %s31, 0
      %p100 = por %p98, %p99
      %s102 = sadd.s32 %s101, 1
      %p105 = scmp.eq.s32.totalorder %s25, 1
      %p106 = scmp.ne.s32.totalorder %s101, %s103
      %p107 = scmp.eq.s32.totalorder %s25, 0
      %p108 = por %p106, %p107
      %p109 = scmp.ne.s32.totalorder %s101, %s103
      %p110 = scmp.eq.s32.totalorder %s30, 1
      %p111 = por %p109, %p110
      %p112 = scmp.ne.s32.totalorder %s103, %s104
      %p113 = scmp.eq.s32.totalorder %s30, 0
      %p114 = por %p112, %p113
      %p115 = scmp.ne.s32.totalorder %s103, %s104
      %p116 = scmp.eq.s32.totalorder %s31, 1
      %p117 = por %p115, %p116
      %p119 = scmp.ne.s32.totalorder %s104, %s118
      %p120 = scmp.eq.s32.totalorder %s31, 0
      %p121 = por %p119, %p120
      %s123 = sadd.s32 %s122, 1
      %p126 = scmp.eq.s32.totalorder %s25, 1
      %p127 = scmp.ne.s32.totalorder %s122, %s124
      %p128 = scmp.eq.s32.totalorder %s25, 0
      %p129 = por %p127, %p128
      %p130 = scmp.ne.s32.totalorder %s122, %s124
      %p131 = scmp.eq.s32.totalorder %s30, 1
      %p132 = por %p130, %p131
      %p133 = scmp.ne.s32.totalorder %s124, %s125
      %p134 = scmp.eq.s32.totalorder %s30, 0
      %p135 = por %p133, %p134
      %p136 = scmp.ne.s32.totalorder %s124, %s125
      %p137 = scmp.eq.s32.totalorder %s31, 1
      %p138 = por %p136, %p137
      %p140 = scmp.ne.s32.totalorder %s125, %s139
      %p141 = scmp.eq.s32.totalorder %s31, 0
      %p142 = por %p140, %p141
      %s144 = sadd.s32 %s143, 1
      %p147 = scmp.eq.s32.totalorder %s25, 1
      %p148 = scmp.ne.s32.totalorder %s143, %s145
      %p149 = scmp.eq.s32.totalorder %s25, 0
      %p150 = por %p148, %p149
      %p151 = scmp.ne.s32.totalorder %s143, %s145
      %p152 = scmp.eq.s32.totalorder %s30, 1
      %p153 = por %p151, %p152
      %p154 = scmp.ne.s32.totalorder %s145, %s146
      %p155 = scmp.eq.s32.totalorder %s30, 0
      %p156 = por %p154, %p155
      %p157 = scmp.ne.s32.totalorder %s145, %s146
      %p158 = scmp.eq.s32.totalorder %s31, 1
      %p159 = por %p157, %p158
      %p161 = scmp.ne.s32.totalorder %s146, %s160
      %p162 = scmp.eq.s32.totalorder %s31, 0
      %p163 = por %p161, %p162
      %s165 = sadd.s32 %s164, 1
      %p168 = scmp.eq.s32.totalorder %s25, 1
      %p169 = scmp.ne.s32.totalorder %s164, %s166
      %p170 = scmp.eq.s32.totalorder %s25, 0
      %p171 = por %p169, %p170
      %p172 = scmp.ne.s32.totalorder %s164, %s166
      %p173 = scmp.eq.s32.totalorder %s30, 1
      %p174 = por %p172, %p173
      %p175 = scmp.ne.s32.totalorder %s166, %s167
      %p176 = scmp.eq.s32.totalorder %s30, 0
      %p177 = por %p175, %p176
      %p178 = scmp.ne.s32.totalorder %s166, %s167
      %p179 = scmp.eq.s32.totalorder %s31, 1
      %p180 = por %p178, %p179
      %p182 = scmp.ne.s32.totalorder %s167, %s181
      %p183 = scmp.eq.s32.totalorder %s31, 0
      %p184 = por %p182, %p183
      %s186 = sadd.s32 %s185, 1
      %p189 = scmp.eq.s32.totalorder %s25, 1
      %p190 = scmp.ne.s32.totalorder %s185, %s187
      %p191 = scmp.eq.s32.totalorder %s25, 0
      %p192 = por %p190, %p191
      %p193 = scmp.ne.s32.totalorder %s185, %s187
      %p194 = scmp.eq.s32.totalorder %s30, 1
      %p195 = por %p193, %p194
      %p196 = scmp.ne.s32.totalorder %s187, %s188
      %p197 = scmp.eq.s32.totalorder %s30, 0
      %p198 = por %p196, %p197
      %p199 = scmp.ne.s32.totalorder %s187, %s188
      %p200 = scmp.eq.s32.totalorder %s31, 1
      %p201 = por %p199, %p200
      %p203 = scmp.ne.s32.totalorder %s188, %s202
      %p204 = scmp.eq.s32.totalorder %s31, 0
      %p205 = por %p203, %p204
      %s206 = ssub.s32 %s25, %s32
      %p207 = scmp.eq.s32.totalorder %s206, 0
      %s209 = sadd.s32 %s208, 1
      %s210 = scalar_select %p207, %s208, %s209
      %p213 = pneg %p207
      %p214 = scmp.eq.s32.totalorder %s25, 1
      %p215 = por %p213, %p214
      %p216 = scmp.ne.s32.totalorder %s208, %s211
      %p217 = scmp.eq.s32.totalorder %s25, 0
      %p218 = por %p216, %p217
      %p219 = scmp.ne.s32.totalorder %s208, %s211
      %p220 = scmp.eq.s32.totalorder %s30, 1
      %p221 = por %p219, %p220
      %p222 = scmp.ne.s32.totalorder %s211, %s212
      %p223 = scmp.eq.s32.totalorder %s30, 0
      %p224 = por %p222, %p223
      %p225 = scmp.ne.s32.totalorder %s211, %s212
      %p226 = scmp.eq.s32.totalorder %s31, 1
      %p227 = por %p225, %p226
      %p229 = scmp.ne.s32.totalorder %s212, %s228
      %p230 = scmp.eq.s32.totalorder %s31, 0
      %p231 = por %p229, %p230
      %p232 = scmp.le.s32.totalorder 1, %s25
      %p233 = scmp.lt.s32.totalorder %s25, 3
      %p234 = pnand %p232, %p233
      %p235 = pneg %p234
      // Predicated region
      $region9: #{tpu_custom_call.1} parent=5 // pred_check
        _
      $region10: #{tpu_custom_call.1} parent=5 // pred_check_branch
        %237 = sbr.rel (%p234) target = $region12
      $region11: #{tpu_custom_call.1} parent=5 // pred_region
        %s238 = ssub.s32 %s25, 1
        // Predicated region
        $region13: #{tpu_custom_call.1} parent=11 // pred_check
          %p239 = pneg %p72
        $region14: #{tpu_custom_call.1} parent=11 // pred_check_branch
          %241 = sbr.rel (%p239) target = $region16
        $region15: #{tpu_custom_call.1} parent=11 // pred_region
          %s243 = ssub.s32 16, 16
          %244 = vsyncadd [#allocation6], %s243
          %s246 = sshll.u32 %s1, 4
          %s247 = int_to_ptr.vmem [resolvable:$true] %s246
          %249 = dma.vmem_to_smem %s247, 16, [#allocation7], [#allocation6]
        $region16: #{tpu_custom_call.1} parent=11 // pred_fallthru
          _
        // Predicated region
        $region17: #{tpu_custom_call.1} parent=11 // pred_check
          %p250 = pneg %p93
        $region18: #{tpu_custom_call.1} parent=11 // pred_check_branch
          %252 = sbr.rel (%p250) target = $region20
        $region19: #{tpu_custom_call.1} parent=11 // pred_region
          %s254 = ssub.s32 16, 16
          %255 = vsyncadd [#allocation9], %s254
          %s257 = sshll.u32 %s2, 4
          %s258 = int_to_ptr.vmem [resolvable:$true] %s257
          %260 = dma.vmem_to_smem %s258, 16, [#allocation8], [#allocation9]
        $region20: #{tpu_custom_call.1} parent=11 // pred_fallthru
          _
        // Predicated region
        $region21: #{tpu_custom_call.1} parent=11 // pred_check
          %p261 = pneg %p114
        $region22: #{tpu_custom_call.1} parent=11 // pred_check_branch
          %263 = sbr.rel (%p261) target = $region24
        $region23: #{tpu_custom_call.1} parent=11 // pred_region
          %s265 = ssub.s32 32, 32
          %266 = vsyncadd [#allocation9], %s265
          %s268 = sshll.u32 %s3, 4
          %s269 = int_to_ptr.vmem [resolvable:$true] %s268
          %271 = dma.vmem_to_smem %s269, 32, [#allocation10], [#allocation9]
        $region24: #{tpu_custom_call.1} parent=11 // pred_fallthru
          _
        // Predicated region
        $region25: #{tpu_custom_call.1} parent=11 // pred_check
          %p272 = pneg %p135
        $region26: #{tpu_custom_call.1} parent=11 // pred_check_branch
          %274 = sbr.rel (%p272) target = $region28
        $region27: #{tpu_custom_call.1} parent=11 // pred_region
          %s276 = ssub.s32 16, 16
          %277 = vsyncadd [#allocation12], %s276
          %s279 = sshll.u32 %s4, 4
          %s280 = int_to_ptr.vmem [resolvable:$true] %s279
          %282 = dma.vmem_to_smem %s280, 16, [#allocation11], [#allocation12]
        $region28: #{tpu_custom_call.1} parent=11 // pred_fallthru
          _
        // Predicated region
        $region29: #{tpu_custom_call.1} parent=11 // pred_check
          %p283 = pneg %p156
        $region30: #{tpu_custom_call.1} parent=11 // pred_check_branch
          %285 = sbr.rel (%p283) target = $region32
        $region31: #{tpu_custom_call.1} parent=11 // pred_region
          %s287 = ssub.s32 16, 16
          %288 = vsyncadd [#allocation12], %s287
          %s290 = sshll.u32 %s5, 4
          %s291 = int_to_ptr.vmem [resolvable:$true] %s290
          %293 = dma.vmem_to_smem %s291, 16, [#allocation13], [#allocation12]
        $region32: #{tpu_custom_call.1} parent=11 // pred_fallthru
          _
        // Predicated region
        $region33: #{tpu_custom_call.1} parent=11 // pred_check
          %p294 = pneg %p177
        $region34: #{tpu_custom_call.1} parent=11 // pred_check_branch
          %296 = sbr.rel (%p294) target = $region36
        $region35: #{tpu_custom_call.1} parent=11 // pred_region
          %s298 = ssub.s32 16, 16
          %299 = vsyncadd [#allocation15], %s298
          %s301 = sshll.u32 %s6, 4
          %s302 = int_to_ptr.vmem [resolvable:$true] %s301
          %304 = dma.vmem_to_smem %s302, 16, [#allocation14], [#allocation15]
        $region36: #{tpu_custom_call.1} parent=11 // pred_fallthru
          _
        // Predicated region
        $region37: #{tpu_custom_call.1} parent=11 // pred_check
          %p305 = pneg %p198
        $region38: #{tpu_custom_call.1} parent=11 // pred_check_branch
          %307 = sbr.rel (%p305) target = $region40
        $region39: #{tpu_custom_call.1} parent=11 // pred_region
          _
        $region40: #{tpu_custom_call.1} parent=11 // pred_fallthru
          _
      $region12: #{tpu_custom_call.1} parent=5 // pred_fallthru
        _
      %p308 = scmp.lt.s32.totalorder %s25, 2
      // Predicated region
      $region41: #{tpu_custom_call.1} parent=5 // pred_check
        %p309 = pneg %p308
      $region42: #{tpu_custom_call.1} parent=5 // pred_check_branch
        %311 = sbr.rel (%p309) target = $region44
      $region43: #{tpu_custom_call.1} parent=5 // pred_region
        // Predicated region
        $region45: #{tpu_custom_call.1} parent=43 // pred_check
          %p312 = pneg %p45
        $region46: #{tpu_custom_call.1} parent=43 // pred_check_branch
          %314 = sbr.rel (%p312) target = $region48
        $region47: #{tpu_custom_call.1} parent=43 // pred_region
          %s315 = sand.u32 %s35, 1
          %s316 = scalar_lea.sflag [#allocation4], %s315
          %s317 = sand.u32 %s35, 1
          %s318 = smul.addr %s317, 16
          %s319 = scalar_lea.vmem [#allocation3], %s318
          %s321 = ssub.s32 256, 256
          %322 = vsyncadd %s316, %s321
          %s323 = smul.addr %s25, 2
          %s324 = smul.addr %s323, 128
          %s325 = scalar_lea.hbm %s0, %s324
          %s326 = sshll.u32 %s319, 4
          %s327 = int_to_ptr.vmem [resolvable:$true] %s326
          %332 = dma.hbm_to_vmem [thread:$0]  %s325, 256, %s327, %s316, 128, 128, 8
        $region48: #{tpu_custom_call.1} parent=43 // pred_fallthru
          _
      $region44: #{tpu_custom_call.1} parent=5 // pred_fallthru
        _
      %p333 = scmp.le.s32.totalorder 1, %s25
      %p334 = scmp.lt.s32.totalorder %s25, 3
      %p335 = pnand %p333, %p334
      %p336 = pneg %p335
      // Predicated region
      $region49: #{tpu_custom_call.1} parent=5 // pred_check
        _
      $region50: #{tpu_custom_call.1} parent=5 // pred_check_branch
        %338 = sbr.rel (%p335) target = $region52
      $region51: #{tpu_custom_call.1} parent=5 // pred_region
        %s339 = ssub.s32 %s25, 1
        %s340 = sand.u32 %s38, 1
        %s341 = scalar_lea.sflag [#allocation4], %s340
        %s342 = sand.u32 %s38, 1
        %s343 = smul.addr %s342, 16
        %s344 = scalar_lea.vmem [#allocation3], %s343
        // Predicated region
        $region53: #{tpu_custom_call.1} parent=51 // pred_check
          %p345 = pneg %p51
        $region54: #{tpu_custom_call.1} parent=51 // pred_check_branch
          %347 = sbr.rel (%p345) target = $region56
        $region55: #{tpu_custom_call.1} parent=51 // pred_region
          %348 = dma.done %s341, 256
        $region56: #{tpu_custom_call.1} parent=51 // pred_fallthru
          _
        // Predicated region
        $region57: #{tpu_custom_call.1} parent=51 // pred_check
          %p349 = pneg %p72
        $region58: #{tpu_custom_call.1} parent=51 // pred_check_branch
          %351 = sbr.rel (%p349) target = $region60
        $region59: #{tpu_custom_call.1} parent=51 // pred_region
          %352 = dma.done [#allocation6], 16
        $region60: #{tpu_custom_call.1} parent=51 // pred_fallthru
          _
        // Predicated region
        $region61: #{tpu_custom_call.1} parent=51 // pred_check
          %p353 = pneg %p93
        $region62: #{tpu_custom_call.1} parent=51 // pred_check_branch
          %355 = sbr.rel (%p353) target = $region64
        $region63: #{tpu_custom_call.1} parent=51 // pred_region
          %356 = dma.done [#allocation9], 16
        $region64: #{tpu_custom_call.1} parent=51 // pred_fallthru
          _
        // Predicated region
        $region65: #{tpu_custom_call.1} parent=51 // pred_check
          %p357 = pneg %p114
        $region66: #{tpu_custom_call.1} parent=51 // pred_check_branch
          %359 = sbr.rel (%p357) target = $region68
        $region67: #{tpu_custom_call.1} parent=51 // pred_region
          %360 = dma.done [#allocation9], 32
        $region68: #{tpu_custom_call.1} parent=51 // pred_fallthru
          _
        // Predicated region
        $region69: #{tpu_custom_call.1} parent=51 // pred_check
          %p361 = pneg %p135
        $region70: #{tpu_custom_call.1} parent=51 // pred_check_branch
          %363 = sbr.rel (%p361) target = $region72
        $region71: #{tpu_custom_call.1} parent=51 // pred_region
          %364 = dma.done [#allocation12], 16
        $region72: #{tpu_custom_call.1} parent=51 // pred_fallthru
          _
        // Predicated region
        $region73: #{tpu_custom_call.1} parent=51 // pred_check
          %p365 = pneg %p156
        $region74: #{tpu_custom_call.1} parent=51 // pred_check_branch
          %367 = sbr.rel (%p365) target = $region76
        $region75: #{tpu_custom_call.1} parent=51 // pred_region
          %368 = dma.done [#allocation12], 16
        $region76: #{tpu_custom_call.1} parent=51 // pred_fallthru
          _
        // Predicated region
        $region77: #{tpu_custom_call.1} parent=51 // pred_check
          %p369 = pneg %p177
        $region78: #{tpu_custom_call.1} parent=51 // pred_check_branch
          %371 = sbr.rel (%p369) target = $region80
        $region79: #{tpu_custom_call.1} parent=51 // pred_region
          %372 = dma.done [#allocation15], 16
        $region80: #{tpu_custom_call.1} parent=51 // pred_fallthru
          _
        %373 = sfence
        %s374 = sand.u32 %s38, 1
        %s375 = scalar_lea.sflag [#allocation4], %s374
        %s376 = sand.u32 %s38, 1
        %s377 = smul.addr %s376, 16
        %s378 = scalar_lea.vmem [#allocation3], %s377
        %p379 = pneg %p51
        %p380 = pneg %p48
        %p381 = pneg %p72
        %p382 = pneg %p69
        %p383 = pneg %p93
        %p384 = pneg %p90
        %p385 = pneg %p114
        %p386 = pneg %p111
        %p387 = pneg %p135
        %p388 = pneg %p132
        %p389 = pneg %p156
        %p390 = pneg %p153
        %p391 = pneg %p177
        %p392 = pneg %p174
        %p393 = pneg %p198
        %p394 = pneg %p195
        %p395 = pneg %p224
        %p396 = pneg %p221
        %s397 = sand.u32 %s211, 1
        %s398 = scalar_lea.sflag [#allocation5], %s397
        %s399 = sand.u32 %s211, 1
        %s400 = smul.addr %s399, 16
        %s401 = scalar_lea.vmem [#allocation16], %s400
        %v402 = vld [vmem:[%s344] sm:$0xff]
        %v403 = vld [vmem:[%s344 + $0x8] sm:$0xff]
        %v404 = vlaneseq
        %v405 = vshrl.u32 %v404, 7
        %v406 = vadd.s32 %v405, 8
        %v407 = vlaneseq
        %v408 = vand.u32 %v407, 127
        %vm409 = vcmp.lt.s32.totalorder %v408, 0
        %v410 = vsub.s32 0, %v408
        %v411 = vsel %vm409, %v410, %v408
        %v412 = vshrl.u32 %v411, 4
        %v413 = vand.u32 %v411, 15
        %v414 = vsub.s32 0, %v413
        %v415 = vsel %vm409, %v414, %v413
        %vm416 = vcmp.ne.s32.totalorder %v415, 0
        %vm417 = vcmp.lt.s32.totalorder %v415, 0
        %vm418 = vmand %vm417, %vm416
        %v419 = vadd.s32 %v415, 16
        %v420 = vsel %vm418, %v419, %v415
        %vm421 = vcmp.ge.s32.totalorder %v405, 1
        %vm422 = vcmp.ge.s32.totalorder %v406, 1
        %vm423 = vcmp.le.s32.totalorder %v405, 14
        %vm424 = vcmp.le.s32.totalorder %v406, 14
        %vm425 = vcmp.ge.s32.totalorder %v420, 1
        %vm426 = vcmp.le.s32.totalorder %v420, 14
        %s427 = sld [smem:[#allocation7]]
        %s428 = sld [smem:[#allocation7 + $0x1]]
        %s429 = sld [smem:[#allocation7 + $0x2]]
        %s430 = sld [smem:[#allocation7 + $0x3]]
        %s431 = sld [smem:[#allocation7 + $0x4]]
        %s432 = sld [smem:[#allocation7 + $0x5]]
        %s433 = sld [smem:[#allocation7 + $0x6]]
        %s434 = sld [smem:[#allocation7 + $0x7]]
        %s435 = sld [smem:[#allocation7 + $0x8]]
        %s436 = sld [smem:[#allocation7 + $0x9]]
        %s437 = sld [smem:[#allocation7 + $0xa]]
        %s438 = sld [smem:[#allocation7 + $0xb]]
        %s439 = sld [smem:[#allocation7 + $0xc]]
        %s440 = sld [smem:[#allocation7 + $0xd]]
        %s441 = sld [smem:[#allocation7 + $0xe]]
        %s442 = sld [smem:[#allocation7 + $0xf]]
        %s443 = sld [smem:[#allocation7 + $0x10]]
        %s444 = sld [smem:[#allocation7 + $0x11]]
        %s445 = sld [smem:[#allocation7 + $0x12]]
        %s446 = sld [smem:[#allocation7 + $0x13]]
        %s447 = sld [smem:[#allocation7 + $0x14]]
        %s448 = sld [smem:[#allocation7 + $0x15]]
        %s449 = sld [smem:[#allocation7 + $0x16]]
        %s450 = sld [smem:[#allocation7 + $0x17]]
        %s451 = sld [smem:[#allocation7 + $0x18]]
        %s452 = sld [smem:[#allocation7 + $0x19]]
        %s453 = sld [smem:[#allocation7 + $0x1a]]
        %s454 = sld [smem:[#allocation7 + $0x1b]]
        %s455 = sld [smem:[#allocation7 + $0x1c]]
        %s456 = sld [smem:[#allocation7 + $0x1d]]
        %s457 = sld [smem:[#allocation7 + $0x1e]]
        %s458 = sld [smem:[#allocation7 + $0x1f]]
        %s459 = sld [smem:[#allocation7 + $0x20]]
        %s460 = sld [smem:[#allocation7 + $0x21]]
        %s461 = sld [smem:[#allocation7 + $0x22]]
        %s462 = sld [smem:[#allocation7 + $0x23]]
        %s463 = sld [smem:[#allocation8]]
        %s464 = sld [smem:[#allocation8 + $0x1]]
        %s465 = sld [smem:[#allocation8 + $0x2]]
        %s466 = sld [smem:[#allocation8 + $0x3]]
        %s467 = sld [smem:[#allocation10]]
        %s468 = sld [smem:[#allocation10 + $0x1]]
        %s469 = sld [smem:[#allocation10 + $0x2]]
        %s470 = sld [smem:[#allocation10 + $0x3]]
        %s471 = sld [smem:[#allocation10 + $0x4]]
        %s472 = sld [smem:[#allocation10 + $0x5]]
        %s473 = sld [smem:[#allocation10 + $0x6]]
        %s474 = sld [smem:[#allocation10 + $0x7]]
        %s475 = sld [smem:[#allocation10 + $0x8]]
        %s476 = sld [smem:[#allocation10 + $0x9]]
        %s477 = sld [smem:[#allocation10 + $0xa]]
        %s478 = sld [smem:[#allocation10 + $0xb]]
        %s479 = sld [smem:[#allocation10 + $0xc]]
        %s480 = sld [smem:[#allocation10 + $0xd]]
        %s481 = sld [smem:[#allocation10 + $0xe]]
        %s482 = sld [smem:[#allocation10 + $0xf]]
        %s483 = sld [smem:[#allocation10 + $0x10]]
        %s484 = sld [smem:[#allocation10 + $0x11]]
        %s485 = sld [smem:[#allocation10 + $0x12]]
        %s486 = sld [smem:[#allocation10 + $0x13]]
        %s487 = sld [smem:[#allocation10 + $0x14]]
        %s488 = sld [smem:[#allocation10 + $0x15]]
        %s489 = sld [smem:[#allocation10 + $0x16]]
        %s490 = sld [smem:[#allocation10 + $0x17]]
        %s491 = sld [smem:[#allocation10 + $0x18]]
        %s492 = sld [smem:[#allocation10 + $0x19]]
        %s493 = sld [smem:[#allocation10 + $0x1a]]
        %s494 = sld [smem:[#allocation10 + $0x1b]]
        %s495 = sld [smem:[#allocation10 + $0x1c]]
        %s496 = sld [smem:[#allocation10 + $0x1d]]
        %s497 = sld [smem:[#allocation10 + $0x1e]]
        %s498 = sld [smem:[#allocation10 + $0x1f]]
        %s499 = sld [smem:[#allocation10 + $0x20]]
        %s500 = sld [smem:[#allocation10 + $0x21]]
        %s501 = sld [smem:[#allocation10 + $0x22]]
        %s502 = sld [smem:[#allocation10 + $0x23]]
        %s503 = sld [smem:[#allocation10 + $0x24]]
        %s504 = sld [smem:[#allocation10 + $0x25]]
        %s505 = sld [smem:[#allocation10 + $0x26]]
        %s506 = sld [smem:[#allocation10 + $0x27]]
        %s507 = sld [smem:[#allocation10 + $0x28]]
        %s508 = sld [smem:[#allocation10 + $0x29]]
        %s509 = sld [smem:[#allocation10 + $0x2a]]
        %s510 = sld [smem:[#allocation10 + $0x2b]]
        %s511 = sld [smem:[#allocation10 + $0x2c]]
        %s512 = sld [smem:[#allocation10 + $0x2d]]
        %s513 = sld [smem:[#allocation10 + $0x2e]]
        %s514 = sld [smem:[#allocation10 + $0x2f]]
        %s515 = sld [smem:[#allocation10 + $0x30]]
        %s516 = sld [smem:[#allocation10 + $0x31]]
        %s517 = sld [smem:[#allocation10 + $0x32]]
        %s518 = sld [smem:[#allocation10 + $0x33]]
        %s519 = sld [smem:[#allocation10 + $0x34]]
        %s520 = sld [smem:[#allocation10 + $0x35]]
        %s521 = sld [smem:[#allocation10 + $0x36]]
        %s522 = sld [smem:[#allocation10 + $0x37]]
        %s523 = sld [smem:[#allocation10 + $0x38]]
        %s524 = sld [smem:[#allocation10 + $0x39]]
        %s525 = sld [smem:[#allocation10 + $0x3a]]
        %s526 = sld [smem:[#allocation10 + $0x3b]]
        %s527 = sld [smem:[#allocation10 + $0x3c]]
        %s528 = sld [smem:[#allocation10 + $0x3d]]
        %s529 = sld [smem:[#allocation10 + $0x3e]]
        %s530 = sld [smem:[#allocation10 + $0x3f]]
        %s531 = sld [smem:[#allocation10 + $0x40]]
        %s532 = sld [smem:[#allocation10 + $0x41]]
        %s533 = sld [smem:[#allocation10 + $0x42]]
        %s534 = sld [smem:[#allocation10 + $0x43]]
        %s535 = sld [smem:[#allocation10 + $0x44]]
        %s536 = sld [smem:[#allocation10 + $0x45]]
        %s537 = sld [smem:[#allocation10 + $0x46]]
        %s538 = sld [smem:[#allocation10 + $0x47]]
        %s539 = sld [smem:[#allocation10 + $0x48]]
        %s540 = sld [smem:[#allocation10 + $0x49]]
        %s541 = sld [smem:[#allocation10 + $0x4a]]
        %s542 = sld [smem:[#allocation10 + $0x4b]]
        %s543 = sld [smem:[#allocation10 + $0x4c]]
        %s544 = sld [smem:[#allocation10 + $0x4d]]
        %s545 = sld [smem:[#allocation10 + $0x4e]]
        %s546 = sld [smem:[#allocation10 + $0x4f]]
        %s547 = sld [smem:[#allocation10 + $0x50]]
        %s548 = sld [smem:[#allocation10 + $0x51]]
        %s549 = sld [smem:[#allocation10 + $0x52]]
        %s550 = sld [smem:[#allocation10 + $0x53]]
        %s551 = sld [smem:[#allocation10 + $0x54]]
        %s552 = sld [smem:[#allocation10 + $0x55]]
        %s553 = sld [smem:[#allocation10 + $0x56]]
        %s554 = sld [smem:[#allocation10 + $0x57]]
        %s555 = sld [smem:[#allocation10 + $0x58]]
        %s556 = sld [smem:[#allocation10 + $0x59]]
        %s557 = sld [smem:[#allocation10 + $0x5a]]
        %s558 = sld [smem:[#allocation10 + $0x5b]]
        %s559 = sld [smem:[#allocation10 + $0x5c]]
        %s560 = sld [smem:[#allocation10 + $0x5d]]
        %s561 = sld [smem:[#allocation10 + $0x5e]]
        %s562 = sld [smem:[#allocation10 + $0x5f]]
        %s563 = sld [smem:[#allocation10 + $0x60]]
        %s564 = sld [smem:[#allocation10 + $0x61]]
        %s565 = sld [smem:[#allocation10 + $0x62]]
        %s566 = sld [smem:[#allocation10 + $0x63]]
        %s567 = sld [smem:[#allocation10 + $0x64]]
        %s568 = sld [smem:[#allocation10 + $0x65]]
        %s569 = sld [smem:[#allocation10 + $0x66]]
        %s570 = sld [smem:[#allocation10 + $0x67]]
        %s571 = sld [smem:[#allocation10 + $0x68]]
        %s572 = sld [smem:[#allocation10 + $0x69]]
        %s573 = sld [smem:[#allocation10 + $0x6a]]
        %s574 = sld [smem:[#allocation10 + $0x6b]]
        %s575 = sld [smem:[#allocation10 + $0x6c]]
        %s576 = sld [smem:[#allocation10 + $0x6d]]
        %s577 = sld [smem:[#allocation10 + $0x6e]]
        %s578 = sld [smem:[#allocation10 + $0x6f]]
        %s579 = sld [smem:[#allocation10 + $0x70]]
        %s580 = sld [smem:[#allocation10 + $0x71]]
        %s581 = sld [smem:[#allocation10 + $0x72]]
        %s582 = sld [smem:[#allocation10 + $0x73]]
        %s583 = sld [smem:[#allocation10 + $0x74]]
        %s584 = sld [smem:[#allocation10 + $0x75]]
        %s585 = sld [smem:[#allocation10 + $0x76]]
        %s586 = sld [smem:[#allocation10 + $0x77]]
        %s587 = sld [smem:[#allocation10 + $0x78]]
        %s588 = sld [smem:[#allocation10 + $0x79]]
        %s589 = sld [smem:[#allocation10 + $0x7a]]
        %s590 = sld [smem:[#allocation10 + $0x7b]]
        %s591 = sld [smem:[#allocation10 + $0x7c]]
        %s592 = sld [smem:[#allocation10 + $0x7d]]
        %s593 = sld [smem:[#allocation10 + $0x7e]]
        %s594 = sld [smem:[#allocation10 + $0x7f]]
        %s595 = sld [smem:[#allocation10 + $0x80]]
        %s596 = sld [smem:[#allocation10 + $0x81]]
        %s597 = sld [smem:[#allocation10 + $0x82]]
        %s598 = sld [smem:[#allocation10 + $0x83]]
        %s599 = sld [smem:[#allocation10 + $0x84]]
        %s600 = sld [smem:[#allocation10 + $0x85]]
        %s601 = sld [smem:[#allocation10 + $0x86]]
        %s602 = sld [smem:[#allocation10 + $0x87]]
        %s603 = sld [smem:[#allocation10 + $0x88]]
        %s604 = sld [smem:[#allocation10 + $0x89]]
        %s605 = sld [smem:[#allocation10 + $0x8a]]
        %s606 = sld [smem:[#allocation10 + $0x8b]]
        %s607 = sld [smem:[#allocation10 + $0x8c]]
        %s608 = sld [smem:[#allocation10 + $0x8d]]
        %s609 = sld [smem:[#allocation10 + $0x8e]]
        %s610 = sld [smem:[#allocation10 + $0x8f]]
        %s611 = sld [smem:[#allocation11]]
        %s612 = sld [smem:[#allocation11 + $0x1]]
        %s613 = sld [smem:[#allocation11 + $0x2]]
        %s614 = sld [smem:[#allocation11 + $0x3]]
        %s615 = sld [smem:[#allocation13]]
        %s616 = sld [smem:[#allocation13 + $0x1]]
        %s617 = sld [smem:[#allocation13 + $0x2]]
        %s618 = sld [smem:[#allocation13 + $0x3]]
        %s619 = sld [smem:[#allocation14]]
        %s620 = sld [smem:[#allocation14 + $0x1]]
        %s621 = sld [smem:[#allocation14 + $0x2]]
        %s622 = sld [smem:[#allocation14 + $0x3]]
        %s623 = sld [smem:[#allocation14 + $0x4]]
        %s624 = sld [smem:[#allocation14 + $0x5]]
        %s625 = sld [smem:[#allocation14 + $0x6]]
        %s626 = sld [smem:[#allocation14 + $0x7]]
        %s627 = sld [smem:[#allocation14 + $0x8]]
        %s628 = sld [smem:[#allocation14 + $0x9]]
        %s629 = sld [smem:[#allocation14 + $0xa]]
        %s630 = sld [smem:[#allocation14 + $0xb]]
        %s631 = sld [smem:[#allocation14 + $0xc]]
        %s632 = sld [smem:[#allocation14 + $0xd]]
        %s633 = sld [smem:[#allocation14 + $0xe]]
        %s634 = sld [smem:[#allocation14 + $0xf]]
        %s635 = sld [smem:[#allocation14 + $0x10]]
        %s636 = sld [smem:[#allocation14 + $0x11]]
        %s637 = sld [smem:[#allocation14 + $0x12]]
        %s638 = sld [smem:[#allocation14 + $0x13]]
        %s639 = sld [smem:[#allocation14 + $0x14]]
        %s640 = sld [smem:[#allocation14 + $0x15]]
        %s641 = sld [smem:[#allocation14 + $0x16]]
        %s642 = sld [smem:[#allocation14 + $0x17]]
        %s643 = sld [smem:[#allocation14 + $0x18]]
        %s644 = sld [smem:[#allocation14 + $0x19]]
        %s645 = sld [smem:[#allocation14 + $0x1a]]
        %s646 = sld [smem:[#allocation14 + $0x1b]]
        %s647 = sld [smem:[#allocation14 + $0x1c]]
        %s648 = sld [smem:[#allocation14 + $0x1d]]
        %s649 = sld [smem:[#allocation14 + $0x1e]]
        %s650 = sld [smem:[#allocation14 + $0x1f]]
        %s651 = sld [smem:[#allocation14 + $0x20]]
        %s652 = sld [smem:[#allocation14 + $0x21]]
        %s653 = sld [smem:[#allocation14 + $0x22]]
        %s654 = sld [smem:[#allocation14 + $0x23]]
        %s655 = sld [smem:[#allocation2]]
        %v656 = vrot.slane %v402, 7
        %v657 = vrot.slane %v403, 7
        %vm658 = vcmp.lt.s32.totalorder %v405, 1
        %v659 = vsel %vm658, %v656, %v657
        %v660 = vsel %vm658, %v657, %v656
        %v661 = vsel %vm421, %v660, 0.0
        %v662 = vsel %vm422, %v659, 0.0
        %663 = vrot.lane.b32.xlu0 %v661, 1
        %v664 = vpop.permute.xlu0 %663
        %665 = vrot.lane.b32.xlu0 %v662, 1
        %v666 = vpop.permute.xlu0 %665
        %v667 = vsel %vm425, %v664, 0.0
        %v668 = vsel %vm425, %v666, 0.0
        %669 = vrot.lane.b32.xlu0 %v661, 127
        %v670 = vpop.permute.xlu0 %669
        %671 = vrot.lane.b32.xlu0 %v662, 127
        %v672 = vpop.permute.xlu0 %671
        %v673 = vsel %vm426, %v670, 0.0
        %v674 = vsel %vm426, %v672, 0.0
        %675 = vrot.lane.b32.xlu0 %v402, 1
        %v676 = vpop.permute.xlu0 %675
        %677 = vrot.lane.b32.xlu0 %v403, 1
        %v678 = vpop.permute.xlu0 %677
        %v679 = vsel %vm425, %v676, 0.0
        %v680 = vsel %vm425, %v678, 0.0
        %681 = vrot.lane.b32.xlu0 %v402, 127
        %v682 = vpop.permute.xlu0 %681
        %683 = vrot.lane.b32.xlu0 %v403, 127
        %v684 = vpop.permute.xlu0 %683
        %v685 = vsel %vm426, %v682, 0.0
        %v686 = vsel %vm426, %v684, 0.0
        %v687 = vrot.slane %v402, 1
        %v688 = vrot.slane %v403, 1
        %vm689 = vcmp.lt.s32.totalorder %v405, 7
        %v690 = vsel %vm689, %v687, %v688
        %v691 = vsel %vm689, %v688, %v687
        %v692 = vsel %vm423, %v690, 0.0
        %v693 = vsel %vm424, %v691, 0.0
        %694 = vrot.lane.b32.xlu0 %v692, 1
        %v695 = vpop.permute.xlu0 %694
        %696 = vrot.lane.b32.xlu0 %v693, 1
        %v697 = vpop.permute.xlu0 %696
        %v698 = vsel %vm425, %v695, 0.0
        %v699 = vsel %vm425, %v697, 0.0
        %700 = vrot.lane.b32.xlu0 %v692, 127
        %v701 = vpop.permute.xlu0 %700
        %702 = vrot.lane.b32.xlu0 %v693, 127
        %v703 = vpop.permute.xlu0 %702
        %v704 = vsel %vm426, %v701, 0.0
        %v705 = vsel %vm426, %v703, 0.0
        %v706 = vstv %s427
        %v707 = vmul.f32 %v706, %v667
        %v708 = vmul.f32 %v706, %v668
        %v709 = vstv %s431
        %v710 = vmul.f32 %v709, %v661
        %v711 = vmul.f32 %v709, %v662
        %v712 = vadd.f32 %v707, %v710
        %v713 = vadd.f32 %v708, %v711
        %v714 = vstv %s435
        %v715 = vmul.f32 %v714, %v673
        %v716 = vmul.f32 %v714, %v674
        %v717 = vadd.f32 %v712, %v715
        %v718 = vadd.f32 %v713, %v716
        %v719 = vstv %s439
        %v720 = vmul.f32 %v719, %v679
        %v721 = vmul.f32 %v719, %v680
        %v722 = vadd.f32 %v717, %v720
        %v723 = vadd.f32 %v718, %v721
        %v724 = vstv %s443
        %v725 = vmul.f32 %v724, %v402
        %v726 = vmul.f32 %v724, %v403
        %v727 = vadd.f32 %v722, %v725
        %v728 = vadd.f32 %v723, %v726
        %v729 = vstv %s447
        %v730 = vmul.f32 %v729, %v685
        %v731 = vmul.f32 %v729, %v686
        %v732 = vadd.f32 %v727, %v730
        %v733 = vadd.f32 %v728, %v731
        %v734 = vstv %s451
        %v735 = vmul.f32 %v734, %v698
        %v736 = vmul.f32 %v734, %v699
        %v737 = vadd.f32 %v732, %v735
        %v738 = vadd.f32 %v733, %v736
        %v739 = vstv %s455
        %v740 = vmul.f32 %v739, %v692
        %v741 = vmul.f32 %v739, %v693
        %v742 = vadd.f32 %v737, %v740
        %v743 = vadd.f32 %v738, %v741
        %v744 = vstv %s459
        %v745 = vmul.f32 %v744, %v704
        %v746 = vmul.f32 %v744, %v705
        %v747 = vadd.f32 %v742, %v745
        %v748 = vadd.f32 %v743, %v746
        %v749 = vstv %s463
        %v750 = vadd.f32 %v747, %v749
        %v751 = vadd.f32 %v748, %v749
        %v752 = vmax.f32 %v750, 0.0
        %v753 = vmax.f32 %v751, 0.0
        %v754 = vstv %s428
        %v755 = vmul.f32 %v754, %v667
        %v756 = vmul.f32 %v754, %v668
        %v757 = vstv %s432
        %v758 = vmul.f32 %v757, %v661
        %v759 = vmul.f32 %v757, %v662
        %v760 = vadd.f32 %v755, %v758
        %v761 = vadd.f32 %v756, %v759
        %v762 = vstv %s436
        %v763 = vmul.f32 %v762, %v673
        %v764 = vmul.f32 %v762, %v674
        %v765 = vadd.f32 %v760, %v763
        %v766 = vadd.f32 %v761, %v764
        %v767 = vstv %s440
        %v768 = vmul.f32 %v767, %v679
        %v769 = vmul.f32 %v767, %v680
        %v770 = vadd.f32 %v765, %v768
        %v771 = vadd.f32 %v766, %v769
        %v772 = vstv %s444
        %v773 = vmul.f32 %v772, %v402
        %v774 = vmul.f32 %v772, %v403
        %v775 = vadd.f32 %v770, %v773
        %v776 = vadd.f32 %v771, %v774
        %v777 = vstv %s448
        %v778 = vmul.f32 %v777, %v685
        %v779 = vmul.f32 %v777, %v686
        %v780 = vadd.f32 %v775, %v778
        %v781 = vadd.f32 %v776, %v779
        %v782 = vstv %s452
        %v783 = vmul.f32 %v782, %v698
        %v784 = vmul.f32 %v782, %v699
        %v785 = vadd.f32 %v780, %v783
        %v786 = vadd.f32 %v781, %v784
        %v787 = vstv %s456
        %v788 = vmul.f32 %v787, %v692
        %v789 = vmul.f32 %v787, %v693
        %v790 = vadd.f32 %v785, %v788
        %v791 = vadd.f32 %v786, %v789
        %v792 = vstv %s460
        %v793 = vmul.f32 %v792, %v704
        %v794 = vmul.f32 %v792, %v705
        %v795 = vadd.f32 %v790, %v793
        %v796 = vadd.f32 %v791, %v794
        %v797 = vstv %s464
        %v798 = vadd.f32 %v795, %v797
        %v799 = vadd.f32 %v796, %v797
        %v800 = vmax.f32 %v798, 0.0
        %v801 = vmax.f32 %v799, 0.0
        %v802 = vstv %s429
        %v803 = vmul.f32 %v802, %v667
        %v804 = vmul.f32 %v802, %v668
        %v805 = vstv %s433
        %v806 = vmul.f32 %v805, %v661
        %v807 = vmul.f32 %v805, %v662
        %v808 = vadd.f32 %v803, %v806
        %v809 = vadd.f32 %v804, %v807
        %v810 = vstv %s437
        %v811 = vmul.f32 %v810, %v673
        %v812 = vmul.f32 %v810, %v674
        %v813 = vadd.f32 %v808, %v811
        %v814 = vadd.f32 %v809, %v812
        %v815 = vstv %s441
        %v816 = vmul.f32 %v815, %v679
        %v817 = vmul.f32 %v815, %v680
        %v818 = vadd.f32 %v813, %v816
        %v819 = vadd.f32 %v814, %v817
        %v820 = vstv %s445
        %v821 = vmul.f32 %v820, %v402
        %v822 = vmul.f32 %v820, %v403
        %v823 = vadd.f32 %v818, %v821
        %v824 = vadd.f32 %v819, %v822
        %v825 = vstv %s449
        %v826 = vmul.f32 %v825, %v685
        %v827 = vmul.f32 %v825, %v686
        %v828 = vadd.f32 %v823, %v826
        %v829 = vadd.f32 %v824, %v827
        %v830 = vstv %s453
        %v831 = vmul.f32 %v830, %v698
        %v832 = vmul.f32 %v830, %v699
        %v833 = vadd.f32 %v828, %v831
        %v834 = vadd.f32 %v829, %v832
        %v835 = vstv %s457
        %v836 = vmul.f32 %v835, %v692
        %v837 = vmul.f32 %v835, %v693
        %v838 = vadd.f32 %v833, %v836
        %v839 = vadd.f32 %v834, %v837
        %v840 = vstv %s461
        %v841 = vmul.f32 %v840, %v704
        %v842 = vmul.f32 %v840, %v705
        %v843 = vadd.f32 %v838, %v841
        %v844 = vadd.f32 %v839, %v842
        %v845 = vstv %s465
        %v846 = vadd.f32 %v843, %v845
        %v847 = vadd.f32 %v844, %v845
        %v848 = vmax.f32 %v846, 0.0
        %v849 = vmax.f32 %v847, 0.0
        %v850 = vstv %s430
        %v851 = vmul.f32 %v850, %v667
        %v852 = vmul.f32 %v850, %v668
        %v853 = vstv %s434
        %v854 = vmul.f32 %v853, %v661
        %v855 = vmul.f32 %v853, %v662
        %v856 = vadd.f32 %v851, %v854
        %v857 = vadd.f32 %v852, %v855
        %v858 = vstv %s438
        %v859 = vmul.f32 %v858, %v673
        %v860 = vmul.f32 %v858, %v674
        %v861 = vadd.f32 %v856, %v859
        %v862 = vadd.f32 %v857, %v860
        %v863 = vstv %s442
        %v864 = vmul.f32 %v863, %v679
        %v865 = vmul.f32 %v863, %v680
        %v866 = vadd.f32 %v861, %v864
        %v867 = vadd.f32 %v862, %v865
        %v868 = vstv %s446
        %v869 = vmul.f32 %v868, %v402
        %v870 = vmul.f32 %v868, %v403
        %v871 = vadd.f32 %v866, %v869
        %v872 = vadd.f32 %v867, %v870
        %v873 = vstv %s450
        %v874 = vmul.f32 %v873, %v685
        %v875 = vmul.f32 %v873, %v686
        %v876 = vadd.f32 %v871, %v874
        %v877 = vadd.f32 %v872, %v875
        %v878 = vstv %s454
        %v879 = vmul.f32 %v878, %v698
        %v880 = vmul.f32 %v878, %v699
        %v881 = vadd.f32 %v876, %v879
        %v882 = vadd.f32 %v877, %v880
        %v883 = vstv %s458
        %v884 = vmul.f32 %v883, %v692
        %v885 = vmul.f32 %v883, %v693
        %v886 = vadd.f32 %v881, %v884
        %v887 = vadd.f32 %v882, %v885
        %v888 = vstv %s462
        %v889 = vmul.f32 %v888, %v704
        %v890 = vmul.f32 %v888, %v705
        %v891 = vadd.f32 %v886, %v889
        %v892 = vadd.f32 %v887, %v890
        %v893 = vstv %s466
        %v894 = vadd.f32 %v891, %v893
        %v895 = vadd.f32 %v892, %v893
        %v896 = vmax.f32 %v894, 0.0
        %v897 = vmax.f32 %v895, 0.0
        %v898 = vrot.slane %v752, 7
        %v899 = vrot.slane %v753, 7
        %v900 = vsel %vm658, %v898, %v899
        %v901 = vsel %vm658, %v899, %v898
        %v902 = vsel %vm421, %v901, 0.0
        %v903 = vsel %vm422, %v900, 0.0
        %904 = vrot.lane.b32.xlu0 %v902, 1
        %v905 = vpop.permute.xlu0 %904
        %906 = vrot.lane.b32.xlu0 %v903, 1
        %v907 = vpop.permute.xlu0 %906
        %v908 = vsel %vm425, %v905, 0.0
        %v909 = vsel %vm425, %v907, 0.0
        %910 = vrot.lane.b32.xlu0 %v902, 127
        %v911 = vpop.permute.xlu0 %910
        %912 = vrot.lane.b32.xlu0 %v903, 127
        %v913 = vpop.permute.xlu0 %912
        %v914 = vsel %vm426, %v911, 0.0
        %v915 = vsel %vm426, %v913, 0.0
        %916 = vrot.lane.b32.xlu0 %v752, 1
        %v917 = vpop.permute.xlu0 %916
        %918 = vrot.lane.b32.xlu0 %v753, 1
        %v919 = vpop.permute.xlu0 %918
        %v920 = vsel %vm425, %v917, 0.0
        %v921 = vsel %vm425, %v919, 0.0
        %922 = vrot.lane.b32.xlu0 %v752, 127
        %v923 = vpop.permute.xlu0 %922
        %924 = vrot.lane.b32.xlu0 %v753, 127
        %v925 = vpop.permute.xlu0 %924
        %v926 = vsel %vm426, %v923, 0.0
        %v927 = vsel %vm426, %v925, 0.0
        %v928 = vrot.slane %v752, 1
        %v929 = vrot.slane %v753, 1
        %v930 = vsel %vm689, %v928, %v929
        %v931 = vsel %vm689, %v929, %v928
        %v932 = vsel %vm423, %v930, 0.0
        %v933 = vsel %vm424, %v931, 0.0
        %934 = vrot.lane.b32.xlu0 %v932, 1
        %v935 = vpop.permute.xlu0 %934
        %936 = vrot.lane.b32.xlu0 %v933, 1
        %v937 = vpop.permute.xlu0 %936
        %v938 = vsel %vm425, %v935, 0.0
        %v939 = vsel %vm425, %v937, 0.0
        %940 = vrot.lane.b32.xlu0 %v932, 127
        %v941 = vpop.permute.xlu0 %940
        %942 = vrot.lane.b32.xlu0 %v933, 127
        %v943 = vpop.permute.xlu0 %942
        %v944 = vsel %vm426, %v941, 0.0
        %v945 = vsel %vm426, %v943, 0.0
        %v946 = vstv %s467
        %v947 = vmul.f32 %v946, %v908
        %v948 = vmul.f32 %v946, %v909
        %v949 = vstv %s468
        %v950 = vmul.f32 %v949, %v908
        %v951 = vmul.f32 %v949, %v909
        %v952 = vstv %s469
        %v953 = vmul.f32 %v952, %v908
        %v954 = vmul.f32 %v952, %v909
        %v955 = vstv %s470
        %v956 = vmul.f32 %v955, %v908
        %v957 = vmul.f32 %v955, %v909
        %v958 = vstv %s483
        %v959 = vmul.f32 %v958, %v902
        %v960 = vmul.f32 %v958, %v903
        %v961 = vadd.f32 %v947, %v959
        %v962 = vadd.f32 %v948, %v960
        %v963 = vstv %s484
        %v964 = vmul.f32 %v963, %v902
        %v965 = vmul.f32 %v963, %v903
        %v966 = vadd.f32 %v950, %v964
        %v967 = vadd.f32 %v951, %v965
        %v968 = vstv %s485
        %v969 = vmul.f32 %v968, %v902
        %v970 = vmul.f32 %v968, %v903
        %v971 = vadd.f32 %v953, %v969
        %v972 = vadd.f32 %v954, %v970
        %v973 = vstv %s486
        %v974 = vmul.f32 %v973, %v902
        %v975 = vmul.f32 %v973, %v903
        %v976 = vadd.f32 %v956, %v974
        %v977 = vadd.f32 %v957, %v975
        %v978 = vstv %s499
        %v979 = vmul.f32 %v978, %v914
        %v980 = vmul.f32 %v978, %v915
        %v981 = vadd.f32 %v961, %v979
        %v982 = vadd.f32 %v962, %v980
        %v983 = vstv %s500
        %v984 = vmul.f32 %v983, %v914
        %v985 = vmul.f32 %v983, %v915
        %v986 = vadd.f32 %v966, %v984
        %v987 = vadd.f32 %v967, %v985
        %v988 = vstv %s501
        %v989 = vmul.f32 %v988, %v914
        %v990 = vmul.f32 %v988, %v915
        %v991 = vadd.f32 %v971, %v989
        %v992 = vadd.f32 %v972, %v990
        %v993 = vstv %s502
        %v994 = vmul.f32 %v993, %v914
        %v995 = vmul.f32 %v993, %v915
        %v996 = vadd.f32 %v976, %v994
        %v997 = vadd.f32 %v977, %v995
        %v998 = vstv %s515
        %v999 = vmul.f32 %v998, %v920
        %v1000 = vmul.f32 %v998, %v921
        %v1001 = vadd.f32 %v981, %v999
        %v1002 = vadd.f32 %v982, %v1000
        %v1003 = vstv %s516
        %v1004 = vmul.f32 %v1003, %v920
        %v1005 = vmul.f32 %v1003, %v921
        %v1006 = vadd.f32 %v986, %v1004
        %v1007 = vadd.f32 %v987, %v1005
        %v1008 = vstv %s517
        %v1009 = vmul.f32 %v1008, %v920
        %v1010 = vmul.f32 %v1008, %v921
        %v1011 = vadd.f32 %v991, %v1009
        %v1012 = vadd.f32 %v992, %v1010
        %v1013 = vstv %s518
        %v1014 = vmul.f32 %v1013, %v920
        %v1015 = vmul.f32 %v1013, %v921
        %v1016 = vadd.f32 %v996, %v1014
        %v1017 = vadd.f32 %v997, %v1015
        %v1018 = vstv %s531
        %v1019 = vmul.f32 %v1018, %v752
        %v1020 = vmul.f32 %v1018, %v753
        %v1021 = vadd.f32 %v1001, %v1019
        %v1022 = vadd.f32 %v1002, %v1020
        %v1023 = vstv %s532
        %v1024 = vmul.f32 %v1023, %v752
        %v1025 = vmul.f32 %v1023, %v753
        %v1026 = vadd.f32 %v1006, %v1024
        %v1027 = vadd.f32 %v1007, %v1025
        %v1028 = vstv %s533
        %v1029 = vmul.f32 %v1028, %v752
        %v1030 = vmul.f32 %v1028, %v753
        %v1031 = vadd.f32 %v1011, %v1029
        %v1032 = vadd.f32 %v1012, %v1030
        %v1033 = vstv %s534
        %v1034 = vmul.f32 %v1033, %v752
        %v1035 = vmul.f32 %v1033, %v753
        %v1036 = vadd.f32 %v1016, %v1034
        %v1037 = vadd.f32 %v1017, %v1035
        %v1038 = vstv %s547
        %v1039 = vmul.f32 %v1038, %v926
        %v1040 = vmul.f32 %v1038, %v927
        %v1041 = vadd.f32 %v1021, %v1039
        %v1042 = vadd.f32 %v1022, %v1040
        %v1043 = vstv %s548
        %v1044 = vmul.f32 %v1043, %v926
        %v1045 = vmul.f32 %v1043, %v927
        %v1046 = vadd.f32 %v1026, %v1044
        %v1047 = vadd.f32 %v1027, %v1045
        %v1048 = vstv %s549
        %v1049 = vmul.f32 %v1048, %v926
        %v1050 = vmul.f32 %v1048, %v927
        %v1051 = vadd.f32 %v1031, %v1049
        %v1052 = vadd.f32 %v1032, %v1050
        %v1053 = vstv %s550
        %v1054 = vmul.f32 %v1053, %v926
        %v1055 = vmul.f32 %v1053, %v927
        %v1056 = vadd.f32 %v1036, %v1054
        %v1057 = vadd.f32 %v1037, %v1055
        %v1058 = vstv %s563
        %v1059 = vmul.f32 %v1058, %v938
        %v1060 = vmul.f32 %v1058, %v939
        %v1061 = vadd.f32 %v1041, %v1059
        %v1062 = vadd.f32 %v1042, %v1060
        %v1063 = vstv %s564
        %v1064 = vmul.f32 %v1063, %v938
        %v1065 = vmul.f32 %v1063, %v939
        %v1066 = vadd.f32 %v1046, %v1064
        %v1067 = vadd.f32 %v1047, %v1065
        %v1068 = vstv %s565
        %v1069 = vmul.f32 %v1068, %v938
        %v1070 = vmul.f32 %v1068, %v939
        %v1071 = vadd.f32 %v1051, %v1069
        %v1072 = vadd.f32 %v1052, %v1070
        %v1073 = vstv %s566
        %v1074 = vmul.f32 %v1073, %v938
        %v1075 = vmul.f32 %v1073, %v939
        %v1076 = vadd.f32 %v1056, %v1074
        %v1077 = vadd.f32 %v1057, %v1075
        %v1078 = vstv %s579
        %v1079 = vmul.f32 %v1078, %v932
        %v1080 = vmul.f32 %v1078, %v933
        %v1081 = vadd.f32 %v1061, %v1079
        %v1082 = vadd.f32 %v1062, %v1080
        %v1083 = vstv %s580
        %v1084 = vmul.f32 %v1083, %v932
        %v1085 = vmul.f32 %v1083, %v933
        %v1086 = vadd.f32 %v1066, %v1084
        %v1087 = vadd.f32 %v1067, %v1085
        %v1088 = vstv %s581
        %v1089 = vmul.f32 %v1088, %v932
        %v1090 = vmul.f32 %v1088, %v933
        %v1091 = vadd.f32 %v1071, %v1089
        %v1092 = vadd.f32 %v1072, %v1090
        %v1093 = vstv %s582
        %v1094 = vmul.f32 %v1093, %v932
        %v1095 = vmul.f32 %v1093, %v933
        %v1096 = vadd.f32 %v1076, %v1094
        %v1097 = vadd.f32 %v1077, %v1095
        %v1098 = vstv %s595
        %v1099 = vmul.f32 %v1098, %v944
        %v1100 = vmul.f32 %v1098, %v945
        %v1101 = vadd.f32 %v1081, %v1099
        %v1102 = vadd.f32 %v1082, %v1100
        %v1103 = vstv %s596
        %v1104 = vmul.f32 %v1103, %v944
        %v1105 = vmul.f32 %v1103, %v945
        %v1106 = vadd.f32 %v1086, %v1104
        %v1107 = vadd.f32 %v1087, %v1105
        %v1108 = vstv %s597
        %v1109 = vmul.f32 %v1108, %v944
        %v1110 = vmul.f32 %v1108, %v945
        %v1111 = vadd.f32 %v1091, %v1109
        %v1112 = vadd.f32 %v1092, %v1110
        %v1113 = vstv %s598
        %v1114 = vmul.f32 %v1113, %v944
        %v1115 = vmul.f32 %v1113, %v945
        %v1116 = vadd.f32 %v1096, %v1114
        %v1117 = vadd.f32 %v1097, %v1115
        %v1118 = vrot.slane %v800, 7
        %v1119 = vrot.slane %v801, 7
        %v1120 = vsel %vm658, %v1118, %v1119
        %v1121 = vsel %vm658, %v1119, %v1118
        %v1122 = vsel %vm421, %v1121, 0.0
        %v1123 = vsel %vm422, %v1120, 0.0
        %1124 = vrot.lane.b32.xlu0 %v1122, 1
        %v1125 = vpop.permute.xlu0 %1124
        %1126 = vrot.lane.b32.xlu0 %v1123, 1
        %v1127 = vpop.permute.xlu0 %1126
        %v1128 = vsel %vm425, %v1125, 0.0
        %v1129 = vsel %vm425, %v1127, 0.0
        %1130 = vrot.lane.b32.xlu0 %v1122, 127
        %v1131 = vpop.permute.xlu0 %1130
        %1132 = vrot.lane.b32.xlu0 %v1123, 127
        %v1133 = vpop.permute.xlu0 %1132
        %v1134 = vsel %vm426, %v1131, 0.0
        %v1135 = vsel %vm426, %v1133, 0.0
        %1136 = vrot.lane.b32.xlu0 %v800, 1
        %v1137 = vpop.permute.xlu0 %1136
        %1138 = vrot.lane.b32.xlu0 %v801, 1
        %v1139 = vpop.permute.xlu0 %1138
        %v1140 = vsel %vm425, %v1137, 0.0
        %v1141 = vsel %vm425, %v1139, 0.0
        %1142 = vrot.lane.b32.xlu0 %v800, 127
        %v1143 = vpop.permute.xlu0 %1142
        %1144 = vrot.lane.b32.xlu0 %v801, 127
        %v1145 = vpop.permute.xlu0 %1144
        %v1146 = vsel %vm426, %v1143, 0.0
        %v1147 = vsel %vm426, %v1145, 0.0
        %v1148 = vrot.slane %v800, 1
        %v1149 = vrot.slane %v801, 1
        %v1150 = vsel %vm689, %v1148, %v1149
        %v1151 = vsel %vm689, %v1149, %v1148
        %v1152 = vsel %vm423, %v1150, 0.0
        %v1153 = vsel %vm424, %v1151, 0.0
        %1154 = vrot.lane.b32.xlu0 %v1152, 1
        %v1155 = vpop.permute.xlu0 %1154
        %1156 = vrot.lane.b32.xlu0 %v1153, 1
        %v1157 = vpop.permute.xlu0 %1156
        %v1158 = vsel %vm425, %v1155, 0.0
        %v1159 = vsel %vm425, %v1157, 0.0
        %1160 = vrot.lane.b32.xlu0 %v1152, 127
        %v1161 = vpop.permute.xlu0 %1160
        %1162 = vrot.lane.b32.xlu0 %v1153, 127
        %v1163 = vpop.permute.xlu0 %1162
        %v1164 = vsel %vm426, %v1161, 0.0
        %v1165 = vsel %vm426, %v1163, 0.0
        %v1166 = vstv %s471
        %v1167 = vmul.f32 %v1166, %v1128
        %v1168 = vmul.f32 %v1166, %v1129
        %v1169 = vadd.f32 %v1101, %v1167
        %v1170 = vadd.f32 %v1102, %v1168
        %v1171 = vstv %s472
        %v1172 = vmul.f32 %v1171, %v1128
        %v1173 = vmul.f32 %v1171, %v1129
        %v1174 = vadd.f32 %v1106, %v1172
        %v1175 = vadd.f32 %v1107, %v1173
        %v1176 = vstv %s473
        %v1177 = vmul.f32 %v1176, %v1128
        %v1178 = vmul.f32 %v1176, %v1129
        %v1179 = vadd.f32 %v1111, %v1177
        %v1180 = vadd.f32 %v1112, %v1178
        %v1181 = vstv %s474
        %v1182 = vmul.f32 %v1181, %v1128
        %v1183 = vmul.f32 %v1181, %v1129
        %v1184 = vadd.f32 %v1116, %v1182
        %v1185 = vadd.f32 %v1117, %v1183
        %v1186 = vstv %s487
        %v1187 = vmul.f32 %v1186, %v1122
        %v1188 = vmul.f32 %v1186, %v1123
        %v1189 = vadd.f32 %v1169, %v1187
        %v1190 = vadd.f32 %v1170, %v1188
        %v1191 = vstv %s488
        %v1192 = vmul.f32 %v1191, %v1122
        %v1193 = vmul.f32 %v1191, %v1123
        %v1194 = vadd.f32 %v1174, %v1192
        %v1195 = vadd.f32 %v1175, %v1193
        %v1196 = vstv %s489
        %v1197 = vmul.f32 %v1196, %v1122
        %v1198 = vmul.f32 %v1196, %v1123
        %v1199 = vadd.f32 %v1179, %v1197
        %v1200 = vadd.f32 %v1180, %v1198
        %v1201 = vstv %s490
        %v1202 = vmul.f32 %v1201, %v1122
        %v1203 = vmul.f32 %v1201, %v1123
        %v1204 = vadd.f32 %v1184, %v1202
        %v1205 = vadd.f32 %v1185, %v1203
        %v1206 = vstv %s503
        %v1207 = vmul.f32 %v1206, %v1134
        %v1208 = vmul.f32 %v1206, %v1135
        %v1209 = vadd.f32 %v1189, %v1207
        %v1210 = vadd.f32 %v1190, %v1208
        %v1211 = vstv %s504
        %v1212 = vmul.f32 %v1211, %v1134
        %v1213 = vmul.f32 %v1211, %v1135
        %v1214 = vadd.f32 %v1194, %v1212
        %v1215 = vadd.f32 %v1195, %v1213
        %v1216 = vstv %s505
        %v1217 = vmul.f32 %v1216, %v1134
        %v1218 = vmul.f32 %v1216, %v1135
        %v1219 = vadd.f32 %v1199, %v1217
        %v1220 = vadd.f32 %v1200, %v1218
        %v1221 = vstv %s506
        %v1222 = vmul.f32 %v1221, %v1134
        %v1223 = vmul.f32 %v1221, %v1135
        %v1224 = vadd.f32 %v1204, %v1222
        %v1225 = vadd.f32 %v1205, %v1223
        %v1226 = vstv %s519
        %v1227 = vmul.f32 %v1226, %v1140
        %v1228 = vmul.f32 %v1226, %v1141
        %v1229 = vadd.f32 %v1209, %v1227
        %v1230 = vadd.f32 %v1210, %v1228
        %v1231 = vstv %s520
        %v1232 = vmul.f32 %v1231, %v1140
        %v1233 = vmul.f32 %v1231, %v1141
        %v1234 = vadd.f32 %v1214, %v1232
        %v1235 = vadd.f32 %v1215, %v1233
        %v1236 = vstv %s521
        %v1237 = vmul.f32 %v1236, %v1140
        %v1238 = vmul.f32 %v1236, %v1141
        %v1239 = vadd.f32 %v1219, %v1237
        %v1240 = vadd.f32 %v1220, %v1238
        %v1241 = vstv %s522
        %v1242 = vmul.f32 %v1241, %v1140
        %v1243 = vmul.f32 %v1241, %v1141
        %v1244 = vadd.f32 %v1224, %v1242
        %v1245 = vadd.f32 %v1225, %v1243
        %v1246 = vstv %s535
        %v1247 = vmul.f32 %v1246, %v800
        %v1248 = vmul.f32 %v1246, %v801
        %v1249 = vadd.f32 %v1229, %v1247
        %v1250 = vadd.f32 %v1230, %v1248
        %v1251 = vstv %s536
        %v1252 = vmul.f32 %v1251, %v800
        %v1253 = vmul.f32 %v1251, %v801
        %v1254 = vadd.f32 %v1234, %v1252
        %v1255 = vadd.f32 %v1235, %v1253
        %v1256 = vstv %s537
        %v1257 = vmul.f32 %v1256, %v800
        %v1258 = vmul.f32 %v1256, %v801
        %v1259 = vadd.f32 %v1239, %v1257
        %v1260 = vadd.f32 %v1240, %v1258
        %v1261 = vstv %s538
        %v1262 = vmul.f32 %v1261, %v800
        %v1263 = vmul.f32 %v1261, %v801
        %v1264 = vadd.f32 %v1244, %v1262
        %v1265 = vadd.f32 %v1245, %v1263
        %v1266 = vstv %s551
        %v1267 = vmul.f32 %v1266, %v1146
        %v1268 = vmul.f32 %v1266, %v1147
        %v1269 = vadd.f32 %v1249, %v1267
        %v1270 = vadd.f32 %v1250, %v1268
        %v1271 = vstv %s552
        %v1272 = vmul.f32 %v1271, %v1146
        %v1273 = vmul.f32 %v1271, %v1147
        %v1274 = vadd.f32 %v1254, %v1272
        %v1275 = vadd.f32 %v1255, %v1273
        %v1276 = vstv %s553
        %v1277 = vmul.f32 %v1276, %v1146
        %v1278 = vmul.f32 %v1276, %v1147
        %v1279 = vadd.f32 %v1259, %v1277
        %v1280 = vadd.f32 %v1260, %v1278
        %v1281 = vstv %s554
        %v1282 = vmul.f32 %v1281, %v1146
        %v1283 = vmul.f32 %v1281, %v1147
        %v1284 = vadd.f32 %v1264, %v1282
        %v1285 = vadd.f32 %v1265, %v1283
        %v1286 = vstv %s567
        %v1287 = vmul.f32 %v1286, %v1158
        %v1288 = vmul.f32 %v1286, %v1159
        %v1289 = vadd.f32 %v1269, %v1287
        %v1290 = vadd.f32 %v1270, %v1288
        %v1291 = vstv %s568
        %v1292 = vmul.f32 %v1291, %v1158
        %v1293 = vmul.f32 %v1291, %v1159
        %v1294 = vadd.f32 %v1274, %v1292
        %v1295 = vadd.f32 %v1275, %v1293
        %v1296 = vstv %s569
        %v1297 = vmul.f32 %v1296, %v1158
        %v1298 = vmul.f32 %v1296, %v1159
        %v1299 = vadd.f32 %v1279, %v1297
        %v1300 = vadd.f32 %v1280, %v1298
        %v1301 = vstv %s570
        %v1302 = vmul.f32 %v1301, %v1158
        %v1303 = vmul.f32 %v1301, %v1159
        %v1304 = vadd.f32 %v1284, %v1302
        %v1305 = vadd.f32 %v1285, %v1303
        %v1306 = vstv %s583
        %v1307 = vmul.f32 %v1306, %v1152
        %v1308 = vmul.f32 %v1306, %v1153
        %v1309 = vadd.f32 %v1289, %v1307
        %v1310 = vadd.f32 %v1290, %v1308
        %v1311 = vstv %s584
        %v1312 = vmul.f32 %v1311, %v1152
        %v1313 = vmul.f32 %v1311, %v1153
        %v1314 = vadd.f32 %v1294, %v1312
        %v1315 = vadd.f32 %v1295, %v1313
        %v1316 = vstv %s585
        %v1317 = vmul.f32 %v1316, %v1152
        %v1318 = vmul.f32 %v1316, %v1153
        %v1319 = vadd.f32 %v1299, %v1317
        %v1320 = vadd.f32 %v1300, %v1318
        %v1321 = vstv %s586
        %v1322 = vmul.f32 %v1321, %v1152
        %v1323 = vmul.f32 %v1321, %v1153
        %v1324 = vadd.f32 %v1304, %v1322
        %v1325 = vadd.f32 %v1305, %v1323
        %v1326 = vstv %s599
        %v1327 = vmul.f32 %v1326, %v1164
        %v1328 = vmul.f32 %v1326, %v1165
        %v1329 = vadd.f32 %v1309, %v1327
        %v1330 = vadd.f32 %v1310, %v1328
        %v1331 = vstv %s600
        %v1332 = vmul.f32 %v1331, %v1164
        %v1333 = vmul.f32 %v1331, %v1165
        %v1334 = vadd.f32 %v1314, %v1332
        %v1335 = vadd.f32 %v1315, %v1333
        %v1336 = vstv %s601
        %v1337 = vmul.f32 %v1336, %v1164
        %v1338 = vmul.f32 %v1336, %v1165
        %v1339 = vadd.f32 %v1319, %v1337
        %v1340 = vadd.f32 %v1320, %v1338
        %v1341 = vstv %s602
        %v1342 = vmul.f32 %v1341, %v1164
        %v1343 = vmul.f32 %v1341, %v1165
        %v1344 = vadd.f32 %v1324, %v1342
        %v1345 = vadd.f32 %v1325, %v1343
        %v1346 = vrot.slane %v848, 7
        %v1347 = vrot.slane %v849, 7
        %v1348 = vsel %vm658, %v1346, %v1347
        %v1349 = vsel %vm658, %v1347, %v1346
        %v1350 = vsel %vm421, %v1349, 0.0
        %v1351 = vsel %vm422, %v1348, 0.0
        %1352 = vrot.lane.b32.xlu0 %v1350, 1
        %v1353 = vpop.permute.xlu0 %1352
        %1354 = vrot.lane.b32.xlu0 %v1351, 1
        %v1355 = vpop.permute.xlu0 %1354
        %v1356 = vsel %vm425, %v1353, 0.0
        %v1357 = vsel %vm425, %v1355, 0.0
        %1358 = vrot.lane.b32.xlu0 %v1350, 127
        %v1359 = vpop.permute.xlu0 %1358
        %1360 = vrot.lane.b32.xlu0 %v1351, 127
        %v1361 = vpop.permute.xlu0 %1360
        %v1362 = vsel %vm426, %v1359, 0.0
        %v1363 = vsel %vm426, %v1361, 0.0
        %1364 = vrot.lane.b32.xlu0 %v848, 1
        %v1365 = vpop.permute.xlu0 %1364
        %1366 = vrot.lane.b32.xlu0 %v849, 1
        %v1367 = vpop.permute.xlu0 %1366
        %v1368 = vsel %vm425, %v1365, 0.0
        %v1369 = vsel %vm425, %v1367, 0.0
        %1370 = vrot.lane.b32.xlu0 %v848, 127
        %v1371 = vpop.permute.xlu0 %1370
        %1372 = vrot.lane.b32.xlu0 %v849, 127
        %v1373 = vpop.permute.xlu0 %1372
        %v1374 = vsel %vm426, %v1371, 0.0
        %v1375 = vsel %vm426, %v1373, 0.0
        %v1376 = vrot.slane %v848, 1
        %v1377 = vrot.slane %v849, 1
        %v1378 = vsel %vm689, %v1376, %v1377
        %v1379 = vsel %vm689, %v1377, %v1376
        %v1380 = vsel %vm423, %v1378, 0.0
        %v1381 = vsel %vm424, %v1379, 0.0
        %1382 = vrot.lane.b32.xlu0 %v1380, 1
        %v1383 = vpop.permute.xlu0 %1382
        %1384 = vrot.lane.b32.xlu0 %v1381, 1
        %v1385 = vpop.permute.xlu0 %1384
        %v1386 = vsel %vm425, %v1383, 0.0
        %v1387 = vsel %vm425, %v1385, 0.0
        %1388 = vrot.lane.b32.xlu0 %v1380, 127
        %v1389 = vpop.permute.xlu0 %1388
        %1390 = vrot.lane.b32.xlu0 %v1381, 127
        %v1391 = vpop.permute.xlu0 %1390
        %v1392 = vsel %vm426, %v1389, 0.0
        %v1393 = vsel %vm426, %v1391, 0.0
        %v1394 = vstv %s475
        %v1395 = vmul.f32 %v1394, %v1356
        %v1396 = vmul.f32 %v1394, %v1357
        %v1397 = vadd.f32 %v1329, %v1395
        %v1398 = vadd.f32 %v1330, %v1396
        %v1399 = vstv %s476
        %v1400 = vmul.f32 %v1399, %v1356
        %v1401 = vmul.f32 %v1399, %v1357
        %v1402 = vadd.f32 %v1334, %v1400
        %v1403 = vadd.f32 %v1335, %v1401
        %v1404 = vstv %s477
        %v1405 = vmul.f32 %v1404, %v1356
        %v1406 = vmul.f32 %v1404, %v1357
        %v1407 = vadd.f32 %v1339, %v1405
        %v1408 = vadd.f32 %v1340, %v1406
        %v1409 = vstv %s478
        %v1410 = vmul.f32 %v1409, %v1356
        %v1411 = vmul.f32 %v1409, %v1357
        %v1412 = vadd.f32 %v1344, %v1410
        %v1413 = vadd.f32 %v1345, %v1411
        %v1414 = vstv %s491
        %v1415 = vmul.f32 %v1414, %v1350
        %v1416 = vmul.f32 %v1414, %v1351
        %v1417 = vadd.f32 %v1397, %v1415
        %v1418 = vadd.f32 %v1398, %v1416
        %v1419 = vstv %s492
        %v1420 = vmul.f32 %v1419, %v1350
        %v1421 = vmul.f32 %v1419, %v1351
        %v1422 = vadd.f32 %v1402, %v1420
        %v1423 = vadd.f32 %v1403, %v1421
        %v1424 = vstv %s493
        %v1425 = vmul.f32 %v1424, %v1350
        %v1426 = vmul.f32 %v1424, %v1351
        %v1427 = vadd.f32 %v1407, %v1425
        %v1428 = vadd.f32 %v1408, %v1426
        %v1429 = vstv %s494
        %v1430 = vmul.f32 %v1429, %v1350
        %v1431 = vmul.f32 %v1429, %v1351
        %v1432 = vadd.f32 %v1412, %v1430
        %v1433 = vadd.f32 %v1413, %v1431
        %v1434 = vstv %s507
        %v1435 = vmul.f32 %v1434, %v1362
        %v1436 = vmul.f32 %v1434, %v1363
        %v1437 = vadd.f32 %v1417, %v1435
        %v1438 = vadd.f32 %v1418, %v1436
        %v1439 = vstv %s508
        %v1440 = vmul.f32 %v1439, %v1362
        %v1441 = vmul.f32 %v1439, %v1363
        %v1442 = vadd.f32 %v1422, %v1440
        %v1443 = vadd.f32 %v1423, %v1441
        %v1444 = vstv %s509
        %v1445 = vmul.f32 %v1444, %v1362
        %v1446 = vmul.f32 %v1444, %v1363
        %v1447 = vadd.f32 %v1427, %v1445
        %v1448 = vadd.f32 %v1428, %v1446
        %v1449 = vstv %s510
        %v1450 = vmul.f32 %v1449, %v1362
        %v1451 = vmul.f32 %v1449, %v1363
        %v1452 = vadd.f32 %v1432, %v1450
        %v1453 = vadd.f32 %v1433, %v1451
        %v1454 = vstv %s523
        %v1455 = vmul.f32 %v1454, %v1368
        %v1456 = vmul.f32 %v1454, %v1369
        %v1457 = vadd.f32 %v1437, %v1455
        %v1458 = vadd.f32 %v1438, %v1456
        %v1459 = vstv %s524
        %v1460 = vmul.f32 %v1459, %v1368
        %v1461 = vmul.f32 %v1459, %v1369
        %v1462 = vadd.f32 %v1442, %v1460
        %v1463 = vadd.f32 %v1443, %v1461
        %v1464 = vstv %s525
        %v1465 = vmul.f32 %v1464, %v1368
        %v1466 = vmul.f32 %v1464, %v1369
        %v1467 = vadd.f32 %v1447, %v1465
        %v1468 = vadd.f32 %v1448, %v1466
        %v1469 = vstv %s526
        %v1470 = vmul.f32 %v1469, %v1368
        %v1471 = vmul.f32 %v1469, %v1369
        %v1472 = vadd.f32 %v1452, %v1470
        %v1473 = vadd.f32 %v1453, %v1471
        %v1474 = vstv %s539
        %v1475 = vmul.f32 %v1474, %v848
        %v1476 = vmul.f32 %v1474, %v849
        %v1477 = vadd.f32 %v1457, %v1475
        %v1478 = vadd.f32 %v1458, %v1476
        %v1479 = vstv %s540
        %v1480 = vmul.f32 %v1479, %v848
        %v1481 = vmul.f32 %v1479, %v849
        %v1482 = vadd.f32 %v1462, %v1480
        %v1483 = vadd.f32 %v1463, %v1481
        %v1484 = vstv %s541
        %v1485 = vmul.f32 %v1484, %v848
        %v1486 = vmul.f32 %v1484, %v849
        %v1487 = vadd.f32 %v1467, %v1485
        %v1488 = vadd.f32 %v1468, %v1486
        %v1489 = vstv %s542
        %v1490 = vmul.f32 %v1489, %v848
        %v1491 = vmul.f32 %v1489, %v849
        %v1492 = vadd.f32 %v1472, %v1490
        %v1493 = vadd.f32 %v1473, %v1491
        %v1494 = vstv %s555
        %v1495 = vmul.f32 %v1494, %v1374
        %v1496 = vmul.f32 %v1494, %v1375
        %v1497 = vadd.f32 %v1477, %v1495
        %v1498 = vadd.f32 %v1478, %v1496
        %v1499 = vstv %s556
        %v1500 = vmul.f32 %v1499, %v1374
        %v1501 = vmul.f32 %v1499, %v1375
        %v1502 = vadd.f32 %v1482, %v1500
        %v1503 = vadd.f32 %v1483, %v1501
        %v1504 = vstv %s557
        %v1505 = vmul.f32 %v1504, %v1374
        %v1506 = vmul.f32 %v1504, %v1375
        %v1507 = vadd.f32 %v1487, %v1505
        %v1508 = vadd.f32 %v1488, %v1506
        %v1509 = vstv %s558
        %v1510 = vmul.f32 %v1509, %v1374
        %v1511 = vmul.f32 %v1509, %v1375
        %v1512 = vadd.f32 %v1492, %v1510
        %v1513 = vadd.f32 %v1493, %v1511
        %v1514 = vstv %s571
        %v1515 = vmul.f32 %v1514, %v1386
        %v1516 = vmul.f32 %v1514, %v1387
        %v1517 = vadd.f32 %v1497, %v1515
        %v1518 = vadd.f32 %v1498, %v1516
        %v1519 = vstv %s572
        %v1520 = vmul.f32 %v1519, %v1386
        %v1521 = vmul.f32 %v1519, %v1387
        %v1522 = vadd.f32 %v1502, %v1520
        %v1523 = vadd.f32 %v1503, %v1521
        %v1524 = vstv %s573
        %v1525 = vmul.f32 %v1524, %v1386
        %v1526 = vmul.f32 %v1524, %v1387
        %v1527 = vadd.f32 %v1507, %v1525
        %v1528 = vadd.f32 %v1508, %v1526
        %v1529 = vstv %s574
        %v1530 = vmul.f32 %v1529, %v1386
        %v1531 = vmul.f32 %v1529, %v1387
        %v1532 = vadd.f32 %v1512, %v1530
        %v1533 = vadd.f32 %v1513, %v1531
        %v1534 = vstv %s587
        %v1535 = vmul.f32 %v1534, %v1380
        %v1536 = vmul.f32 %v1534, %v1381
        %v1537 = vadd.f32 %v1517, %v1535
        %v1538 = vadd.f32 %v1518, %v1536
        %v1539 = vstv %s588
        %v1540 = vmul.f32 %v1539, %v1380
        %v1541 = vmul.f32 %v1539, %v1381
        %v1542 = vadd.f32 %v1522, %v1540
        %v1543 = vadd.f32 %v1523, %v1541
        %v1544 = vstv %s589
        %v1545 = vmul.f32 %v1544, %v1380
        %v1546 = vmul.f32 %v1544, %v1381
        %v1547 = vadd.f32 %v1527, %v1545
        %v1548 = vadd.f32 %v1528, %v1546
        %v1549 = vstv %s590
        %v1550 = vmul.f32 %v1549, %v1380
        %v1551 = vmul.f32 %v1549, %v1381
        %v1552 = vadd.f32 %v1532, %v1550
        %v1553 = vadd.f32 %v1533, %v1551
        %v1554 = vstv %s603
        %v1555 = vmul.f32 %v1554, %v1392
        %v1556 = vmul.f32 %v1554, %v1393
        %v1557 = vadd.f32 %v1537, %v1555
        %v1558 = vadd.f32 %v1538, %v1556
        %v1559 = vstv %s604
        %v1560 = vmul.f32 %v1559, %v1392
        %v1561 = vmul.f32 %v1559, %v1393
        %v1562 = vadd.f32 %v1542, %v1560
        %v1563 = vadd.f32 %v1543, %v1561
        %v1564 = vstv %s605
        %v1565 = vmul.f32 %v1564, %v1392
        %v1566 = vmul.f32 %v1564, %v1393
        %v1567 = vadd.f32 %v1547, %v1565
        %v1568 = vadd.f32 %v1548, %v1566
        %v1569 = vstv %s606
        %v1570 = vmul.f32 %v1569, %v1392
        %v1571 = vmul.f32 %v1569, %v1393
        %v1572 = vadd.f32 %v1552, %v1570
        %v1573 = vadd.f32 %v1553, %v1571
        %v1574 = vrot.slane %v896, 7
        %v1575 = vrot.slane %v897, 7
        %v1576 = vsel %vm658, %v1574, %v1575
        %v1577 = vsel %vm658, %v1575, %v1574
        %v1578 = vsel %vm421, %v1577, 0.0
        %v1579 = vsel %vm422, %v1576, 0.0
        %1580 = vrot.lane.b32.xlu0 %v1578, 1
        %v1581 = vpop.permute.xlu0 %1580
        %1582 = vrot.lane.b32.xlu0 %v1579, 1
        %v1583 = vpop.permute.xlu0 %1582
        %v1584 = vsel %vm425, %v1581, 0.0
        %v1585 = vsel %vm425, %v1583, 0.0
        %1586 = vrot.lane.b32.xlu0 %v1578, 127
        %v1587 = vpop.permute.xlu0 %1586
        %1588 = vrot.lane.b32.xlu0 %v1579, 127
        %v1589 = vpop.permute.xlu0 %1588
        %v1590 = vsel %vm426, %v1587, 0.0
        %v1591 = vsel %vm426, %v1589, 0.0
        %1592 = vrot.lane.b32.xlu0 %v896, 1
        %v1593 = vpop.permute.xlu0 %1592
        %1594 = vrot.lane.b32.xlu0 %v897, 1
        %v1595 = vpop.permute.xlu0 %1594
        %v1596 = vsel %vm425, %v1593, 0.0
        %v1597 = vsel %vm425, %v1595, 0.0
        %1598 = vrot.lane.b32.xlu0 %v896, 127
        %v1599 = vpop.permute.xlu0 %1598
        %1600 = vrot.lane.b32.xlu0 %v897, 127
        %v1601 = vpop.permute.xlu0 %1600
        %v1602 = vsel %vm426, %v1599, 0.0
        %v1603 = vsel %vm426, %v1601, 0.0
        %v1604 = vrot.slane %v896, 1
        %v1605 = vrot.slane %v897, 1
        %v1606 = vsel %vm689, %v1604, %v1605
        %v1607 = vsel %vm689, %v1605, %v1604
        %v1608 = vsel %vm423, %v1606, 0.0
        %v1609 = vsel %vm424, %v1607, 0.0
        %1610 = vrot.lane.b32.xlu0 %v1608, 1
        %v1611 = vpop.permute.xlu0 %1610
        %1612 = vrot.lane.b32.xlu0 %v1609, 1
        %v1613 = vpop.permute.xlu0 %1612
        %v1614 = vsel %vm425, %v1611, 0.0
        %v1615 = vsel %vm425, %v1613, 0.0
        %1616 = vrot.lane.b32.xlu0 %v1608, 127
        %v1617 = vpop.permute.xlu0 %1616
        %1618 = vrot.lane.b32.xlu0 %v1609, 127
        %v1619 = vpop.permute.xlu0 %1618
        %v1620 = vsel %vm426, %v1617, 0.0
        %v1621 = vsel %vm426, %v1619, 0.0
        %v1622 = vstv %s479
        %v1623 = vmul.f32 %v1622, %v1584
        %v1624 = vmul.f32 %v1622, %v1585
        %v1625 = vadd.f32 %v1557, %v1623
        %v1626 = vadd.f32 %v1558, %v1624
        %v1627 = vstv %s480
        %v1628 = vmul.f32 %v1627, %v1584
        %v1629 = vmul.f32 %v1627, %v1585
        %v1630 = vadd.f32 %v1562, %v1628
        %v1631 = vadd.f32 %v1563, %v1629
        %v1632 = vstv %s481
        %v1633 = vmul.f32 %v1632, %v1584
        %v1634 = vmul.f32 %v1632, %v1585
        %v1635 = vadd.f32 %v1567, %v1633
        %v1636 = vadd.f32 %v1568, %v1634
        %v1637 = vstv %s482
        %v1638 = vmul.f32 %v1637, %v1584
        %v1639 = vmul.f32 %v1637, %v1585
        %v1640 = vadd.f32 %v1572, %v1638
        %v1641 = vadd.f32 %v1573, %v1639
        %v1642 = vstv %s495
        %v1643 = vmul.f32 %v1642, %v1578
        %v1644 = vmul.f32 %v1642, %v1579
        %v1645 = vadd.f32 %v1625, %v1643
        %v1646 = vadd.f32 %v1626, %v1644
        %v1647 = vstv %s496
        %v1648 = vmul.f32 %v1647, %v1578
        %v1649 = vmul.f32 %v1647, %v1579
        %v1650 = vadd.f32 %v1630, %v1648
        %v1651 = vadd.f32 %v1631, %v1649
        %v1652 = vstv %s497
        %v1653 = vmul.f32 %v1652, %v1578
        %v1654 = vmul.f32 %v1652, %v1579
        %v1655 = vadd.f32 %v1635, %v1653
        %v1656 = vadd.f32 %v1636, %v1654
        %v1657 = vstv %s498
        %v1658 = vmul.f32 %v1657, %v1578
        %v1659 = vmul.f32 %v1657, %v1579
        %v1660 = vadd.f32 %v1640, %v1658
        %v1661 = vadd.f32 %v1641, %v1659
        %v1662 = vstv %s511
        %v1663 = vmul.f32 %v1662, %v1590
        %v1664 = vmul.f32 %v1662, %v1591
        %v1665 = vadd.f32 %v1645, %v1663
        %v1666 = vadd.f32 %v1646, %v1664
        %v1667 = vstv %s512
        %v1668 = vmul.f32 %v1667, %v1590
        %v1669 = vmul.f32 %v1667, %v1591
        %v1670 = vadd.f32 %v1650, %v1668
        %v1671 = vadd.f32 %v1651, %v1669
        %v1672 = vstv %s513
        %v1673 = vmul.f32 %v1672, %v1590
        %v1674 = vmul.f32 %v1672, %v1591
        %v1675 = vadd.f32 %v1655, %v1673
        %v1676 = vadd.f32 %v1656, %v1674
        %v1677 = vstv %s514
        %v1678 = vmul.f32 %v1677, %v1590
        %v1679 = vmul.f32 %v1677, %v1591
        %v1680 = vadd.f32 %v1660, %v1678
        %v1681 = vadd.f32 %v1661, %v1679
        %v1682 = vstv %s527
        %v1683 = vmul.f32 %v1682, %v1596
        %v1684 = vmul.f32 %v1682, %v1597
        %v1685 = vadd.f32 %v1665, %v1683
        %v1686 = vadd.f32 %v1666, %v1684
        %v1687 = vstv %s528
        %v1688 = vmul.f32 %v1687, %v1596
        %v1689 = vmul.f32 %v1687, %v1597
        %v1690 = vadd.f32 %v1670, %v1688
        %v1691 = vadd.f32 %v1671, %v1689
        %v1692 = vstv %s529
        %v1693 = vmul.f32 %v1692, %v1596
        %v1694 = vmul.f32 %v1692, %v1597
        %v1695 = vadd.f32 %v1675, %v1693
        %v1696 = vadd.f32 %v1676, %v1694
        %v1697 = vstv %s530
        %v1698 = vmul.f32 %v1697, %v1596
        %v1699 = vmul.f32 %v1697, %v1597
        %v1700 = vadd.f32 %v1680, %v1698
        %v1701 = vadd.f32 %v1681, %v1699
        %v1702 = vstv %s543
        %v1703 = vmul.f32 %v1702, %v896
        %v1704 = vmul.f32 %v1702, %v897
        %v1705 = vadd.f32 %v1685, %v1703
        %v1706 = vadd.f32 %v1686, %v1704
        %v1707 = vstv %s544
        %v1708 = vmul.f32 %v1707, %v896
        %v1709 = vmul.f32 %v1707, %v897
        %v1710 = vadd.f32 %v1690, %v1708
        %v1711 = vadd.f32 %v1691, %v1709
        %v1712 = vstv %s545
        %v1713 = vmul.f32 %v1712, %v896
        %v1714 = vmul.f32 %v1712, %v897
        %v1715 = vadd.f32 %v1695, %v1713
        %v1716 = vadd.f32 %v1696, %v1714
        %v1717 = vstv %s546
        %v1718 = vmul.f32 %v1717, %v896
        %v1719 = vmul.f32 %v1717, %v897
        %v1720 = vadd.f32 %v1700, %v1718
        %v1721 = vadd.f32 %v1701, %v1719
        %v1722 = vstv %s559
        %v1723 = vmul.f32 %v1722, %v1602
        %v1724 = vmul.f32 %v1722, %v1603
        %v1725 = vadd.f32 %v1705, %v1723
        %v1726 = vadd.f32 %v1706, %v1724
        %v1727 = vstv %s560
        %v1728 = vmul.f32 %v1727, %v1602
        %v1729 = vmul.f32 %v1727, %v1603
        %v1730 = vadd.f32 %v1710, %v1728
        %v1731 = vadd.f32 %v1711, %v1729
        %v1732 = vstv %s561
        %v1733 = vmul.f32 %v1732, %v1602
        %v1734 = vmul.f32 %v1732, %v1603
        %v1735 = vadd.f32 %v1715, %v1733
        %v1736 = vadd.f32 %v1716, %v1734
        %v1737 = vstv %s562
        %v1738 = vmul.f32 %v1737, %v1602
        %v1739 = vmul.f32 %v1737, %v1603
        %v1740 = vadd.f32 %v1720, %v1738
        %v1741 = vadd.f32 %v1721, %v1739
        %v1742 = vstv %s575
        %v1743 = vmul.f32 %v1742, %v1614
        %v1744 = vmul.f32 %v1742, %v1615
        %v1745 = vadd.f32 %v1725, %v1743
        %v1746 = vadd.f32 %v1726, %v1744
        %v1747 = vstv %s576
        %v1748 = vmul.f32 %v1747, %v1614
        %v1749 = vmul.f32 %v1747, %v1615
        %v1750 = vadd.f32 %v1730, %v1748
        %v1751 = vadd.f32 %v1731, %v1749
        %v1752 = vstv %s577
        %v1753 = vmul.f32 %v1752, %v1614
        %v1754 = vmul.f32 %v1752, %v1615
        %v1755 = vadd.f32 %v1735, %v1753
        %v1756 = vadd.f32 %v1736, %v1754
        %v1757 = vstv %s578
        %v1758 = vmul.f32 %v1757, %v1614
        %v1759 = vmul.f32 %v1757, %v1615
        %v1760 = vadd.f32 %v1740, %v1758
        %v1761 = vadd.f32 %v1741, %v1759
        %v1762 = vstv %s591
        %v1763 = vmul.f32 %v1762, %v1608
        %v1764 = vmul.f32 %v1762, %v1609
        %v1765 = vadd.f32 %v1745, %v1763
        %v1766 = vadd.f32 %v1746, %v1764
        %v1767 = vstv %s592
        %v1768 = vmul.f32 %v1767, %v1608
        %v1769 = vmul.f32 %v1767, %v1609
        %v1770 = vadd.f32 %v1750, %v1768
        %v1771 = vadd.f32 %v1751, %v1769
        %v1772 = vstv %s593
        %v1773 = vmul.f32 %v1772, %v1608
        %v1774 = vmul.f32 %v1772, %v1609
        %v1775 = vadd.f32 %v1755, %v1773
        %v1776 = vadd.f32 %v1756, %v1774
        %v1777 = vstv %s594
        %v1778 = vmul.f32 %v1777, %v1608
        %v1779 = vmul.f32 %v1777, %v1609
        %v1780 = vadd.f32 %v1760, %v1778
        %v1781 = vadd.f32 %v1761, %v1779
        %v1782 = vstv %s607
        %v1783 = vmul.f32 %v1782, %v1620
        %v1784 = vmul.f32 %v1782, %v1621
        %v1785 = vadd.f32 %v1765, %v1783
        %v1786 = vadd.f32 %v1766, %v1784
        %v1787 = vstv %s608
        %v1788 = vmul.f32 %v1787, %v1620
        %v1789 = vmul.f32 %v1787, %v1621
        %v1790 = vadd.f32 %v1770, %v1788
        %v1791 = vadd.f32 %v1771, %v1789
        %v1792 = vstv %s609
        %v1793 = vmul.f32 %v1792, %v1620
        %v1794 = vmul.f32 %v1792, %v1621
        %v1795 = vadd.f32 %v1775, %v1793
        %v1796 = vadd.f32 %v1776, %v1794
        %v1797 = vstv %s610
        %v1798 = vmul.f32 %v1797, %v1620
        %v1799 = vmul.f32 %v1797, %v1621
        %v1800 = vadd.f32 %v1780, %v1798
        %v1801 = vadd.f32 %v1781, %v1799
        %v1802 = vstv %s611
        %v1803 = vmul.f32 %v1785, %v1802
        %v1804 = vmul.f32 %v1786, %v1802
        %v1805 = vstv %s615
        %v1806 = vadd.f32 %v1803, %v1805
        %v1807 = vadd.f32 %v1804, %v1805
        %v1808 = vmax.f32 %v1806, 0.0
        %v1809 = vmax.f32 %v1807, 0.0
        %v1810 = vadd.f32 %v752, %v1808
        %v1811 = vadd.f32 %v753, %v1809
        %v1812 = vstv %s612
        %v1813 = vmul.f32 %v1790, %v1812
        %v1814 = vmul.f32 %v1791, %v1812
        %v1815 = vstv %s616
        %v1816 = vadd.f32 %v1813, %v1815
        %v1817 = vadd.f32 %v1814, %v1815
        %v1818 = vmax.f32 %v1816, 0.0
        %v1819 = vmax.f32 %v1817, 0.0
        %v1820 = vadd.f32 %v800, %v1818
        %v1821 = vadd.f32 %v801, %v1819
        %v1822 = vstv %s613
        %v1823 = vmul.f32 %v1795, %v1822
        %v1824 = vmul.f32 %v1796, %v1822
        %v1825 = vstv %s617
        %v1826 = vadd.f32 %v1823, %v1825
        %v1827 = vadd.f32 %v1824, %v1825
        %v1828 = vmax.f32 %v1826, 0.0
        %v1829 = vmax.f32 %v1827, 0.0
        %v1830 = vadd.f32 %v848, %v1828
        %v1831 = vadd.f32 %v849, %v1829
        %v1832 = vstv %s614
        %v1833 = vmul.f32 %v1800, %v1832
        %v1834 = vmul.f32 %v1801, %v1832
        %v1835 = vstv %s618
        %v1836 = vadd.f32 %v1833, %v1835
        %v1837 = vadd.f32 %v1834, %v1835
        %v1838 = vmax.f32 %v1836, 0.0
        %v1839 = vmax.f32 %v1837, 0.0
        %v1840 = vadd.f32 %v896, %v1838
        %v1841 = vadd.f32 %v897, %v1839
        %v1842 = vrot.slane %v1810, 7
        %v1843 = vrot.slane %v1811, 7
        %v1844 = vsel %vm658, %v1842, %v1843
        %v1845 = vsel %vm658, %v1843, %v1842
        %v1846 = vsel %vm421, %v1845, 0.0
        %v1847 = vsel %vm422, %v1844, 0.0
        %1848 = vrot.lane.b32.xlu0 %v1846, 1
        %v1849 = vpop.permute.xlu0 %1848
        %1850 = vrot.lane.b32.xlu0 %v1847, 1
        %v1851 = vpop.permute.xlu0 %1850
        %v1852 = vsel %vm425, %v1849, 0.0
        %v1853 = vsel %vm425, %v1851, 0.0
        %1854 = vrot.lane.b32.xlu0 %v1846, 127
        %v1855 = vpop.permute.xlu0 %1854
        %1856 = vrot.lane.b32.xlu0 %v1847, 127
        %v1857 = vpop.permute.xlu0 %1856
        %v1858 = vsel %vm426, %v1855, 0.0
        %v1859 = vsel %vm426, %v1857, 0.0
        %1860 = vrot.lane.b32.xlu0 %v1810, 1
        %v1861 = vpop.permute.xlu0 %1860
        %1862 = vrot.lane.b32.xlu0 %v1811, 1
        %v1863 = vpop.permute.xlu0 %1862
        %v1864 = vsel %vm425, %v1861, 0.0
        %v1865 = vsel %vm425, %v1863, 0.0
        %1866 = vrot.lane.b32.xlu0 %v1810, 127
        %v1867 = vpop.permute.xlu0 %1866
        %1868 = vrot.lane.b32.xlu0 %v1811, 127
        %v1869 = vpop.permute.xlu0 %1868
        %v1870 = vsel %vm426, %v1867, 0.0
        %v1871 = vsel %vm426, %v1869, 0.0
        %v1872 = vrot.slane %v1810, 1
        %v1873 = vrot.slane %v1811, 1
        %v1874 = vsel %vm689, %v1872, %v1873
        %v1875 = vsel %vm689, %v1873, %v1872
        %v1876 = vsel %vm423, %v1874, 0.0
        %v1877 = vsel %vm424, %v1875, 0.0
        %1878 = vrot.lane.b32.xlu0 %v1876, 1
        %v1879 = vpop.permute.xlu0 %1878
        %1880 = vrot.lane.b32.xlu0 %v1877, 1
        %v1881 = vpop.permute.xlu0 %1880
        %v1882 = vsel %vm425, %v1879, 0.0
        %v1883 = vsel %vm425, %v1881, 0.0
        %1884 = vrot.lane.b32.xlu0 %v1876, 127
        %v1885 = vpop.permute.xlu0 %1884
        %1886 = vrot.lane.b32.xlu0 %v1877, 127
        %v1887 = vpop.permute.xlu0 %1886
        %v1888 = vsel %vm426, %v1885, 0.0
        %v1889 = vsel %vm426, %v1887, 0.0
        %v1890 = vmul.f32 %v946, %v1852
        %v1891 = vmul.f32 %v946, %v1853
        %v1892 = vmul.f32 %v949, %v1852
        %v1893 = vmul.f32 %v949, %v1853
        %v1894 = vmul.f32 %v952, %v1852
        %v1895 = vmul.f32 %v952, %v1853
        %v1896 = vmul.f32 %v955, %v1852
        %v1897 = vmul.f32 %v955, %v1853
        %v1898 = vmul.f32 %v958, %v1846
        %v1899 = vmul.f32 %v958, %v1847
        %v1900 = vadd.f32 %v1890, %v1898
        %v1901 = vadd.f32 %v1891, %v1899
        %v1902 = vmul.f32 %v963, %v1846
        %v1903 = vmul.f32 %v963, %v1847
        %v1904 = vadd.f32 %v1892, %v1902
        %v1905 = vadd.f32 %v1893, %v1903
        %v1906 = vmul.f32 %v968, %v1846
        %v1907 = vmul.f32 %v968, %v1847
        %v1908 = vadd.f32 %v1894, %v1906
        %v1909 = vadd.f32 %v1895, %v1907
        %v1910 = vmul.f32 %v973, %v1846
        %v1911 = vmul.f32 %v973, %v1847
        %v1912 = vadd.f32 %v1896, %v1910
        %v1913 = vadd.f32 %v1897, %v1911
        %v1914 = vmul.f32 %v978, %v1858
        %v1915 = vmul.f32 %v978, %v1859
        %v1916 = vadd.f32 %v1900, %v1914
        %v1917 = vadd.f32 %v1901, %v1915
        %v1918 = vmul.f32 %v983, %v1858
        %v1919 = vmul.f32 %v983, %v1859
        %v1920 = vadd.f32 %v1904, %v1918
        %v1921 = vadd.f32 %v1905, %v1919
        %v1922 = vmul.f32 %v988, %v1858
        %v1923 = vmul.f32 %v988, %v1859
        %v1924 = vadd.f32 %v1908, %v1922
        %v1925 = vadd.f32 %v1909, %v1923
        %v1926 = vmul.f32 %v993, %v1858
        %v1927 = vmul.f32 %v993, %v1859
        %v1928 = vadd.f32 %v1912, %v1926
        %v1929 = vadd.f32 %v1913, %v1927
        %v1930 = vmul.f32 %v998, %v1864
        %v1931 = vmul.f32 %v998, %v1865
        %v1932 = vadd.f32 %v1916, %v1930
        %v1933 = vadd.f32 %v1917, %v1931
        %v1934 = vmul.f32 %v1003, %v1864
        %v1935 = vmul.f32 %v1003, %v1865
        %v1936 = vadd.f32 %v1920, %v1934
        %v1937 = vadd.f32 %v1921, %v1935
        %v1938 = vmul.f32 %v1008, %v1864
        %v1939 = vmul.f32 %v1008, %v1865
        %v1940 = vadd.f32 %v1924, %v1938
        %v1941 = vadd.f32 %v1925, %v1939
        %v1942 = vmul.f32 %v1013, %v1864
        %v1943 = vmul.f32 %v1013, %v1865
        %v1944 = vadd.f32 %v1928, %v1942
        %v1945 = vadd.f32 %v1929, %v1943
        %v1946 = vmul.f32 %v1018, %v1810
        %v1947 = vmul.f32 %v1018, %v1811
        %v1948 = vadd.f32 %v1932, %v1946
        %v1949 = vadd.f32 %v1933, %v1947
        %v1950 = vmul.f32 %v1023, %v1810
        %v1951 = vmul.f32 %v1023, %v1811
        %v1952 = vadd.f32 %v1936, %v1950
        %v1953 = vadd.f32 %v1937, %v1951
        %v1954 = vmul.f32 %v1028, %v1810
        %v1955 = vmul.f32 %v1028, %v1811
        %v1956 = vadd.f32 %v1940, %v1954
        %v1957 = vadd.f32 %v1941, %v1955
        %v1958 = vmul.f32 %v1033, %v1810
        %v1959 = vmul.f32 %v1033, %v1811
        %v1960 = vadd.f32 %v1944, %v1958
        %v1961 = vadd.f32 %v1945, %v1959
        %v1962 = vmul.f32 %v1038, %v1870
        %v1963 = vmul.f32 %v1038, %v1871
        %v1964 = vadd.f32 %v1948, %v1962
        %v1965 = vadd.f32 %v1949, %v1963
        %v1966 = vmul.f32 %v1043, %v1870
        %v1967 = vmul.f32 %v1043, %v1871
        %v1968 = vadd.f32 %v1952, %v1966
        %v1969 = vadd.f32 %v1953, %v1967
        %v1970 = vmul.f32 %v1048, %v1870
        %v1971 = vmul.f32 %v1048, %v1871
        %v1972 = vadd.f32 %v1956, %v1970
        %v1973 = vadd.f32 %v1957, %v1971
        %v1974 = vmul.f32 %v1053, %v1870
        %v1975 = vmul.f32 %v1053, %v1871
        %v1976 = vadd.f32 %v1960, %v1974
        %v1977 = vadd.f32 %v1961, %v1975
        %v1978 = vmul.f32 %v1058, %v1882
        %v1979 = vmul.f32 %v1058, %v1883
        %v1980 = vadd.f32 %v1964, %v1978
        %v1981 = vadd.f32 %v1965, %v1979
        %v1982 = vmul.f32 %v1063, %v1882
        %v1983 = vmul.f32 %v1063, %v1883
        %v1984 = vadd.f32 %v1968, %v1982
        %v1985 = vadd.f32 %v1969, %v1983
        %v1986 = vmul.f32 %v1068, %v1882
        %v1987 = vmul.f32 %v1068, %v1883
        %v1988 = vadd.f32 %v1972, %v1986
        %v1989 = vadd.f32 %v1973, %v1987
        %v1990 = vmul.f32 %v1073, %v1882
        %v1991 = vmul.f32 %v1073, %v1883
        %v1992 = vadd.f32 %v1976, %v1990
        %v1993 = vadd.f32 %v1977, %v1991
        %v1994 = vmul.f32 %v1078, %v1876
        %v1995 = vmul.f32 %v1078, %v1877
        %v1996 = vadd.f32 %v1980, %v1994
        %v1997 = vadd.f32 %v1981, %v1995
        %v1998 = vmul.f32 %v1083, %v1876
        %v1999 = vmul.f32 %v1083, %v1877
        %v2000 = vadd.f32 %v1984, %v1998
        %v2001 = vadd.f32 %v1985, %v1999
        %v2002 = vmul.f32 %v1088, %v1876
        %v2003 = vmul.f32 %v1088, %v1877
        %v2004 = vadd.f32 %v1988, %v2002
        %v2005 = vadd.f32 %v1989, %v2003
        %v2006 = vmul.f32 %v1093, %v1876
        %v2007 = vmul.f32 %v1093, %v1877
        %v2008 = vadd.f32 %v1992, %v2006
        %v2009 = vadd.f32 %v1993, %v2007
        %v2010 = vmul.f32 %v1098, %v1888
        %v2011 = vmul.f32 %v1098, %v1889
        %v2012 = vadd.f32 %v1996, %v2010
        %v2013 = vadd.f32 %v1997, %v2011
        %v2014 = vmul.f32 %v1103, %v1888
        %v2015 = vmul.f32 %v1103, %v1889
        %v2016 = vadd.f32 %v2000, %v2014
        %v2017 = vadd.f32 %v2001, %v2015
        %v2018 = vmul.f32 %v1108, %v1888
        %v2019 = vmul.f32 %v1108, %v1889
        %v2020 = vadd.f32 %v2004, %v2018
        %v2021 = vadd.f32 %v2005, %v2019
        %v2022 = vmul.f32 %v1113, %v1888
        %v2023 = vmul.f32 %v1113, %v1889
        %v2024 = vadd.f32 %v2008, %v2022
        %v2025 = vadd.f32 %v2009, %v2023
        %v2026 = vrot.slane %v1820, 7
        %v2027 = vrot.slane %v1821, 7
        %v2028 = vsel %vm658, %v2026, %v2027
        %v2029 = vsel %vm658, %v2027, %v2026
        %v2030 = vsel %vm421, %v2029, 0.0
        %v2031 = vsel %vm422, %v2028, 0.0
        %2032 = vrot.lane.b32.xlu0 %v2030, 1
        %v2033 = vpop.permute.xlu0 %2032
        %2034 = vrot.lane.b32.xlu0 %v2031, 1
        %v2035 = vpop.permute.xlu0 %2034
        %v2036 = vsel %vm425, %v2033, 0.0
        %v2037 = vsel %vm425, %v2035, 0.0
        %2038 = vrot.lane.b32.xlu0 %v2030, 127
        %v2039 = vpop.permute.xlu0 %2038
        %2040 = vrot.lane.b32.xlu0 %v2031, 127
        %v2041 = vpop.permute.xlu0 %2040
        %v2042 = vsel %vm426, %v2039, 0.0
        %v2043 = vsel %vm426, %v2041, 0.0
        %2044 = vrot.lane.b32.xlu0 %v1820, 1
        %v2045 = vpop.permute.xlu0 %2044
        %2046 = vrot.lane.b32.xlu0 %v1821, 1
        %v2047 = vpop.permute.xlu0 %2046
        %v2048 = vsel %vm425, %v2045, 0.0
        %v2049 = vsel %vm425, %v2047, 0.0
        %2050 = vrot.lane.b32.xlu0 %v1820, 127
        %v2051 = vpop.permute.xlu0 %2050
        %2052 = vrot.lane.b32.xlu0 %v1821, 127
        %v2053 = vpop.permute.xlu0 %2052
        %v2054 = vsel %vm426, %v2051, 0.0
        %v2055 = vsel %vm426, %v2053, 0.0
        %v2056 = vrot.slane %v1820, 1
        %v2057 = vrot.slane %v1821, 1
        %v2058 = vsel %vm689, %v2056, %v2057
        %v2059 = vsel %vm689, %v2057, %v2056
        %v2060 = vsel %vm423, %v2058, 0.0
        %v2061 = vsel %vm424, %v2059, 0.0
        %2062 = vrot.lane.b32.xlu0 %v2060, 1
        %v2063 = vpop.permute.xlu0 %2062
        %2064 = vrot.lane.b32.xlu0 %v2061, 1
        %v2065 = vpop.permute.xlu0 %2064
        %v2066 = vsel %vm425, %v2063, 0.0
        %v2067 = vsel %vm425, %v2065, 0.0
        %2068 = vrot.lane.b32.xlu0 %v2060, 127
        %v2069 = vpop.permute.xlu0 %2068
        %2070 = vrot.lane.b32.xlu0 %v2061, 127
        %v2071 = vpop.permute.xlu0 %2070
        %v2072 = vsel %vm426, %v2069, 0.0
        %v2073 = vsel %vm426, %v2071, 0.0
        %v2074 = vmul.f32 %v1166, %v2036
        %v2075 = vmul.f32 %v1166, %v2037
        %v2076 = vadd.f32 %v2012, %v2074
        %v2077 = vadd.f32 %v2013, %v2075
        %v2078 = vmul.f32 %v1171, %v2036
        %v2079 = vmul.f32 %v1171, %v2037
        %v2080 = vadd.f32 %v2016, %v2078
        %v2081 = vadd.f32 %v2017, %v2079
        %v2082 = vmul.f32 %v1176, %v2036
        %v2083 = vmul.f32 %v1176, %v2037
        %v2084 = vadd.f32 %v2020, %v2082
        %v2085 = vadd.f32 %v2021, %v2083
        %v2086 = vmul.f32 %v1181, %v2036
        %v2087 = vmul.f32 %v1181, %v2037
        %v2088 = vadd.f32 %v2024, %v2086
        %v2089 = vadd.f32 %v2025, %v2087
        %v2090 = vmul.f32 %v1186, %v2030
        %v2091 = vmul.f32 %v1186, %v2031
        %v2092 = vadd.f32 %v2076, %v2090
        %v2093 = vadd.f32 %v2077, %v2091
        %v2094 = vmul.f32 %v1191, %v2030
        %v2095 = vmul.f32 %v1191, %v2031
        %v2096 = vadd.f32 %v2080, %v2094
        %v2097 = vadd.f32 %v2081, %v2095
        %v2098 = vmul.f32 %v1196, %v2030
        %v2099 = vmul.f32 %v1196, %v2031
        %v2100 = vadd.f32 %v2084, %v2098
        %v2101 = vadd.f32 %v2085, %v2099
        %v2102 = vmul.f32 %v1201, %v2030
        %v2103 = vmul.f32 %v1201, %v2031
        %v2104 = vadd.f32 %v2088, %v2102
        %v2105 = vadd.f32 %v2089, %v2103
        %v2106 = vmul.f32 %v1206, %v2042
        %v2107 = vmul.f32 %v1206, %v2043
        %v2108 = vadd.f32 %v2092, %v2106
        %v2109 = vadd.f32 %v2093, %v2107
        %v2110 = vmul.f32 %v1211, %v2042
        %v2111 = vmul.f32 %v1211, %v2043
        %v2112 = vadd.f32 %v2096, %v2110
        %v2113 = vadd.f32 %v2097, %v2111
        %v2114 = vmul.f32 %v1216, %v2042
        %v2115 = vmul.f32 %v1216, %v2043
        %v2116 = vadd.f32 %v2100, %v2114
        %v2117 = vadd.f32 %v2101, %v2115
        %v2118 = vmul.f32 %v1221, %v2042
        %v2119 = vmul.f32 %v1221, %v2043
        %v2120 = vadd.f32 %v2104, %v2118
        %v2121 = vadd.f32 %v2105, %v2119
        %v2122 = vmul.f32 %v1226, %v2048
        %v2123 = vmul.f32 %v1226, %v2049
        %v2124 = vadd.f32 %v2108, %v2122
        %v2125 = vadd.f32 %v2109, %v2123
        %v2126 = vmul.f32 %v1231, %v2048
        %v2127 = vmul.f32 %v1231, %v2049
        %v2128 = vadd.f32 %v2112, %v2126
        %v2129 = vadd.f32 %v2113, %v2127
        %v2130 = vmul.f32 %v1236, %v2048
        %v2131 = vmul.f32 %v1236, %v2049
        %v2132 = vadd.f32 %v2116, %v2130
        %v2133 = vadd.f32 %v2117, %v2131
        %v2134 = vmul.f32 %v1241, %v2048
        %v2135 = vmul.f32 %v1241, %v2049
        %v2136 = vadd.f32 %v2120, %v2134
        %v2137 = vadd.f32 %v2121, %v2135
        %v2138 = vmul.f32 %v1246, %v1820
        %v2139 = vmul.f32 %v1246, %v1821
        %v2140 = vadd.f32 %v2124, %v2138
        %v2141 = vadd.f32 %v2125, %v2139
        %v2142 = vmul.f32 %v1251, %v1820
        %v2143 = vmul.f32 %v1251, %v1821
        %v2144 = vadd.f32 %v2128, %v2142
        %v2145 = vadd.f32 %v2129, %v2143
        %v2146 = vmul.f32 %v1256, %v1820
        %v2147 = vmul.f32 %v1256, %v1821
        %v2148 = vadd.f32 %v2132, %v2146
        %v2149 = vadd.f32 %v2133, %v2147
        %v2150 = vmul.f32 %v1261, %v1820
        %v2151 = vmul.f32 %v1261, %v1821
        %v2152 = vadd.f32 %v2136, %v2150
        %v2153 = vadd.f32 %v2137, %v2151
        %v2154 = vmul.f32 %v1266, %v2054
        %v2155 = vmul.f32 %v1266, %v2055
        %v2156 = vadd.f32 %v2140, %v2154
        %v2157 = vadd.f32 %v2141, %v2155
        %v2158 = vmul.f32 %v1271, %v2054
        %v2159 = vmul.f32 %v1271, %v2055
        %v2160 = vadd.f32 %v2144, %v2158
        %v2161 = vadd.f32 %v2145, %v2159
        %v2162 = vmul.f32 %v1276, %v2054
        %v2163 = vmul.f32 %v1276, %v2055
        %v2164 = vadd.f32 %v2148, %v2162
        %v2165 = vadd.f32 %v2149, %v2163
        %v2166 = vmul.f32 %v1281, %v2054
        %v2167 = vmul.f32 %v1281, %v2055
        %v2168 = vadd.f32 %v2152, %v2166
        %v2169 = vadd.f32 %v2153, %v2167
        %v2170 = vmul.f32 %v1286, %v2066
        %v2171 = vmul.f32 %v1286, %v2067
        %v2172 = vadd.f32 %v2156, %v2170
        %v2173 = vadd.f32 %v2157, %v2171
        %v2174 = vmul.f32 %v1291, %v2066
        %v2175 = vmul.f32 %v1291, %v2067
        %v2176 = vadd.f32 %v2160, %v2174
        %v2177 = vadd.f32 %v2161, %v2175
        %v2178 = vmul.f32 %v1296, %v2066
        %v2179 = vmul.f32 %v1296, %v2067
        %v2180 = vadd.f32 %v2164, %v2178
        %v2181 = vadd.f32 %v2165, %v2179
        %v2182 = vmul.f32 %v1301, %v2066
        %v2183 = vmul.f32 %v1301, %v2067
        %v2184 = vadd.f32 %v2168, %v2182
        %v2185 = vadd.f32 %v2169, %v2183
        %v2186 = vmul.f32 %v1306, %v2060
        %v2187 = vmul.f32 %v1306, %v2061
        %v2188 = vadd.f32 %v2172, %v2186
        %v2189 = vadd.f32 %v2173, %v2187
        %v2190 = vmul.f32 %v1311, %v2060
        %v2191 = vmul.f32 %v1311, %v2061
        %v2192 = vadd.f32 %v2176, %v2190
        %v2193 = vadd.f32 %v2177, %v2191
        %v2194 = vmul.f32 %v1316, %v2060
        %v2195 = vmul.f32 %v1316, %v2061
        %v2196 = vadd.f32 %v2180, %v2194
        %v2197 = vadd.f32 %v2181, %v2195
        %v2198 = vmul.f32 %v1321, %v2060
        %v2199 = vmul.f32 %v1321, %v2061
        %v2200 = vadd.f32 %v2184, %v2198
        %v2201 = vadd.f32 %v2185, %v2199
        %v2202 = vmul.f32 %v1326, %v2072
        %v2203 = vmul.f32 %v1326, %v2073
        %v2204 = vadd.f32 %v2188, %v2202
        %v2205 = vadd.f32 %v2189, %v2203
        %v2206 = vmul.f32 %v1331, %v2072
        %v2207 = vmul.f32 %v1331, %v2073
        %v2208 = vadd.f32 %v2192, %v2206
        %v2209 = vadd.f32 %v2193, %v2207
        %v2210 = vmul.f32 %v1336, %v2072
        %v2211 = vmul.f32 %v1336, %v2073
        %v2212 = vadd.f32 %v2196, %v2210
        %v2213 = vadd.f32 %v2197, %v2211
        %v2214 = vmul.f32 %v1341, %v2072
        %v2215 = vmul.f32 %v1341, %v2073
        %v2216 = vadd.f32 %v2200, %v2214
        %v2217 = vadd.f32 %v2201, %v2215
        %v2218 = vrot.slane %v1830, 7
        %v2219 = vrot.slane %v1831, 7
        %v2220 = vsel %vm658, %v2218, %v2219
        %v2221 = vsel %vm658, %v2219, %v2218
        %v2222 = vsel %vm421, %v2221, 0.0
        %v2223 = vsel %vm422, %v2220, 0.0
        %2224 = vrot.lane.b32.xlu0 %v2222, 1
        %v2225 = vpop.permute.xlu0 %2224
        %2226 = vrot.lane.b32.xlu0 %v2223, 1
        %v2227 = vpop.permute.xlu0 %2226
        %v2228 = vsel %vm425, %v2225, 0.0
        %v2229 = vsel %vm425, %v2227, 0.0
        %2230 = vrot.lane.b32.xlu0 %v2222, 127
        %v2231 = vpop.permute.xlu0 %2230
        %2232 = vrot.lane.b32.xlu0 %v2223, 127
        %v2233 = vpop.permute.xlu0 %2232
        %v2234 = vsel %vm426, %v2231, 0.0
        %v2235 = vsel %vm426, %v2233, 0.0
        %2236 = vrot.lane.b32.xlu0 %v1830, 1
        %v2237 = vpop.permute.xlu0 %2236
        %2238 = vrot.lane.b32.xlu0 %v1831, 1
        %v2239 = vpop.permute.xlu0 %2238
        %v2240 = vsel %vm425, %v2237, 0.0
        %v2241 = vsel %vm425, %v2239, 0.0
        %2242 = vrot.lane.b32.xlu0 %v1830, 127
        %v2243 = vpop.permute.xlu0 %2242
        %2244 = vrot.lane.b32.xlu0 %v1831, 127
        %v2245 = vpop.permute.xlu0 %2244
        %v2246 = vsel %vm426, %v2243, 0.0
        %v2247 = vsel %vm426, %v2245, 0.0
        %v2248 = vrot.slane %v1830, 1
        %v2249 = vrot.slane %v1831, 1
        %v2250 = vsel %vm689, %v2248, %v2249
        %v2251 = vsel %vm689, %v2249, %v2248
        %v2252 = vsel %vm423, %v2250, 0.0
        %v2253 = vsel %vm424, %v2251, 0.0
        %2254 = vrot.lane.b32.xlu0 %v2252, 1
        %v2255 = vpop.permute.xlu0 %2254
        %2256 = vrot.lane.b32.xlu0 %v2253, 1
        %v2257 = vpop.permute.xlu0 %2256
        %v2258 = vsel %vm425, %v2255, 0.0
        %v2259 = vsel %vm425, %v2257, 0.0
        %2260 = vrot.lane.b32.xlu0 %v2252, 127
        %v2261 = vpop.permute.xlu0 %2260
        %2262 = vrot.lane.b32.xlu0 %v2253, 127
        %v2263 = vpop.permute.xlu0 %2262
        %v2264 = vsel %vm426, %v2261, 0.0
        %v2265 = vsel %vm426, %v2263, 0.0
        %v2266 = vmul.f32 %v1394, %v2228
        %v2267 = vmul.f32 %v1394, %v2229
        %v2268 = vadd.f32 %v2204, %v2266
        %v2269 = vadd.f32 %v2205, %v2267
        %v2270 = vmul.f32 %v1399, %v2228
        %v2271 = vmul.f32 %v1399, %v2229
        %v2272 = vadd.f32 %v2208, %v2270
        %v2273 = vadd.f32 %v2209, %v2271
        %v2274 = vmul.f32 %v1404, %v2228
        %v2275 = vmul.f32 %v1404, %v2229
        %v2276 = vadd.f32 %v2212, %v2274
        %v2277 = vadd.f32 %v2213, %v2275
        %v2278 = vmul.f32 %v1409, %v2228
        %v2279 = vmul.f32 %v1409, %v2229
        %v2280 = vadd.f32 %v2216, %v2278
        %v2281 = vadd.f32 %v2217, %v2279
        %v2282 = vmul.f32 %v1414, %v2222
        %v2283 = vmul.f32 %v1414, %v2223
        %v2284 = vadd.f32 %v2268, %v2282
        %v2285 = vadd.f32 %v2269, %v2283
        %v2286 = vmul.f32 %v1419, %v2222
        %v2287 = vmul.f32 %v1419, %v2223
        %v2288 = vadd.f32 %v2272, %v2286
        %v2289 = vadd.f32 %v2273, %v2287
        %v2290 = vmul.f32 %v1424, %v2222
        %v2291 = vmul.f32 %v1424, %v2223
        %v2292 = vadd.f32 %v2276, %v2290
        %v2293 = vadd.f32 %v2277, %v2291
        %v2294 = vmul.f32 %v1429, %v2222
        %v2295 = vmul.f32 %v1429, %v2223
        %v2296 = vadd.f32 %v2280, %v2294
        %v2297 = vadd.f32 %v2281, %v2295
        %v2298 = vmul.f32 %v1434, %v2234
        %v2299 = vmul.f32 %v1434, %v2235
        %v2300 = vadd.f32 %v2284, %v2298
        %v2301 = vadd.f32 %v2285, %v2299
        %v2302 = vmul.f32 %v1439, %v2234
        %v2303 = vmul.f32 %v1439, %v2235
        %v2304 = vadd.f32 %v2288, %v2302
        %v2305 = vadd.f32 %v2289, %v2303
        %v2306 = vmul.f32 %v1444, %v2234
        %v2307 = vmul.f32 %v1444, %v2235
        %v2308 = vadd.f32 %v2292, %v2306
        %v2309 = vadd.f32 %v2293, %v2307
        %v2310 = vmul.f32 %v1449, %v2234
        %v2311 = vmul.f32 %v1449, %v2235
        %v2312 = vadd.f32 %v2296, %v2310
        %v2313 = vadd.f32 %v2297, %v2311
        %v2314 = vmul.f32 %v1454, %v2240
        %v2315 = vmul.f32 %v1454, %v2241
        %v2316 = vadd.f32 %v2300, %v2314
        %v2317 = vadd.f32 %v2301, %v2315
        %v2318 = vmul.f32 %v1459, %v2240
        %v2319 = vmul.f32 %v1459, %v2241
        %v2320 = vadd.f32 %v2304, %v2318
        %v2321 = vadd.f32 %v2305, %v2319
        %v2322 = vmul.f32 %v1464, %v2240
        %v2323 = vmul.f32 %v1464, %v2241
        %v2324 = vadd.f32 %v2308, %v2322
        %v2325 = vadd.f32 %v2309, %v2323
        %v2326 = vmul.f32 %v1469, %v2240
        %v2327 = vmul.f32 %v1469, %v2241
        %v2328 = vadd.f32 %v2312, %v2326
        %v2329 = vadd.f32 %v2313, %v2327
        %v2330 = vmul.f32 %v1474, %v1830
        %v2331 = vmul.f32 %v1474, %v1831
        %v2332 = vadd.f32 %v2316, %v2330
        %v2333 = vadd.f32 %v2317, %v2331
        %v2334 = vmul.f32 %v1479, %v1830
        %v2335 = vmul.f32 %v1479, %v1831
        %v2336 = vadd.f32 %v2320, %v2334
        %v2337 = vadd.f32 %v2321, %v2335
        %v2338 = vmul.f32 %v1484, %v1830
        %v2339 = vmul.f32 %v1484, %v1831
        %v2340 = vadd.f32 %v2324, %v2338
        %v2341 = vadd.f32 %v2325, %v2339
        %v2342 = vmul.f32 %v1489, %v1830
        %v2343 = vmul.f32 %v1489, %v1831
        %v2344 = vadd.f32 %v2328, %v2342
        %v2345 = vadd.f32 %v2329, %v2343
        %v2346 = vmul.f32 %v1494, %v2246
        %v2347 = vmul.f32 %v1494, %v2247
        %v2348 = vadd.f32 %v2332, %v2346
        %v2349 = vadd.f32 %v2333, %v2347
        %v2350 = vmul.f32 %v1499, %v2246
        %v2351 = vmul.f32 %v1499, %v2247
        %v2352 = vadd.f32 %v2336, %v2350
        %v2353 = vadd.f32 %v2337, %v2351
        %v2354 = vmul.f32 %v1504, %v2246
        %v2355 = vmul.f32 %v1504, %v2247
        %v2356 = vadd.f32 %v2340, %v2354
        %v2357 = vadd.f32 %v2341, %v2355
        %v2358 = vmul.f32 %v1509, %v2246
        %v2359 = vmul.f32 %v1509, %v2247
        %v2360 = vadd.f32 %v2344, %v2358
        %v2361 = vadd.f32 %v2345, %v2359
        %v2362 = vmul.f32 %v1514, %v2258
        %v2363 = vmul.f32 %v1514, %v2259
        %v2364 = vadd.f32 %v2348, %v2362
        %v2365 = vadd.f32 %v2349, %v2363
        %v2366 = vmul.f32 %v1519, %v2258
        %v2367 = vmul.f32 %v1519, %v2259
        %v2368 = vadd.f32 %v2352, %v2366
        %v2369 = vadd.f32 %v2353, %v2367
        %v2370 = vmul.f32 %v1524, %v2258
        %v2371 = vmul.f32 %v1524, %v2259
        %v2372 = vadd.f32 %v2356, %v2370
        %v2373 = vadd.f32 %v2357, %v2371
        %v2374 = vmul.f32 %v1529, %v2258
        %v2375 = vmul.f32 %v1529, %v2259
        %v2376 = vadd.f32 %v2360, %v2374
        %v2377 = vadd.f32 %v2361, %v2375
        %v2378 = vmul.f32 %v1534, %v2252
        %v2379 = vmul.f32 %v1534, %v2253
        %v2380 = vadd.f32 %v2364, %v2378
        %v2381 = vadd.f32 %v2365, %v2379
        %v2382 = vmul.f32 %v1539, %v2252
        %v2383 = vmul.f32 %v1539, %v2253
        %v2384 = vadd.f32 %v2368, %v2382
        %v2385 = vadd.f32 %v2369, %v2383
        %v2386 = vmul.f32 %v1544, %v2252
        %v2387 = vmul.f32 %v1544, %v2253
        %v2388 = vadd.f32 %v2372, %v2386
        %v2389 = vadd.f32 %v2373, %v2387
        %v2390 = vmul.f32 %v1549, %v2252
        %v2391 = vmul.f32 %v1549, %v2253
        %v2392 = vadd.f32 %v2376, %v2390
        %v2393 = vadd.f32 %v2377, %v2391
        %v2394 = vmul.f32 %v1554, %v2264
        %v2395 = vmul.f32 %v1554, %v2265
        %v2396 = vadd.f32 %v2380, %v2394
        %v2397 = vadd.f32 %v2381, %v2395
        %v2398 = vmul.f32 %v1559, %v2264
        %v2399 = vmul.f32 %v1559, %v2265
        %v2400 = vadd.f32 %v2384, %v2398
        %v2401 = vadd.f32 %v2385, %v2399
        %v2402 = vmul.f32 %v1564, %v2264
        %v2403 = vmul.f32 %v1564, %v2265
        %v2404 = vadd.f32 %v2388, %v2402
        %v2405 = vadd.f32 %v2389, %v2403
        %v2406 = vmul.f32 %v1569, %v2264
        %v2407 = vmul.f32 %v1569, %v2265
        %v2408 = vadd.f32 %v2392, %v2406
        %v2409 = vadd.f32 %v2393, %v2407
        %v2410 = vrot.slane %v1840, 7
        %v2411 = vrot.slane %v1841, 7
        %v2412 = vsel %vm658, %v2410, %v2411
        %v2413 = vsel %vm658, %v2411, %v2410
        %v2414 = vsel %vm421, %v2413, 0.0
        %v2415 = vsel %vm422, %v2412, 0.0
        %2416 = vrot.lane.b32.xlu0 %v2414, 1
        %v2417 = vpop.permute.xlu0 %2416
        %2418 = vrot.lane.b32.xlu0 %v2415, 1
        %v2419 = vpop.permute.xlu0 %2418
        %v2420 = vsel %vm425, %v2417, 0.0
        %v2421 = vsel %vm425, %v2419, 0.0
        %2422 = vrot.lane.b32.xlu0 %v2414, 127
        %v2423 = vpop.permute.xlu0 %2422
        %2424 = vrot.lane.b32.xlu0 %v2415, 127
        %v2425 = vpop.permute.xlu0 %2424
        %v2426 = vsel %vm426, %v2423, 0.0
        %v2427 = vsel %vm426, %v2425, 0.0
        %2428 = vrot.lane.b32.xlu0 %v1840, 1
        %v2429 = vpop.permute.xlu0 %2428
        %2430 = vrot.lane.b32.xlu0 %v1841, 1
        %v2431 = vpop.permute.xlu0 %2430
        %v2432 = vsel %vm425, %v2429, 0.0
        %v2433 = vsel %vm425, %v2431, 0.0
        %2434 = vrot.lane.b32.xlu0 %v1840, 127
        %v2435 = vpop.permute.xlu0 %2434
        %2436 = vrot.lane.b32.xlu0 %v1841, 127
        %v2437 = vpop.permute.xlu0 %2436
        %v2438 = vsel %vm426, %v2435, 0.0
        %v2439 = vsel %vm426, %v2437, 0.0
        %v2440 = vrot.slane %v1840, 1
        %v2441 = vrot.slane %v1841, 1
        %v2442 = vsel %vm689, %v2440, %v2441
        %v2443 = vsel %vm689, %v2441, %v2440
        %v2444 = vsel %vm423, %v2442, 0.0
        %v2445 = vsel %vm424, %v2443, 0.0
        %2446 = vrot.lane.b32.xlu0 %v2444, 1
        %v2447 = vpop.permute.xlu0 %2446
        %2448 = vrot.lane.b32.xlu0 %v2445, 1
        %v2449 = vpop.permute.xlu0 %2448
        %v2450 = vsel %vm425, %v2447, 0.0
        %v2451 = vsel %vm425, %v2449, 0.0
        %2452 = vrot.lane.b32.xlu0 %v2444, 127
        %v2453 = vpop.permute.xlu0 %2452
        %2454 = vrot.lane.b32.xlu0 %v2445, 127
        %v2455 = vpop.permute.xlu0 %2454
        %v2456 = vsel %vm426, %v2453, 0.0
        %v2457 = vsel %vm426, %v2455, 0.0
        %v2458 = vmul.f32 %v1622, %v2420
        %v2459 = vmul.f32 %v1622, %v2421
        %v2460 = vadd.f32 %v2396, %v2458
        %v2461 = vadd.f32 %v2397, %v2459
        %v2462 = vmul.f32 %v1627, %v2420
        %v2463 = vmul.f32 %v1627, %v2421
        %v2464 = vadd.f32 %v2400, %v2462
        %v2465 = vadd.f32 %v2401, %v2463
        %v2466 = vmul.f32 %v1632, %v2420
        %v2467 = vmul.f32 %v1632, %v2421
        %v2468 = vadd.f32 %v2404, %v2466
        %v2469 = vadd.f32 %v2405, %v2467
        %v2470 = vmul.f32 %v1637, %v2420
        %v2471 = vmul.f32 %v1637, %v2421
        %v2472 = vadd.f32 %v2408, %v2470
        %v2473 = vadd.f32 %v2409, %v2471
        %v2474 = vmul.f32 %v1642, %v2414
        %v2475 = vmul.f32 %v1642, %v2415
        %v2476 = vadd.f32 %v2460, %v2474
        %v2477 = vadd.f32 %v2461, %v2475
        %v2478 = vmul.f32 %v1647, %v2414
        %v2479 = vmul.f32 %v1647, %v2415
        %v2480 = vadd.f32 %v2464, %v2478
        %v2481 = vadd.f32 %v2465, %v2479
        %v2482 = vmul.f32 %v1652, %v2414
        %v2483 = vmul.f32 %v1652, %v2415
        %v2484 = vadd.f32 %v2468, %v2482
        %v2485 = vadd.f32 %v2469, %v2483
        %v2486 = vmul.f32 %v1657, %v2414
        %v2487 = vmul.f32 %v1657, %v2415
        %v2488 = vadd.f32 %v2472, %v2486
        %v2489 = vadd.f32 %v2473, %v2487
        %v2490 = vmul.f32 %v1662, %v2426
        %v2491 = vmul.f32 %v1662, %v2427
        %v2492 = vadd.f32 %v2476, %v2490
        %v2493 = vadd.f32 %v2477, %v2491
        %v2494 = vmul.f32 %v1667, %v2426
        %v2495 = vmul.f32 %v1667, %v2427
        %v2496 = vadd.f32 %v2480, %v2494
        %v2497 = vadd.f32 %v2481, %v2495
        %v2498 = vmul.f32 %v1672, %v2426
        %v2499 = vmul.f32 %v1672, %v2427
        %v2500 = vadd.f32 %v2484, %v2498
        %v2501 = vadd.f32 %v2485, %v2499
        %v2502 = vmul.f32 %v1677, %v2426
        %v2503 = vmul.f32 %v1677, %v2427
        %v2504 = vadd.f32 %v2488, %v2502
        %v2505 = vadd.f32 %v2489, %v2503
        %v2506 = vmul.f32 %v1682, %v2432
        %v2507 = vmul.f32 %v1682, %v2433
        %v2508 = vadd.f32 %v2492, %v2506
        %v2509 = vadd.f32 %v2493, %v2507
        %v2510 = vmul.f32 %v1687, %v2432
        %v2511 = vmul.f32 %v1687, %v2433
        %v2512 = vadd.f32 %v2496, %v2510
        %v2513 = vadd.f32 %v2497, %v2511
        %v2514 = vmul.f32 %v1692, %v2432
        %v2515 = vmul.f32 %v1692, %v2433
        %v2516 = vadd.f32 %v2500, %v2514
        %v2517 = vadd.f32 %v2501, %v2515
        %v2518 = vmul.f32 %v1697, %v2432
        %v2519 = vmul.f32 %v1697, %v2433
        %v2520 = vadd.f32 %v2504, %v2518
        %v2521 = vadd.f32 %v2505, %v2519
        %v2522 = vmul.f32 %v1702, %v1840
        %v2523 = vmul.f32 %v1702, %v1841
        %v2524 = vadd.f32 %v2508, %v2522
        %v2525 = vadd.f32 %v2509, %v2523
        %v2526 = vmul.f32 %v1707, %v1840
        %v2527 = vmul.f32 %v1707, %v1841
        %v2528 = vadd.f32 %v2512, %v2526
        %v2529 = vadd.f32 %v2513, %v2527
        %v2530 = vmul.f32 %v1712, %v1840
        %v2531 = vmul.f32 %v1712, %v1841
        %v2532 = vadd.f32 %v2516, %v2530
        %v2533 = vadd.f32 %v2517, %v2531
        %v2534 = vmul.f32 %v1717, %v1840
        %v2535 = vmul.f32 %v1717, %v1841
        %v2536 = vadd.f32 %v2520, %v2534
        %v2537 = vadd.f32 %v2521, %v2535
        %v2538 = vmul.f32 %v1722, %v2438
        %v2539 = vmul.f32 %v1722, %v2439
        %v2540 = vadd.f32 %v2524, %v2538
        %v2541 = vadd.f32 %v2525, %v2539
        %v2542 = vmul.f32 %v1727, %v2438
        %v2543 = vmul.f32 %v1727, %v2439
        %v2544 = vadd.f32 %v2528, %v2542
        %v2545 = vadd.f32 %v2529, %v2543
        %v2546 = vmul.f32 %v1732, %v2438
        %v2547 = vmul.f32 %v1732, %v2439
        %v2548 = vadd.f32 %v2532, %v2546
        %v2549 = vadd.f32 %v2533, %v2547
        %v2550 = vmul.f32 %v1737, %v2438
        %v2551 = vmul.f32 %v1737, %v2439
        %v2552 = vadd.f32 %v2536, %v2550
        %v2553 = vadd.f32 %v2537, %v2551
        %v2554 = vmul.f32 %v1742, %v2450
        %v2555 = vmul.f32 %v1742, %v2451
        %v2556 = vadd.f32 %v2540, %v2554
        %v2557 = vadd.f32 %v2541, %v2555
        %v2558 = vmul.f32 %v1747, %v2450
        %v2559 = vmul.f32 %v1747, %v2451
        %v2560 = vadd.f32 %v2544, %v2558
        %v2561 = vadd.f32 %v2545, %v2559
        %v2562 = vmul.f32 %v1752, %v2450
        %v2563 = vmul.f32 %v1752, %v2451
        %v2564 = vadd.f32 %v2548, %v2562
        %v2565 = vadd.f32 %v2549, %v2563
        %v2566 = vmul.f32 %v1757, %v2450
        %v2567 = vmul.f32 %v1757, %v2451
        %v2568 = vadd.f32 %v2552, %v2566
        %v2569 = vadd.f32 %v2553, %v2567
        %v2570 = vmul.f32 %v1762, %v2444
        %v2571 = vmul.f32 %v1762, %v2445
        %v2572 = vadd.f32 %v2556, %v2570
        %v2573 = vadd.f32 %v2557, %v2571
        %v2574 = vmul.f32 %v1767, %v2444
        %v2575 = vmul.f32 %v1767, %v2445
        %v2576 = vadd.f32 %v2560, %v2574
        %v2577 = vadd.f32 %v2561, %v2575
        %v2578 = vmul.f32 %v1772, %v2444
        %v2579 = vmul.f32 %v1772, %v2445
        %v2580 = vadd.f32 %v2564, %v2578
        %v2581 = vadd.f32 %v2565, %v2579
        %v2582 = vmul.f32 %v1777, %v2444
        %v2583 = vmul.f32 %v1777, %v2445
        %v2584 = vadd.f32 %v2568, %v2582
        %v2585 = vadd.f32 %v2569, %v2583
        %v2586 = vmul.f32 %v1782, %v2456
        %v2587 = vmul.f32 %v1782, %v2457
        %v2588 = vadd.f32 %v2572, %v2586
        %v2589 = vadd.f32 %v2573, %v2587
        %v2590 = vmul.f32 %v1787, %v2456
        %v2591 = vmul.f32 %v1787, %v2457
        %v2592 = vadd.f32 %v2576, %v2590
        %v2593 = vadd.f32 %v2577, %v2591
        %v2594 = vmul.f32 %v1792, %v2456
        %v2595 = vmul.f32 %v1792, %v2457
        %v2596 = vadd.f32 %v2580, %v2594
        %v2597 = vadd.f32 %v2581, %v2595
        %v2598 = vmul.f32 %v1797, %v2456
        %v2599 = vmul.f32 %v1797, %v2457
        %v2600 = vadd.f32 %v2584, %v2598
        %v2601 = vadd.f32 %v2585, %v2599
        %v2602 = vmul.f32 %v2588, %v1802
        %v2603 = vmul.f32 %v2589, %v1802
        %v2604 = vadd.f32 %v2602, %v1805
        %v2605 = vadd.f32 %v2603, %v1805
        %v2606 = vmax.f32 %v2604, 0.0
        %v2607 = vmax.f32 %v2605, 0.0
        %v2608 = vadd.f32 %v1810, %v2606
        %v2609 = vadd.f32 %v1811, %v2607
        %v2610 = vmul.f32 %v2592, %v1812
        %v2611 = vmul.f32 %v2593, %v1812
        %v2612 = vadd.f32 %v2610, %v1815
        %v2613 = vadd.f32 %v2611, %v1815
        %v2614 = vmax.f32 %v2612, 0.0
        %v2615 = vmax.f32 %v2613, 0.0
        %v2616 = vadd.f32 %v1820, %v2614
        %v2617 = vadd.f32 %v1821, %v2615
        %v2618 = vmul.f32 %v2596, %v1822
        %v2619 = vmul.f32 %v2597, %v1822
        %v2620 = vadd.f32 %v2618, %v1825
        %v2621 = vadd.f32 %v2619, %v1825
        %v2622 = vmax.f32 %v2620, 0.0
        %v2623 = vmax.f32 %v2621, 0.0
        %v2624 = vadd.f32 %v1830, %v2622
        %v2625 = vadd.f32 %v1831, %v2623
        %v2626 = vmul.f32 %v2600, %v1832
        %v2627 = vmul.f32 %v2601, %v1832
        %v2628 = vadd.f32 %v2626, %v1835
        %v2629 = vadd.f32 %v2627, %v1835
        %v2630 = vmax.f32 %v2628, 0.0
        %v2631 = vmax.f32 %v2629, 0.0
        %v2632 = vadd.f32 %v1840, %v2630
        %v2633 = vadd.f32 %v1841, %v2631
        %v2634 = vrot.slane %v2608, 7
        %v2635 = vrot.slane %v2609, 7
        %v2636 = vsel %vm658, %v2634, %v2635
        %v2637 = vsel %vm658, %v2635, %v2634
        %v2638 = vsel %vm421, %v2637, 0.0
        %v2639 = vsel %vm422, %v2636, 0.0
        %2640 = vrot.lane.b32.xlu0 %v2638, 1
        %v2641 = vpop.permute.xlu0 %2640
        %2642 = vrot.lane.b32.xlu0 %v2639, 1
        %v2643 = vpop.permute.xlu0 %2642
        %v2644 = vsel %vm425, %v2641, 0.0
        %v2645 = vsel %vm425, %v2643, 0.0
        %2646 = vrot.lane.b32.xlu0 %v2638, 127
        %v2647 = vpop.permute.xlu0 %2646
        %2648 = vrot.lane.b32.xlu0 %v2639, 127
        %v2649 = vpop.permute.xlu0 %2648
        %v2650 = vsel %vm426, %v2647, 0.0
        %v2651 = vsel %vm426, %v2649, 0.0
        %2652 = vrot.lane.b32.xlu0 %v2608, 1
        %v2653 = vpop.permute.xlu0 %2652
        %2654 = vrot.lane.b32.xlu0 %v2609, 1
        %v2655 = vpop.permute.xlu0 %2654
        %v2656 = vsel %vm425, %v2653, 0.0
        %v2657 = vsel %vm425, %v2655, 0.0
        %2658 = vrot.lane.b32.xlu0 %v2608, 127
        %v2659 = vpop.permute.xlu0 %2658
        %2660 = vrot.lane.b32.xlu0 %v2609, 127
        %v2661 = vpop.permute.xlu0 %2660
        %v2662 = vsel %vm426, %v2659, 0.0
        %v2663 = vsel %vm426, %v2661, 0.0
        %v2664 = vrot.slane %v2608, 1
        %v2665 = vrot.slane %v2609, 1
        %v2666 = vsel %vm689, %v2664, %v2665
        %v2667 = vsel %vm689, %v2665, %v2664
        %v2668 = vsel %vm423, %v2666, 0.0
        %v2669 = vsel %vm424, %v2667, 0.0
        %2670 = vrot.lane.b32.xlu0 %v2668, 1
        %v2671 = vpop.permute.xlu0 %2670
        %2672 = vrot.lane.b32.xlu0 %v2669, 1
        %v2673 = vpop.permute.xlu0 %2672
        %v2674 = vsel %vm425, %v2671, 0.0
        %v2675 = vsel %vm425, %v2673, 0.0
        %2676 = vrot.lane.b32.xlu0 %v2668, 127
        %v2677 = vpop.permute.xlu0 %2676
        %2678 = vrot.lane.b32.xlu0 %v2669, 127
        %v2679 = vpop.permute.xlu0 %2678
        %v2680 = vsel %vm426, %v2677, 0.0
        %v2681 = vsel %vm426, %v2679, 0.0
        %v2682 = vstv %s619
        %v2683 = vmul.f32 %v2682, %v2644
        %v2684 = vmul.f32 %v2682, %v2645
        %v2685 = vstv %s623
        %v2686 = vmul.f32 %v2685, %v2638
        %v2687 = vmul.f32 %v2685, %v2639
        %v2688 = vadd.f32 %v2683, %v2686
        %v2689 = vadd.f32 %v2684, %v2687
        %v2690 = vstv %s627
        %v2691 = vmul.f32 %v2690, %v2650
        %v2692 = vmul.f32 %v2690, %v2651
        %v2693 = vadd.f32 %v2688, %v2691
        %v2694 = vadd.f32 %v2689, %v2692
        %v2695 = vstv %s631
        %v2696 = vmul.f32 %v2695, %v2656
        %v2697 = vmul.f32 %v2695, %v2657
        %v2698 = vadd.f32 %v2693, %v2696
        %v2699 = vadd.f32 %v2694, %v2697
        %v2700 = vstv %s635
        %v2701 = vmul.f32 %v2700, %v2608
        %v2702 = vmul.f32 %v2700, %v2609
        %v2703 = vadd.f32 %v2698, %v2701
        %v2704 = vadd.f32 %v2699, %v2702
        %v2705 = vstv %s639
        %v2706 = vmul.f32 %v2705, %v2662
        %v2707 = vmul.f32 %v2705, %v2663
        %v2708 = vadd.f32 %v2703, %v2706
        %v2709 = vadd.f32 %v2704, %v2707
        %v2710 = vstv %s643
        %v2711 = vmul.f32 %v2710, %v2674
        %v2712 = vmul.f32 %v2710, %v2675
        %v2713 = vadd.f32 %v2708, %v2711
        %v2714 = vadd.f32 %v2709, %v2712
        %v2715 = vstv %s647
        %v2716 = vmul.f32 %v2715, %v2668
        %v2717 = vmul.f32 %v2715, %v2669
        %v2718 = vadd.f32 %v2713, %v2716
        %v2719 = vadd.f32 %v2714, %v2717
        %v2720 = vstv %s651
        %v2721 = vmul.f32 %v2720, %v2680
        %v2722 = vmul.f32 %v2720, %v2681
        %v2723 = vadd.f32 %v2718, %v2721
        %v2724 = vadd.f32 %v2719, %v2722
        %v2725 = vrot.slane %v2616, 7
        %v2726 = vrot.slane %v2617, 7
        %v2727 = vsel %vm658, %v2725, %v2726
        %v2728 = vsel %vm658, %v2726, %v2725
        %v2729 = vsel %vm421, %v2728, 0.0
        %v2730 = vsel %vm422, %v2727, 0.0
        %2731 = vrot.lane.b32.xlu0 %v2729, 1
        %v2732 = vpop.permute.xlu0 %2731
        %2733 = vrot.lane.b32.xlu0 %v2730, 1
        %v2734 = vpop.permute.xlu0 %2733
        %v2735 = vsel %vm425, %v2732, 0.0
        %v2736 = vsel %vm425, %v2734, 0.0
        %2737 = vrot.lane.b32.xlu0 %v2729, 127
        %v2738 = vpop.permute.xlu0 %2737
        %2739 = vrot.lane.b32.xlu0 %v2730, 127
        %v2740 = vpop.permute.xlu0 %2739
        %v2741 = vsel %vm426, %v2738, 0.0
        %v2742 = vsel %vm426, %v2740, 0.0
        %2743 = vrot.lane.b32.xlu0 %v2616, 1
        %v2744 = vpop.permute.xlu0 %2743
        %2745 = vrot.lane.b32.xlu0 %v2617, 1
        %v2746 = vpop.permute.xlu0 %2745
        %v2747 = vsel %vm425, %v2744, 0.0
        %v2748 = vsel %vm425, %v2746, 0.0
        %2749 = vrot.lane.b32.xlu0 %v2616, 127
        %v2750 = vpop.permute.xlu0 %2749
        %2751 = vrot.lane.b32.xlu0 %v2617, 127
        %v2752 = vpop.permute.xlu0 %2751
        %v2753 = vsel %vm426, %v2750, 0.0
        %v2754 = vsel %vm426, %v2752, 0.0
        %v2755 = vrot.slane %v2616, 1
        %v2756 = vrot.slane %v2617, 1
        %v2757 = vsel %vm689, %v2755, %v2756
        %v2758 = vsel %vm689, %v2756, %v2755
        %v2759 = vsel %vm423, %v2757, 0.0
        %v2760 = vsel %vm424, %v2758, 0.0
        %2761 = vrot.lane.b32.xlu0 %v2759, 1
        %v2762 = vpop.permute.xlu0 %2761
        %2763 = vrot.lane.b32.xlu0 %v2760, 1
        %v2764 = vpop.permute.xlu0 %2763
        %v2765 = vsel %vm425, %v2762, 0.0
        %v2766 = vsel %vm425, %v2764, 0.0
        %2767 = vrot.lane.b32.xlu0 %v2759, 127
        %v2768 = vpop.permute.xlu0 %2767
        %2769 = vrot.lane.b32.xlu0 %v2760, 127
        %v2770 = vpop.permute.xlu0 %2769
        %v2771 = vsel %vm426, %v2768, 0.0
        %v2772 = vsel %vm426, %v2770, 0.0
        %v2773 = vstv %s620
        %v2774 = vmul.f32 %v2773, %v2735
        %v2775 = vmul.f32 %v2773, %v2736
        %v2776 = vadd.f32 %v2723, %v2774
        %v2777 = vadd.f32 %v2724, %v2775
        %v2778 = vstv %s624
        %v2779 = vmul.f32 %v2778, %v2729
        %v2780 = vmul.f32 %v2778, %v2730
        %v2781 = vadd.f32 %v2776, %v2779
        %v2782 = vadd.f32 %v2777, %v2780
        %v2783 = vstv %s628
        %v2784 = vmul.f32 %v2783, %v2741
        %v2785 = vmul.f32 %v2783, %v2742
        %v2786 = vadd.f32 %v2781, %v2784
        %v2787 = vadd.f32 %v2782, %v2785
        %v2788 = vstv %s632
        %v2789 = vmul.f32 %v2788, %v2747
        %v2790 = vmul.f32 %v2788, %v2748
        %v2791 = vadd.f32 %v2786, %v2789
        %v2792 = vadd.f32 %v2787, %v2790
        %v2793 = vstv %s636
        %v2794 = vmul.f32 %v2793, %v2616
        %v2795 = vmul.f32 %v2793, %v2617
        %v2796 = vadd.f32 %v2791, %v2794
        %v2797 = vadd.f32 %v2792, %v2795
        %v2798 = vstv %s640
        %v2799 = vmul.f32 %v2798, %v2753
        %v2800 = vmul.f32 %v2798, %v2754
        %v2801 = vadd.f32 %v2796, %v2799
        %v2802 = vadd.f32 %v2797, %v2800
        %v2803 = vstv %s644
        %v2804 = vmul.f32 %v2803, %v2765
        %v2805 = vmul.f32 %v2803, %v2766
        %v2806 = vadd.f32 %v2801, %v2804
        %v2807 = vadd.f32 %v2802, %v2805
        %v2808 = vstv %s648
        %v2809 = vmul.f32 %v2808, %v2759
        %v2810 = vmul.f32 %v2808, %v2760
        %v2811 = vadd.f32 %v2806, %v2809
        %v2812 = vadd.f32 %v2807, %v2810
        %v2813 = vstv %s652
        %v2814 = vmul.f32 %v2813, %v2771
        %v2815 = vmul.f32 %v2813, %v2772
        %v2816 = vadd.f32 %v2811, %v2814
        %v2817 = vadd.f32 %v2812, %v2815
        %v2818 = vrot.slane %v2624, 7
        %v2819 = vrot.slane %v2625, 7
        %v2820 = vsel %vm658, %v2818, %v2819
        %v2821 = vsel %vm658, %v2819, %v2818
        %v2822 = vsel %vm421, %v2821, 0.0
        %v2823 = vsel %vm422, %v2820, 0.0
        %2824 = vrot.lane.b32.xlu0 %v2822, 1
        %v2825 = vpop.permute.xlu0 %2824
        %2826 = vrot.lane.b32.xlu0 %v2823, 1
        %v2827 = vpop.permute.xlu0 %2826
        %v2828 = vsel %vm425, %v2825, 0.0
        %v2829 = vsel %vm425, %v2827, 0.0
        %2830 = vrot.lane.b32.xlu0 %v2822, 127
        %v2831 = vpop.permute.xlu0 %2830
        %2832 = vrot.lane.b32.xlu0 %v2823, 127
        %v2833 = vpop.permute.xlu0 %2832
        %v2834 = vsel %vm426, %v2831, 0.0
        %v2835 = vsel %vm426, %v2833, 0.0
        %2836 = vrot.lane.b32.xlu0 %v2624, 1
        %v2837 = vpop.permute.xlu0 %2836
        %2838 = vrot.lane.b32.xlu0 %v2625, 1
        %v2839 = vpop.permute.xlu0 %2838
        %v2840 = vsel %vm425, %v2837, 0.0
        %v2841 = vsel %vm425, %v2839, 0.0
        %2842 = vrot.lane.b32.xlu0 %v2624, 127
        %v2843 = vpop.permute.xlu0 %2842
        %2844 = vrot.lane.b32.xlu0 %v2625, 127
        %v2845 = vpop.permute.xlu0 %2844
        %v2846 = vsel %vm426, %v2843, 0.0
        %v2847 = vsel %vm426, %v2845, 0.0
        %v2848 = vrot.slane %v2624, 1
        %v2849 = vrot.slane %v2625, 1
        %v2850 = vsel %vm689, %v2848, %v2849
        %v2851 = vsel %vm689, %v2849, %v2848
        %v2852 = vsel %vm423, %v2850, 0.0
        %v2853 = vsel %vm424, %v2851, 0.0
        %2854 = vrot.lane.b32.xlu0 %v2852, 1
        %v2855 = vpop.permute.xlu0 %2854
        %2856 = vrot.lane.b32.xlu0 %v2853, 1
        %v2857 = vpop.permute.xlu0 %2856
        %v2858 = vsel %vm425, %v2855, 0.0
        %v2859 = vsel %vm425, %v2857, 0.0
        %2860 = vrot.lane.b32.xlu0 %v2852, 127
        %v2861 = vpop.permute.xlu0 %2860
        %2862 = vrot.lane.b32.xlu0 %v2853, 127
        %v2863 = vpop.permute.xlu0 %2862
        %v2864 = vsel %vm426, %v2861, 0.0
        %v2865 = vsel %vm426, %v2863, 0.0
        %v2866 = vstv %s621
        %v2867 = vmul.f32 %v2866, %v2828
        %v2868 = vmul.f32 %v2866, %v2829
        %v2869 = vadd.f32 %v2816, %v2867
        %v2870 = vadd.f32 %v2817, %v2868
        %v2871 = vstv %s625
        %v2872 = vmul.f32 %v2871, %v2822
        %v2873 = vmul.f32 %v2871, %v2823
        %v2874 = vadd.f32 %v2869, %v2872
        %v2875 = vadd.f32 %v2870, %v2873
        %v2876 = vstv %s629
        %v2877 = vmul.f32 %v2876, %v2834
        %v2878 = vmul.f32 %v2876, %v2835
        %v2879 = vadd.f32 %v2874, %v2877
        %v2880 = vadd.f32 %v2875, %v2878
        %v2881 = vstv %s633
        %v2882 = vmul.f32 %v2881, %v2840
        %v2883 = vmul.f32 %v2881, %v2841
        %v2884 = vadd.f32 %v2879, %v2882
        %v2885 = vadd.f32 %v2880, %v2883
        %v2886 = vstv %s637
        %v2887 = vmul.f32 %v2886, %v2624
        %v2888 = vmul.f32 %v2886, %v2625
        %v2889 = vadd.f32 %v2884, %v2887
        %v2890 = vadd.f32 %v2885, %v2888
        %v2891 = vstv %s641
        %v2892 = vmul.f32 %v2891, %v2846
        %v2893 = vmul.f32 %v2891, %v2847
        %v2894 = vadd.f32 %v2889, %v2892
        %v2895 = vadd.f32 %v2890, %v2893
        %v2896 = vstv %s645
        %v2897 = vmul.f32 %v2896, %v2858
        %v2898 = vmul.f32 %v2896, %v2859
        %v2899 = vadd.f32 %v2894, %v2897
        %v2900 = vadd.f32 %v2895, %v2898
        %v2901 = vstv %s649
        %v2902 = vmul.f32 %v2901, %v2852
        %v2903 = vmul.f32 %v2901, %v2853
        %v2904 = vadd.f32 %v2899, %v2902
        %v2905 = vadd.f32 %v2900, %v2903
        %v2906 = vstv %s653
        %v2907 = vmul.f32 %v2906, %v2864
        %v2908 = vmul.f32 %v2906, %v2865
        %v2909 = vadd.f32 %v2904, %v2907
        %v2910 = vadd.f32 %v2905, %v2908
        %v2911 = vrot.slane %v2632, 7
        %v2912 = vrot.slane %v2633, 7
        %v2913 = vsel %vm658, %v2911, %v2912
        %v2914 = vsel %vm658, %v2912, %v2911
        %v2915 = vsel %vm421, %v2914, 0.0
        %v2916 = vsel %vm422, %v2913, 0.0
        %2917 = vrot.lane.b32.xlu0 %v2915, 1
        %v2918 = vpop.permute.xlu0 %2917
        %2919 = vrot.lane.b32.xlu0 %v2916, 1
        %v2920 = vpop.permute.xlu0 %2919
        %v2921 = vsel %vm425, %v2918, 0.0
        %v2922 = vsel %vm425, %v2920, 0.0
        %2923 = vrot.lane.b32.xlu0 %v2915, 127
        %v2924 = vpop.permute.xlu0 %2923
        %2925 = vrot.lane.b32.xlu0 %v2916, 127
        %v2926 = vpop.permute.xlu0 %2925
        %v2927 = vsel %vm426, %v2924, 0.0
        %v2928 = vsel %vm426, %v2926, 0.0
        %2929 = vrot.lane.b32.xlu0 %v2632, 1
        %v2930 = vpop.permute.xlu0 %2929
        %2931 = vrot.lane.b32.xlu0 %v2633, 1
        %v2932 = vpop.permute.xlu0 %2931
        %v2933 = vsel %vm425, %v2930, 0.0
        %v2934 = vsel %vm425, %v2932, 0.0
        %2935 = vrot.lane.b32.xlu0 %v2632, 127
        %v2936 = vpop.permute.xlu0 %2935
        %2937 = vrot.lane.b32.xlu0 %v2633, 127
        %v2938 = vpop.permute.xlu0 %2937
        %v2939 = vsel %vm426, %v2936, 0.0
        %v2940 = vsel %vm426, %v2938, 0.0
        %v2941 = vrot.slane %v2632, 1
        %v2942 = vrot.slane %v2633, 1
        %v2943 = vsel %vm689, %v2941, %v2942
        %v2944 = vsel %vm689, %v2942, %v2941
        %v2945 = vsel %vm423, %v2943, 0.0
        %v2946 = vsel %vm424, %v2944, 0.0
        %2947 = vrot.lane.b32.xlu0 %v2945, 1
        %v2948 = vpop.permute.xlu0 %2947
        %2949 = vrot.lane.b32.xlu0 %v2946, 1
        %v2950 = vpop.permute.xlu0 %2949
        %v2951 = vsel %vm425, %v2948, 0.0
        %v2952 = vsel %vm425, %v2950, 0.0
        %2953 = vrot.lane.b32.xlu0 %v2945, 127
        %v2954 = vpop.permute.xlu0 %2953
        %2955 = vrot.lane.b32.xlu0 %v2946, 127
        %v2956 = vpop.permute.xlu0 %2955
        %v2957 = vsel %vm426, %v2954, 0.0
        %v2958 = vsel %vm426, %v2956, 0.0
        %v2959 = vstv %s622
        %v2960 = vmul.f32 %v2959, %v2921
        %v2961 = vmul.f32 %v2959, %v2922
        %v2962 = vadd.f32 %v2909, %v2960
        %v2963 = vadd.f32 %v2910, %v2961
        %v2964 = vstv %s626
        %v2965 = vmul.f32 %v2964, %v2915
        %v2966 = vmul.f32 %v2964, %v2916
        %v2967 = vadd.f32 %v2962, %v2965
        %v2968 = vadd.f32 %v2963, %v2966
        %v2969 = vstv %s630
        %v2970 = vmul.f32 %v2969, %v2927
        %v2971 = vmul.f32 %v2969, %v2928
        %v2972 = vadd.f32 %v2967, %v2970
        %v2973 = vadd.f32 %v2968, %v2971
        %v2974 = vstv %s634
        %v2975 = vmul.f32 %v2974, %v2933
        %v2976 = vmul.f32 %v2974, %v2934
        %v2977 = vadd.f32 %v2972, %v2975
        %v2978 = vadd.f32 %v2973, %v2976
        %v2979 = vstv %s638
        %v2980 = vmul.f32 %v2979, %v2632
        %v2981 = vmul.f32 %v2979, %v2633
        %v2982 = vadd.f32 %v2977, %v2980
        %v2983 = vadd.f32 %v2978, %v2981
        %v2984 = vstv %s642
        %v2985 = vmul.f32 %v2984, %v2939
        %v2986 = vmul.f32 %v2984, %v2940
        %v2987 = vadd.f32 %v2982, %v2985
        %v2988 = vadd.f32 %v2983, %v2986
        %v2989 = vstv %s646
        %v2990 = vmul.f32 %v2989, %v2951
        %v2991 = vmul.f32 %v2989, %v2952
        %v2992 = vadd.f32 %v2987, %v2990
        %v2993 = vadd.f32 %v2988, %v2991
        %v2994 = vstv %s650
        %v2995 = vmul.f32 %v2994, %v2945
        %v2996 = vmul.f32 %v2994, %v2946
        %v2997 = vadd.f32 %v2992, %v2995
        %v2998 = vadd.f32 %v2993, %v2996
        %v2999 = vstv %s654
        %v3000 = vmul.f32 %v2999, %v2957
        %v3001 = vmul.f32 %v2999, %v2958
        %v3002 = vadd.f32 %v2997, %v3000
        %v3003 = vadd.f32 %v2998, %v3001
        %v3004 = vstv %s655
        %v3005 = vadd.f32 %v3002, %v3004
        %v3006 = vadd.f32 %v3003, %v3004
        %v3007 = vxor.u32 %v3005, 2147483648
        %v3008 = vxor.u32 %v3006, 2147483648
        %v3009 = vmul.f32 %v3007, 1.442695
        %v3010 = vpow.pop %v3009
        %v3011 = vmul.f32 %v3008, 1.442695
        %v3012 = vpow.pop %v3011
        %v3013 = vadd.f32 %v3010, 1.0
        %v3014 = vadd.f32 %v3012, 1.0
        %v3015 = vrcp.pop %v3013
        %v3016 = vmul.f32 1.0, %v3015
        %v3017 = vrcp.pop %v3014
        %v3018 = vmul.f32 1.0, %v3017
        %v3019 = vadd.f32 %v3016, %v402
        %v3020 = vadd.f32 %v3018, %v403
        %v3021 = vmax.f32 %v3019, 0.0001
        %v3022 = vmax.f32 %v3020, 0.0001
        %v3023 = vmin.f32 %v3021, 1.0
        %v3024 = vmin.f32 %v3022, 1.0
        %3025 = vst [vmem:[%s401] sm:$0xff] %v3023
        %3026 = vst [vmem:[%s401 + $0x8] sm:$0xff] %v3024
        %s3027 = sand.u32 %s211, 1
        %s3028 = scalar_lea.sflag [#allocation5], %s3027
        %s3029 = sand.u32 %s211, 1
        %s3030 = smul.addr %s3029, 16
        %s3031 = scalar_lea.vmem [#allocation16], %s3030
        // Predicated region
        $region81: #{tpu_custom_call.1} parent=51 // pred_check
          %p3032 = pneg %p221
        $region82: #{tpu_custom_call.1} parent=51 // pred_check_branch
          %3034 = sbr.rel (%p3032) target = $region84
        $region83: #{tpu_custom_call.1} parent=51 // pred_region
          %s3036 = ssub.s32 256, 256
          %3037 = vsyncadd %s3028, %s3036
          %s3038 = smul.addr %s30, 2
          %s3039 = smul.addr %s3038, 128
          %s3040 = scalar_lea.hbm %s8, %s3039
          %s3041 = sshll.u32 %s3031, 4
          %s3042 = int_to_ptr.vmem [resolvable:$true] %s3041
          %3047 = dma.vmem_to_hbm [thread:$0]  %s3042, 256, %s3040, %s3028, 128, 128, 8
        $region84: #{tpu_custom_call.1} parent=51 // pred_fallthru
          _
      $region52: #{tpu_custom_call.1} parent=5 // pred_fallthru
        _
      %p3048 = scmp.le.s32.totalorder 2, %s25
      // Predicated region
      $region85: #{tpu_custom_call.1} parent=5 // pred_check
        %p3049 = pneg %p3048
      $region86: #{tpu_custom_call.1} parent=5 // pred_check_branch
        %3051 = sbr.rel (%p3049) target = $region88
      $region87: #{tpu_custom_call.1} parent=5 // pred_region
        %s3052 = ssub.s32 %s25, 2
        // Predicated region
        $region89: #{tpu_custom_call.1} parent=87 // pred_check
          %p3053 = pneg %p227
        $region90: #{tpu_custom_call.1} parent=87 // pred_check_branch
          %3055 = sbr.rel (%p3053) target = $region92
        $region91: #{tpu_custom_call.1} parent=87 // pred_region
          %s3056 = sand.u32 %s212, 1
          %s3057 = scalar_lea.sflag [#allocation5], %s3056
          %s3058 = sand.u32 %s212, 1
          %s3059 = smul.addr %s3058, 16
          %s3060 = scalar_lea.vmem [#allocation16], %s3059
          %3061 = dma.done %s3057, 256
        $region92: #{tpu_custom_call.1} parent=87 // pred_fallthru
          _
      $region88: #{tpu_custom_call.1} parent=5 // pred_fallthru
        _
    $region6: #{tpu_custom_call.1} parent=1 // loop_footer
      %s29 = sadd.s32 1, %s25
    $region7: #{tpu_custom_call.1} parent=1 // loop_footer_branch
      %24 = sbr.rel target = $region3
    $region8: #{tpu_custom_call.1} parent=1 // loop_exit
      _
    %3062 = vsyncpa [#allocation4], 1
    %s3063 = scalar_lea.sflag [#allocation4], 1
    %3064 = vsyncpa %s3063, 1
    %3065 = vsyncpa [#allocation5], 1
    %s3066 = scalar_lea.sflag [#allocation5], 1
    %3067 = vsyncpa %s3066, 1
    %3068 = vsyncpa [#allocation6], 1
    %s3069 = scalar_lea.sflag [#allocation6], 1
    %3070 = vsyncpa %s3069, 1
    %3071 = vsyncpa [#allocation9], 1
    %3072 = vsyncpa [#allocation12], 1
    %3073 = vsyncpa [#allocation15], 1

</llo_original>
